<compile_context>
chip_gen: v7x
topology: tpu7x:2x2x1
jax: 0.10.0
libtpu: 0.0.40
codegen_flags: <defaults>
</compile_context>

<pallas_src>
import functools

import jax
import jax.numpy as jnp
from jax.experimental import pallas as pl
from jax.experimental.pallas import tpu as pltpu

LANE = 128   # pad channel dims to a multiple of this (lane-dense stores / MXU width)
TM = 512     # row tile (N*H*W rows); large tile -> ~85% of HBM roofline on mem-bound ops


def _round_up(n, m):
    return ((n + m - 1) // m) * m


def _pad_axis(a, axis, target):
    pad = [(0, 0)] * a.ndim
    pad[axis] = (0, target - a.shape[axis])
    return jnp.pad(a, pad)


# ---------------------------------------------------------------------------
# Pallas kernels
# ---------------------------------------------------------------------------
def _matmul_bias_kernel(x_ref, w_ref, b_ref, o_ref, *, relu):
    # x: (tm, K) bf16, w: (K, Co) bf16 (BN scale pre-folded), b: (1, Co) f32
    y = jnp.dot(x_ref[...], w_ref[...], preferred_element_type=jnp.float32)
    y = y + b_ref[...]
    if relu:
        y = jnp.maximum(y, 0.0)
    o_ref[...] = y.astype(o_ref.dtype)


def matmul_bias(x, w, b, *, relu, out_dtype, tm=TM):
    M, K = x.shape
    _, Co = w.shape
    assert M % tm == 0  # caller pads M up to a multiple of tm
    return pl.pallas_call(
        functools.partial(_matmul_bias_kernel, relu=relu),
        out_shape=jax.ShapeDtypeStruct((M, Co), out_dtype),
        grid=(M // tm,),
        in_specs=[
            pl.BlockSpec((tm, K), lambda i: (i, 0)),
            pl.BlockSpec((K, Co), lambda i: (0, 0)),
            pl.BlockSpec((1, Co), lambda i: (0, 0)),
        ],
        out_specs=pl.BlockSpec((tm, Co), lambda i: (i, 0)),
        compiler_params=pltpu.CompilerParams(dimension_semantics=("parallel",)),
    )(x, w, b)


def _conv3x3_bias_relu_kernel(x_ref, w_ref, b_ref, o_ref, *, H, W):
    # x: (1, H+2, W+2, C) bf16 (spatially padded), w: (9, C, Co) bf16 (scale folded),
    # b: (1, Co) f32, o: (1, H*W, Co). The 9 taps are accumulated in f32 in-register;
    # no im2col tensor is materialized in HBM.
    C = x_ref.shape[-1]
    Co = w_ref.shape[-1]
    x = x_ref[0]                                    # (H+2, W+2, C)
    acc = jnp.zeros((H * W, Co), jnp.float32)
    for kh in range(3):
        for kw in range(3):
            patch = x[kh:kh + H, kw:kw + W, :].reshape(H * W, C)
            acc = acc + jnp.dot(patch, w_ref[kh * 3 + kw],
                                preferred_element_type=jnp.float32)
    y = jnp.maximum(acc + b_ref[...], 0.0)
    o_ref[0] = y.astype(o_ref.dtype)


def conv3x3_bias_relu(x_padded_nhwc, w_taps, b, *, out_dtype):
    N, Hp2, Wp2, C = x_padded_nhwc.shape
    H, W = Hp2 - 2, Wp2 - 2
    Co = w_taps.shape[-1]
    return pl.pallas_call(
        functools.partial(_conv3x3_bias_relu_kernel, H=H, W=W),
        out_shape=jax.ShapeDtypeStruct((N, H * W, Co), out_dtype),
        grid=(N,),
        in_specs=[
            pl.BlockSpec((1, Hp2, Wp2, C), lambda n: (n, 0, 0, 0)),
            pl.BlockSpec((9, C, Co), lambda n: (0, 0, 0)),
            pl.BlockSpec((1, Co), lambda n: (0, 0)),
        ],
        out_specs=pl.BlockSpec((1, H * W, Co), lambda n: (n, 0, 0)),
        compiler_params=pltpu.CompilerParams(dimension_semantics=("parallel",)),
    )(x_padded_nhwc, w_taps, b)


def _conv3_proj_add_relu_kernel(h_ref, x_ref, w3_ref, b3_ref, wsc_ref, bsc_ref, o_ref):
    # Fused: conv3(1x1)+bn3, shortcut conv(1x1)+bn, residual add, final ReLU.
    y = jnp.dot(h_ref[...], w3_ref[...], preferred_element_type=jnp.float32) + b3_ref[...]
    sc = jnp.dot(x_ref[...], wsc_ref[...], preferred_element_type=jnp.float32) + bsc_ref[...]
    o_ref[...] = jnp.maximum(y + sc, 0.0).astype(o_ref.dtype)


def conv3_proj_add_relu(h, x, w3, b3, wsc, bsc, *, tm=TM):
    M, K3 = h.shape
    _, Ksc = x.shape
    Co = w3.shape[1]
    assert M % tm == 0
    return pl.pallas_call(
        _conv3_proj_add_relu_kernel,
        out_shape=jax.ShapeDtypeStruct((M, Co), jnp.float32),
        grid=(M // tm,),
        in_specs=[
            pl.BlockSpec((tm, K3), lambda i: (i, 0)),
            pl.BlockSpec((tm, Ksc), lambda i: (i, 0)),
            pl.BlockSpec((K3, Co), lambda i: (0, 0)),
            pl.BlockSpec((1, Co), lambda i: (0, 0)),
            pl.BlockSpec((Ksc, Co), lambda i: (0, 0)),
            pl.BlockSpec((1, Co), lambda i: (0, 0)),
        ],
        out_specs=pl.BlockSpec((tm, Co), lambda i: (i, 0)),
        compiler_params=pltpu.CompilerParams(dimension_semantics=("parallel",)),
    )(h, x, w3, b3, wsc, bsc)


def _conv3_id_add_relu_kernel(h_ref, x_ref, w3_ref, b3_ref, o_ref):
    # Fused: conv3(1x1)+bn3, identity shortcut add, final ReLU.
    y = jnp.dot(h_ref[...], w3_ref[...], preferred_element_type=jnp.float32) + b3_ref[...]
    o_ref[...] = jnp.maximum(y + x_ref[...].astype(jnp.float32), 0.0).astype(o_ref.dtype)


def conv3_id_add_relu(h, x, w3, b3, *, tm=TM):
    M, K3 = h.shape
    Co = w3.shape[1]
    assert M % tm == 0
    return pl.pallas_call(
        _conv3_id_add_relu_kernel,
        out_shape=jax.ShapeDtypeStruct((M, Co), jnp.float32),
        grid=(M // tm,),
        in_specs=[
            pl.BlockSpec((tm, K3), lambda i: (i, 0)),
            pl.BlockSpec((tm, Co), lambda i: (i, 0)),
            pl.BlockSpec((K3, Co), lambda i: (0, 0)),
            pl.BlockSpec((1, Co), lambda i: (0, 0)),
        ],
        out_specs=pl.BlockSpec((tm, Co), lambda i: (i, 0)),
        compiler_params=pltpu.CompilerParams(dimension_semantics=("parallel",)),
    )(h, x, w3, b3)


# ---------------------------------------------------------------------------
# Parameter prep (done once): fold BN, transpose/flatten weights, pad channels,
# cast MXU operands to bf16.
# ---------------------------------------------------------------------------
def fold_bn(gamma, beta, mean, var, eps=1e-5):
    scale = gamma / jnp.sqrt(var + eps)
    bias = beta - mean * scale
    return scale, bias


def prepare_params(params):
    conv1_w = params["conv1_w"]   # (Cmid, Cin, 1, 1)
    conv2_w = params["conv2_w"]   # (Cmid, Cmid, 3, 3)
    conv3_w = params["conv3_w"]   # (Cout, Cmid, 1, 1)
    Cmid, Cin = conv1_w.shape[:2]
    Cout = conv3_w.shape[0]
    Cin_p, Cmid_p, Cout_p = (_round_up(c, LANE) for c in (Cin, Cmid, Cout))

    s1, b1 = fold_bn(*params["bn1"])
    s2, b2 = fold_bn(*params["bn2"])
    s3, b3 = fold_bn(*params["bn3"])

    # BN scale folded into per-output-channel weight columns.
    w1 = conv1_w[:, :, 0, 0].T * s1[None, :]                             # (Cin, Cmid)
    w2 = jnp.transpose(conv2_w, (2, 3, 1, 0)).reshape(9, Cmid, Cmid)     # (tap, ci, co)
    w2 = w2 * s2[None, None, :]
    w3 = conv3_w[:, :, 0, 0].T * s3[None, :]                             # (Cmid, Cout)

    prepped = {
        "dims": (Cin, Cmid, Cout, Cin_p, Cmid_p, Cout_p),
        "w1": _pad_axis(_pad_axis(w1, 0, Cin_p), 1, Cmid_p).astype(jnp.bfloat16),
        "b1": _pad_axis(b1, 0, Cmid_p).reshape(1, Cmid_p).astype(jnp.float32),
        "w2": _pad_axis(_pad_axis(w2, 1, Cmid_p), 2, Cmid_p).astype(jnp.bfloat16),
        "b2": _pad_axis(b2, 0, Cmid_p).reshape(1, Cmid_p).astype(jnp.float32),
        "w3": _pad_axis(_pad_axis(w3, 0, Cmid_p), 1, Cout_p).astype(jnp.bfloat16),
        "b3": _pad_axis(b3, 0, Cout_p).reshape(1, Cout_p).astype(jnp.float32),
        "has_shortcut": "sc_w" in params,
    }
    if "sc_w" in params:
        ssc, bsc = fold_bn(*params["sc_bn"])
        wsc = params["sc_w"][:, :, 0, 0].T * ssc[None, :]                # (Cin, Cout)
        prepped["wsc"] = _pad_axis(_pad_axis(wsc, 0, Cin_p), 1, Cout_p).astype(jnp.bfloat16)
        prepped["bsc"] = _pad_axis(bsc, 0, Cout_p).reshape(1, Cout_p).astype(jnp.float32)
    else:
        assert Cin == Cout, "identity shortcut requires Cin == Cout"
    return prepped


# ---------------------------------------------------------------------------
# Forward pass
# ---------------------------------------------------------------------------
def basic_block_forward(x_nchw, prepped):
    Cin, Cmid, Cout, Cin_p, Cmid_p, Cout_p = prepped["dims"]
    N, C, H, W = x_nchw.shape
    assert C == Cin
    M = N * H * W
    M_p = _round_up(M, TM)

    x_nhwc = jnp.transpose(x_nchw, (0, 2, 3, 1)).astype(jnp.bfloat16)
    x_flat = x_nhwc.reshape(M, Cin)
    x_flat = _pad_axis(_pad_axis(x_flat, 1, Cin_p), 0, M_p)              # (M_p, Cin_p)

    # conv1 (1x1) + bn1 + relu  (fused matmul)
    h1 = matmul_bias(x_flat, prepped["w1"], prepped["b1"],
                     relu=True, out_dtype=jnp.bfloat16)                  # (M_p, Cmid_p)

    # conv2 (3x3, pad=1) + bn2 + relu -- im2col fused inside the kernel.
    h1_img = h1[:M].reshape(N, H, W, Cmid_p)
    h1_pad = jnp.pad(h1_img, ((0, 0), (1, 1), (1, 1), (0, 0)))           # spatial halo
    h2 = conv3x3_bias_relu(h1_pad, prepped["w2"], prepped["b2"],
                           out_dtype=jnp.bfloat16)                       # (N, H*W, Cmid_p)
    h2_flat = _pad_axis(h2.reshape(M, Cmid_p), 0, M_p)                   # (M_p, Cmid_p)

    # conv3 (1x1) + bn3 + shortcut + add + relu  (single fused kernel)
    if prepped["has_shortcut"]:
        out = conv3_proj_add_relu(h2_flat, x_flat, prepped["w3"], prepped["b3"],
                                  prepped["wsc"], prepped["bsc"])
    else:
        out = conv3_id_add_relu(h2_flat, x_flat, prepped["w3"], prepped["b3"])

    out = out[:M, :Cout].reshape(N, H, W, Cout)
    return jnp.transpose(out, (0, 3, 1, 2))                              # back to NCHW


# ---------------------------------------------------------------------------
# Reference (plain JAX, NCHW, f32)
# ---------------------------------------------------------------------------
def ref_forward(x, params, eps=1e-5):
    def conv(h, w, pad):
        return jax.lax.conv_general_dilated(
            h, w, (1, 1), pad, dimension_numbers=("NCHW", "OIHW", "NCHW"))

    def bn(h, p):
        gamma, beta, mean, var = p
        s = gamma / jnp.sqrt(var + eps)
        b = beta - mean * s
        return h * s[None, :, None, None] + b[None, :, None, None]

    h = jax.nn.relu(bn(conv(x, params["conv1_w"], "VALID"), params["bn1"]))
    h = jax.nn.relu(bn(conv(h, params["conv2_w"], [(1, 1), (1, 1)]), params["bn2"]))
    h = bn(conv(h, params["conv3_w"], "VALID"), params["bn3"])
    if "sc_w" in params:
        sc = bn(conv(x, params["sc_w"], "VALID"), params["sc_bn"])
    else:
        sc = x
    return jax.nn.relu(sc + h)


# ---------------------------------------------------------------------------
def make_params(key, cin, cmid, cout, *, with_shortcut):
    ks = jax.random.split(key, 8)

    def bn_params(k, c):
        k0, k1, k2, k3 = jax.random.split(k, 4)
        gamma = 0.5 + jax.random.uniform(k0, (c,), jnp.float32)
        beta = 0.1 * jax.random.normal(k1, (c,), jnp.float32)
        mean = 0.1 * jax.random.normal(k2, (c,), jnp.float32)
        var = 0.5 + jax.random.uniform(k3, (c,), jnp.float32)
        return (gamma, beta, mean, var)

    params = {
        "conv1_w": 0.2 * jax.random.normal(ks[0], (cmid, cin, 1, 1), jnp.float32),
        "bn1": bn_params(ks[1], cmid),
        "conv2_w": 0.2 * jax.random.normal(ks[2], (cmid, cmid, 3, 3), jnp.float32),
        "bn2": bn_params(ks[3], cmid),
        "conv3_w": 0.2 * jax.random.normal(ks[4], (cout, cmid, 1, 1), jnp.float32),
        "bn3": bn_params(ks[5], cout),
    }
    if with_shortcut:
        params["sc_w"] = 0.2 * jax.random.normal(ks[6], (cout, cin, 1, 1), jnp.float32)
        params["sc_bn"] = bn_params(ks[7], cout)
    return params


if __name__ == "__main__":
    key = jax.random.PRNGKey(0)
    kx1, kp1, kx2, kp2 = jax.random.split(key, 4)

    # Case 1: projection shortcut (channel change Cin=4 -> Cout=8)
    Nb, Cin, Hs, Ws, Cmid, Cout = 2, 4, 16, 16, 4, 8
    x1 = jax.random.normal(kx1, (Nb, Cin, Hs, Ws), jnp.float32)
    params1 = make_params(kp1, Cin, Cmid, Cout, with_shortcut=True)
    prepped1 = prepare_params(params1)
    fwd1 = jax.jit(lambda xx: basic_block_forward(xx, prepped1))
    out1 = jax.block_until_ready(fwd1(x1))
    ref1 = jax.block_until_ready(ref_forward(x1, params1))
    assert out1.shape == ref1.shape == (Nb, Cout, Hs, Ws)
    assert jnp.allclose(out1, ref1, atol=5e-2, rtol=5e-2), "mismatch (projection shortcut)"

    # Case 2: identity shortcut (Cin == Cout, no projection)
    Cin2 = Cmid2 = Cout2 = 8
    x2 = jax.random.normal(kx2, (Nb, Cin2, Hs, Ws), jnp.float32)
    params2 = make_params(kp2, Cin2, Cmid2, Cout2, with_shortcut=False)
    prepped2 = prepare_params(params2)
    fwd2 = jax.jit(lambda xx: basic_block_forward(xx, prepped2))
    out2 = jax.block_until_ready(fwd2(x2))
    ref2 = jax.block_until_ready(ref_forward(x2, params2))
    assert out2.shape == ref2.shape == (Nb, Cout2, Hs, Ws)
    assert jnp.allclose(out2, ref2, atol=5e-2, rtol=5e-2), "mismatch (identity shortcut)"

    print("KERNEL_OK")
</pallas_src>

<mosaic_0001>
module attributes {stable_mosaic.version = 11 : i64} {
  func.func @_matmul_bias_kernel(%arg0: i32, %arg1: memref<512x128xbf16, #tpu.memory_space<vmem>>, %arg2: memref<128x128xbf16, #tpu.memory_space<vmem>>, %arg3: memref<1x128xf32, #tpu.memory_space<vmem>>, %arg4: memref<512x128xbf16, #tpu.memory_space<vmem>>) attributes {dimension_semantics = [#tpu.dimension_semantics<parallel>], iteration_bounds = array<i64: 1>, scalar_prefetch = 0 : i64, scratch_operands = 0 : i64, tpu.core_type = #tpu.core_type<tc>, window_params = [{transform_indices = @transform_0, window_bounds = array<i64: 512, 128>}, {pipeline_mode = #tpu.pipeline_mode<synchronous>, transform_indices = @transform_1, window_bounds = array<i64: 128, 128>}, {pipeline_mode = #tpu.pipeline_mode<synchronous>, transform_indices = @transform_2, window_bounds = array<i64: 1, 128>}, {transform_indices = @transform_3, window_bounds = array<i64: 512, 128>}]} {
    %c0 = arith.constant 0 : index
    %c0_0 = arith.constant 0 : index
    %0 = vector.load %arg1[%c0, %c0_0] : memref<512x128xbf16, #tpu.memory_space<vmem>>, vector<512x128xbf16>
    %c0_1 = arith.constant 0 : index
    %c0_2 = arith.constant 0 : index
    %1 = vector.load %arg2[%c0_1, %c0_2] : memref<128x128xbf16, #tpu.memory_space<vmem>>, vector<128x128xbf16>
    %cst = arith.constant dense<0.000000e+00> : vector<512x128xf32>
    %2 = tpu.matmul %0, %1, %cst {dimension_numbers = #tpu.dot_dimension_numbers<[1], [0], [0], [1], [0, 0, 1, 1], [], []>} : vector<512x128xbf16>, vector<128x128xbf16>, vector<512x128xf32> -> vector<512x128xf32>
    %c0_3 = arith.constant 0 : index
    %c0_4 = arith.constant 0 : index
    %3 = vector.load %arg3[%c0_3, %c0_4] : memref<1x128xf32, #tpu.memory_space<vmem>>, vector<1x128xf32>
    %4 = vector.broadcast %3 : vector<1x128xf32> to vector<512x128xf32>
    %5 = arith.addf %2, %4 : vector<512x128xf32>
    %cst_5 = arith.constant 0.000000e+00 : f32
    %6 = vector.broadcast %cst_5 : f32 to vector<512x128xf32>
    %7 = arith.maximumf %5, %6 : vector<512x128xf32>
    %8 = arith.truncf %7 : vector<512x128xf32> to vector<512x128xbf16>
    %c0_6 = arith.constant 0 : index
    %c0_7 = arith.constant 0 : index
    %9 = vector.load %arg4[%c0_6, %c0_7] : memref<512x128xbf16, #tpu.memory_space<vmem>>, vector<512x128xbf16>
    tpu.vector_store %arg4[%c0_6, %c0_7], %8 {strides = array<i32>} : memref<512x128xbf16, #tpu.memory_space<vmem>>, vector<512x128xbf16>,
    return
  }
  func.func @transform_0(%arg0: i32) -> (i32, i32) {
    %c0_i32 = arith.constant 0 : i32
    %c0_i32_0 = arith.constant 0 : i32
    return %arg0, %c0_i32 : i32, i32
  }
  func.func @transform_1(%arg0: i32) -> (i32, i32) {
    %c0_i32 = arith.constant 0 : i32
    %c0_i32_0 = arith.constant 0 : i32
    %c0_i32_1 = arith.constant 0 : i32
    return %c0_i32, %c0_i32_0 : i32, i32
  }
  func.func @transform_2(%arg0: i32) -> (i32, i32) {
    %c0_i32 = arith.constant 0 : i32
    %c0_i32_0 = arith.constant 0 : i32
    %c0_i32_1 = arith.constant 0 : i32
    return %c0_i32, %c0_i32_0 : i32, i32
  }
  func.func @transform_3(%arg0: i32) -> (i32, i32) {
    %c0_i32 = arith.constant 0 : i32
    %c0_i32_0 = arith.constant 0 : i32
    return %arg0, %c0_i32 : i32, i32
  }
}

module attributes {stable_mosaic.version = 11 : i64} {
  func.func @_conv3x3_bias_relu_kernel(%arg0: i32, %arg1: memref<1x18x18x128xbf16, #tpu.memory_space<vmem>>, %arg2: memref<9x128x128xbf16, #tpu.memory_space<vmem>>, %arg3: memref<1x128xf32, #tpu.memory_space<vmem>>, %arg4: memref<1x256x128xbf16, #tpu.memory_space<vmem>>) attributes {dimension_semantics = [#tpu.dimension_semantics<parallel>], iteration_bounds = array<i64: 2>, scalar_prefetch = 0 : i64, scratch_operands = 0 : i64, tpu.core_type = #tpu.core_type<tc>, window_params = [{transform_indices = @transform_0, window_bounds = array<i64: 1, 18, 18, 128>}, {pipeline_mode = #tpu.pipeline_mode<synchronous>, transform_indices = @transform_1, window_bounds = array<i64: 9, 128, 128>}, {pipeline_mode = #tpu.pipeline_mode<synchronous>, transform_indices = @transform_2, window_bounds = array<i64: 1, 128>}, {transform_indices = @transform_3, window_bounds = array<i64: 1, 256, 128>}]} {
    %c0 = arith.constant 0 : index
    %c0_0 = arith.constant 0 : index
    %c0_1 = arith.constant 0 : index
    %c0_2 = arith.constant 0 : index
    %0 = vector.load %arg1[%c0, %c0_0, %c0_1, %c0_2] : memref<1x18x18x128xbf16, #tpu.memory_space<vmem>>, vector<1x18x18x128xbf16>
    %1 = vector.shape_cast %0 : vector<1x18x18x128xbf16> to vector<18x18x128xbf16>
    %cst = arith.constant 0.000000e+00 : f32
    %2 = vector.broadcast %cst : f32 to vector<256x128xf32>
    %3 = vector.extract_strided_slice %1 {offsets = [0, 0, 0], sizes = [16, 16, 128], strides = [1, 1, 1]} : vector<18x18x128xbf16> to vector<16x16x128xbf16>
    %4 = vector.shape_cast %3 : vector<16x16x128xbf16> to vector<256x128xbf16>
    %c0_3 = arith.constant 0 : index
    %c0_4 = arith.constant 0 : index
    %c0_5 = arith.constant 0 : index
    %5 = vector.load %arg2[%c0_3, %c0_4, %c0_5] : memref<9x128x128xbf16, #tpu.memory_space<vmem>>, vector<1x128x128xbf16>
    %6 = vector.shape_cast %5 : vector<1x128x128xbf16> to vector<128x128xbf16>
    %cst_6 = arith.constant dense<0.000000e+00> : vector<256x128xf32>
    %7 = tpu.matmul %4, %6, %cst_6 {dimension_numbers = #tpu.dot_dimension_numbers<[1], [0], [0], [1], [0, 0, 1, 1], [], []>} : vector<256x128xbf16>, vector<128x128xbf16>, vector<256x128xf32> -> vector<256x128xf32>
    %8 = arith.addf %2, %7 : vector<256x128xf32>
    %9 = vector.extract_strided_slice %1 {offsets = [0, 1, 0], sizes = [16, 16, 128], strides = [1, 1, 1]} : vector<18x18x128xbf16> to vector<16x16x128xbf16>
    %10 = vector.shape_cast %9 : vector<16x16x128xbf16> to vector<256x128xbf16>
    %c1 = arith.constant 1 : index
    %c0_7 = arith.constant 0 : index
    %c0_8 = arith.constant 0 : index
    %11 = vector.load %arg2[%c1, %c0_7, %c0_8] : memref<9x128x128xbf16, #tpu.memory_space<vmem>>, vector<1x128x128xbf16>
    %12 = vector.shape_cast %11 : vector<1x128x128xbf16> to vector<128x128xbf16>
    %cst_9 = arith.constant dense<0.000000e+00> : vector<256x128xf32>
    %13 = tpu.matmul %10, %12, %cst_9 {dimension_numbers = #tpu.dot_dimension_numbers<[1], [0], [0], [1], [0, 0, 1, 1], [], []>} : vector<256x128xbf16>, vector<128x128xbf16>, vector<256x128xf32> -> vector<256x128xf32>
    %14 = arith.addf %8, %13 : vector<256x128xf32>
    %15 = vector.extract_strided_slice %1 {offsets = [0, 2, 0], sizes = [16, 16, 128], strides = [1, 1, 1]} : vector<18x18x128xbf16> to vector<16x16x128xbf16>
    %16 = vector.shape_cast %15 : vector<16x16x128xbf16> to vector<256x128xbf16>
    %c2 = arith.constant 2 : index
    %c0_10 = arith.constant 0 : index
    %c0_11 = arith.constant 0 : index
    %17 = vector.load %arg2[%c2, %c0_10, %c0_11] : memref<9x128x128xbf16, #tpu.memory_space<vmem>>, vector<1x128x128xbf16>
    %18 = vector.shape_cast %17 : vector<1x128x128xbf16> to vector<128x128xbf16>
    %cst_12 = arith.constant dense<0.000000e+00> : vector<256x128xf32>
    %19 = tpu.matmul %16, %18, %cst_12 {dimension_numbers = #tpu.dot_dimension_numbers<[1], [0], [0], [1], [0, 0, 1, 1], [], []>} : vector<256x128xbf16>, vector<128x128xbf16>, vector<256x128xf32> -> vector<256x128xf32>
    %20 = arith.addf %14, %19 : vector<256x128xf32>
    %21 = vector.extract_strided_slice %1 {offsets = [1, 0, 0], sizes = [16, 16, 128], strides = [1, 1, 1]} : vector<18x18x128xbf16> to vector<16x16x128xbf16>
    %22 = vector.shape_cast %21 : vector<16x16x128xbf16> to vector<256x128xbf16>
    %c3 = arith.constant 3 : index
    %c0_13 = arith.constant 0 : index
    %c0_14 = arith.constant 0 : index
    %23 = vector.load %arg2[%c3, %c0_13, %c0_14] : memref<9x128x128xbf16, #tpu.memory_space<vmem>>, vector<1x128x128xbf16>
    %24 = vector.shape_cast %23 : vector<1x128x128xbf16> to vector<128x128xbf16>
    %cst_15 = arith.constant dense<0.000000e+00> : vector<256x128xf32>
    %25 = tpu.matmul %22, %24, %cst_15 {dimension_numbers = #tpu.dot_dimension_numbers<[1], [0], [0], [1], [0, 0, 1, 1], [], []>} : vector<256x128xbf16>, vector<128x128xbf16>, vector<256x128xf32> -> vector<256x128xf32>
    %26 = arith.addf %20, %25 : vector<256x128xf32>
    %27 = vector.extract_strided_slice %1 {offsets = [1, 1, 0], sizes = [16, 16, 128], strides = [1, 1, 1]} : vector<18x18x128xbf16> to vector<16x16x128xbf16>
    %28 = vector.shape_cast %27 : vector<16x16x128xbf16> to vector<256x128xbf16>
    %c4 = arith.constant 4 : index
    %c0_16 = arith.constant 0 : index
    %c0_17 = arith.constant 0 : index
    %29 = vector.load %arg2[%c4, %c0_16, %c0_17] : memref<9x128x128xbf16, #tpu.memory_space<vmem>>, vector<1x128x128xbf16>
    %30 = vector.shape_cast %29 : vector<1x128x128xbf16> to vector<128x128xbf16>
    %cst_18 = arith.constant dense<0.000000e+00> : vector<256x128xf32>
    %31 = tpu.matmul %28, %30, %cst_18 {dimension_numbers = #tpu.dot_dimension_numbers<[1], [0], [0], [1], [0, 0, 1, 1], [], []>} : vector<256x128xbf16>, vector<128x128xbf16>, vector<256x128xf32> -> vector<256x128xf32>
    %32 = arith.addf %26, %31 : vector<256x128xf32>
    %33 = vector.extract_strided_slice %1 {offsets = [1, 2, 0], sizes = [16, 16, 128], strides = [1, 1, 1]} : vector<18x18x128xbf16> to vector<16x16x128xbf16>
    %34 = vector.shape_cast %33 : vector<16x16x128xbf16> to vector<256x128xbf16>
    %c5 = arith.constant 5 : index
    %c0_19 = arith.constant 0 : index
    %c0_20 = arith.constant 0 : index
    %35 = vector.load %arg2[%c5, %c0_19, %c0_20] : memref<9x128x128xbf16, #tpu.memory_space<vmem>>, vector<1x128x128xbf16>
    %36 = vector.shape_cast %35 : vector<1x128x128xbf16> to vector<128x128xbf16>
    %cst_21 = arith.constant dense<0.000000e+00> : vector<256x128xf32>
    %37 = tpu.matmul %34, %36, %cst_21 {dimension_numbers = #tpu.dot_dimension_numbers<[1], [0], [0], [1], [0, 0, 1, 1], [], []>} : vector<256x128xbf16>, vector<128x128xbf16>, vector<256x128xf32> -> vector<256x128xf32>
    %38 = arith.addf %32, %37 : vector<256x128xf32>
    %39 = vector.extract_strided_slice %1 {offsets = [2, 0, 0], sizes = [16, 16, 128], strides = [1, 1, 1]} : vector<18x18x128xbf16> to vector<16x16x128xbf16>
    %40 = vector.shape_cast %39 : vector<16x16x128xbf16> to vector<256x128xbf16>
    %c6 = arith.constant 6 : index
    %c0_22 = arith.constant 0 : index
    %c0_23 = arith.constant 0 : index
    %41 = vector.load %arg2[%c6, %c0_22, %c0_23] : memref<9x128x128xbf16, #tpu.memory_space<vmem>>, vector<1x128x128xbf16>
    %42 = vector.shape_cast %41 : vector<1x128x128xbf16> to vector<128x128xbf16>
    %cst_24 = arith.constant dense<0.000000e+00> : vector<256x128xf32>
    %43 = tpu.matmul %40, %42, %cst_24 {dimension_numbers = #tpu.dot_dimension_numbers<[1], [0], [0], [1], [0, 0, 1, 1], [], []>} : vector<256x128xbf16>, vector<128x128xbf16>, vector<256x128xf32> -> vector<256x128xf32>
    %44 = arith.addf %38, %43 : vector<256x128xf32>
    %45 = vector.extract_strided_slice %1 {offsets = [2, 1, 0], sizes = [16, 16, 128], strides = [1, 1, 1]} : vector<18x18x128xbf16> to vector<16x16x128xbf16>
    %46 = vector.shape_cast %45 : vector<16x16x128xbf16> to vector<256x128xbf16>
    %c7 = arith.constant 7 : index
    %c0_25 = arith.constant 0 : index
    %c0_26 = arith.constant 0 : index
    %47 = vector.load %arg2[%c7, %c0_25, %c0_26] : memref<9x128x128xbf16, #tpu.memory_space<vmem>>, vector<1x128x128xbf16>
    %48 = vector.shape_cast %47 : vector<1x128x128xbf16> to vector<128x128xbf16>
    %cst_27 = arith.constant dense<0.000000e+00> : vector<256x128xf32>
    %49 = tpu.matmul %46, %48, %cst_27 {dimension_numbers = #tpu.dot_dimension_numbers<[1], [0], [0], [1], [0, 0, 1, 1], [], []>} : vector<256x128xbf16>, vector<128x128xbf16>, vector<256x128xf32> -> vector<256x128xf32>
    %50 = arith.addf %44, %49 : vector<256x128xf32>
    %51 = vector.extract_strided_slice %1 {offsets = [2, 2, 0], sizes = [16, 16, 128], strides = [1, 1, 1]} : vector<18x18x128xbf16> to vector<16x16x128xbf16>
    %52 = vector.shape_cast %51 : vector<16x16x128xbf16> to vector<256x128xbf16>
    %c8 = arith.constant 8 : index
    %c0_28 = arith.constant 0 : index
    %c0_29 = arith.constant 0 : index
    %53 = vector.load %arg2[%c8, %c0_28, %c0_29] : memref<9x128x128xbf16, #tpu.memory_space<vmem>>, vector<1x128x128xbf16>
    %54 = vector.shape_cast %53 : vector<1x128x128xbf16> to vector<128x128xbf16>
    %cst_30 = arith.constant dense<0.000000e+00> : vector<256x128xf32>
    %55 = tpu.matmul %52, %54, %cst_30 {dimension_numbers = #tpu.dot_dimension_numbers<[1], [0], [0], [1], [0, 0, 1, 1], [], []>} : vector<256x128xbf16>, vector<128x128xbf16>, vector<256x128xf32> -> vector<256x128xf32>
    %56 = arith.addf %50, %55 : vector<256x128xf32>
    %c0_31 = arith.constant 0 : index
    %c0_32 = arith.constant 0 : index
    %57 = vector.load %arg3[%c0_31, %c0_32] : memref<1x128xf32, #tpu.memory_space<vmem>>, vector<1x128xf32>
    %58 = vector.broadcast %57 : vector<1x128xf32> to vector<256x128xf32>
    %59 = arith.addf %56, %58 : vector<256x128xf32>
    %cst_33 = arith.constant 0.000000e+00 : f32
    %60 = vector.broadcast %cst_33 : f32 to vector<256x128xf32>
    %61 = arith.maximumf %59, %60 : vector<256x128xf32>
    %62 = arith.truncf %61 : vector<256x128xf32> to vector<256x128xbf16>
    %c0_34 = arith.constant 0 : index
    %c0_35 = arith.constant 0 : index
    %c0_36 = arith.constant 0 : index
    %63 = vector.load %arg4[%c0_34, %c0_35, %c0_36] : memref<1x256x128xbf16, #tpu.memory_space<vmem>>, vector<1x256x128xbf16>
    %64 = vector.shape_cast %63 : vector<1x256x128xbf16> to vector<256x128xbf16>
    %65 = vector.shape_cast %62 : vector<256x128xbf16> to vector<1x256x128xbf16>
    tpu.vector_store %arg4[%c0_34, %c0_35, %c0_36], %65 {strides = array<i32>} : memref<1x256x128xbf16, #tpu.memory_space<vmem>>, vector<1x256x128xbf16>,
    return
  }
  func.func @transform_0(%arg0: i32) -> (i32, i32, i32, i32) {
    %c0_i32 = arith.constant 0 : i32
    %c0_i32_0 = arith.constant 0 : i32
    %c0_i32_1 = arith.constant 0 : i32
    %c0_i32_2 = arith.constant 0 : i32
    return %arg0, %c0_i32, %c0_i32_0, %c0_i32_1 : i32, i32, i32, i32
  }
  func.func @transform_1(%arg0: i32) -> (i32, i32, i32) {
    %c0_i32 = arith.constant 0 : i32
    %c0_i32_0 = arith.constant 0 : i32
    %c0_i32_1 = arith.constant 0 : i32
    %c0_i32_2 = arith.constant 0 : i32
    return %c0_i32, %c0_i32_0, %c0_i32_1 : i32, i32, i32
  }
  func.func @transform_2(%arg0: i32) -> (i32, i32) {
    %c0_i32 = arith.constant 0 : i32
    %c0_i32_0 = arith.constant 0 : i32
    %c0_i32_1 = arith.constant 0 : i32
    return %c0_i32, %c0_i32_0 : i32, i32
  }
  func.func @transform_3(%arg0: i32) -> (i32, i32, i32) {
    %c0_i32 = arith.constant 0 : i32
    %c0_i32_0 = arith.constant 0 : i32
    %c0_i32_1 = arith.constant 0 : i32
    return %arg0, %c0_i32, %c0_i32_0 : i32, i32, i32
  }
}

module attributes {stable_mosaic.version = 11 : i64} {
  func.func @_conv3_proj_add_relu_kernel(%arg0: i32, %arg1: memref<512x128xbf16, #tpu.memory_space<vmem>>, %arg2: memref<512x128xbf16, #tpu.memory_space<vmem>>, %arg3: memref<128x128xbf16, #tpu.memory_space<vmem>>, %arg4: memref<1x128xf32, #tpu.memory_space<vmem>>, %arg5: memref<128x128xbf16, #tpu.memory_space<vmem>>, %arg6: memref<1x128xf32, #tpu.memory_space<vmem>>, %arg7: memref<512x128xf32, #tpu.memory_space<vmem>>) attributes {dimension_semantics = [#tpu.dimension_semantics<parallel>], iteration_bounds = array<i64: 1>, scalar_prefetch = 0 : i64, scratch_operands = 0 : i64, tpu.core_type = #tpu.core_type<tc>, window_params = [{transform_indices = @transform_0, window_bounds = array<i64: 512, 128>}, {transform_indices = @transform_1, window_bounds = array<i64: 512, 128>}, {pipeline_mode = #tpu.pipeline_mode<synchronous>, transform_indices = @transform_2, window_bounds = array<i64: 128, 128>}, {pipeline_mode = #tpu.pipeline_mode<synchronous>, transform_indices = @transform_3, window_bounds = array<i64: 1, 128>}, {pipeline_mode = #tpu.pipeline_mode<synchronous>, transform_indices = @transform_4, window_bounds = array<i64: 128, 128>}, {pipeline_mode = #tpu.pipeline_mode<synchronous>, transform_indices = @transform_5, window_bounds = array<i64: 1, 128>}, {transform_indices = @transform_6, window_bounds = array<i64: 512, 128>}]} {
    %c0 = arith.constant 0 : index
    %c0_0 = arith.constant 0 : index
    %0 = vector.load %arg1[%c0, %c0_0] : memref<512x128xbf16, #tpu.memory_space<vmem>>, vector<512x128xbf16>
    %c0_1 = arith.constant 0 : index
    %c0_2 = arith.constant 0 : index
    %1 = vector.load %arg3[%c0_1, %c0_2] : memref<128x128xbf16, #tpu.memory_space<vmem>>, vector<128x128xbf16>
    %cst = arith.constant dense<0.000000e+00> : vector<512x128xf32>
    %2 = tpu.matmul %0, %1, %cst {dimension_numbers = #tpu.dot_dimension_numbers<[1], [0], [0], [1], [0, 0, 1, 1], [], []>} : vector<512x128xbf16>, vector<128x128xbf16>, vector<512x128xf32> -> vector<512x128xf32>
    %c0_3 = arith.constant 0 : index
    %c0_4 = arith.constant 0 : index
    %3 = vector.load %arg4[%c0_3, %c0_4] : memref<1x128xf32, #tpu.memory_space<vmem>>, vector<1x128xf32>
    %4 = vector.broadcast %3 : vector<1x128xf32> to vector<512x128xf32>
    %5 = arith.addf %2, %4 : vector<512x128xf32>
    %c0_5 = arith.constant 0 : index
    %c0_6 = arith.constant 0 : index
    %6 = vector.load %arg2[%c0_5, %c0_6] : memref<512x128xbf16, #tpu.memory_space<vmem>>, vector<512x128xbf16>
    %c0_7 = arith.constant 0 : index
    %c0_8 = arith.constant 0 : index
    %7 = vector.load %arg5[%c0_7, %c0_8] : memref<128x128xbf16, #tpu.memory_space<vmem>>, vector<128x128xbf16>
    %cst_9 = arith.constant dense<0.000000e+00> : vector<512x128xf32>
    %8 = tpu.matmul %6, %7, %cst_9 {dimension_numbers = #tpu.dot_dimension_numbers<[1], [0], [0], [1], [0, 0, 1, 1], [], []>} : vector<512x128xbf16>, vector<128x128xbf16>, vector<512x128xf32> -> vector<512x128xf32>
    %c0_10 = arith.constant 0 : index
    %c0_11 = arith.constant 0 : index
    %9 = vector.load %arg6[%c0_10, %c0_11] : memref<1x128xf32, #tpu.memory_space<vmem>>, vector<1x128xf32>
    %10 = vector.broadcast %9 : vector<1x128xf32> to vector<512x128xf32>
    %11 = arith.addf %8, %10 : vector<512x128xf32>
    %12 = arith.addf %5, %11 : vector<512x128xf32>
    %cst_12 = arith.constant 0.000000e+00 : f32
    %13 = vector.broadcast %cst_12 : f32 to vector<512x128xf32>
    %14 = arith.maximumf %12, %13 : vector<512x128xf32>
    %c0_13 = arith.constant 0 : index
    %c0_14 = arith.constant 0 : index
    %15 = vector.load %arg7[%c0_13, %c0_14] : memref<512x128xf32, #tpu.memory_space<vmem>>, vector<512x128xf32>
    tpu.vector_store %arg7[%c0_13, %c0_14], %14 {strides = array<i32>} : memref<512x128xf32, #tpu.memory_space<vmem>>, vector<512x128xf32>,
    return
  }
  func.func @transform_0(%arg0: i32) -> (i32, i32) {
    %c0_i32 = arith.constant 0 : i32
    %c0_i32_0 = arith.constant 0 : i32
    return %arg0, %c0_i32 : i32, i32
  }
  func.func @transform_1(%arg0: i32) -> (i32, i32) {
    %c0_i32 = arith.constant 0 : i32
    %c0_i32_0 = arith.constant 0 : i32
    return %arg0, %c0_i32 : i32, i32
  }
  func.func @transform_2(%arg0: i32) -> (i32, i32) {
    %c0_i32 = arith.constant 0 : i32
    %c0_i32_0 = arith.constant 0 : i32
    %c0_i32_1 = arith.constant 0 : i32
    return %c0_i32, %c0_i32_0 : i32, i32
  }
  func.func @transform_3(%arg0: i32) -> (i32, i32) {
    %c0_i32 = arith.constant 0 : i32
    %c0_i32_0 = arith.constant 0 : i32
    %c0_i32_1 = arith.constant 0 : i32
    return %c0_i32, %c0_i32_0 : i32, i32
  }
  func.func @transform_4(%arg0: i32) -> (i32, i32) {
    %c0_i32 = arith.constant 0 : i32
    %c0_i32_0 = arith.constant 0 : i32
    %c0_i32_1 = arith.constant 0 : i32
    return %c0_i32, %c0_i32_0 : i32, i32
  }
  func.func @transform_5(%arg0: i32) -> (i32, i32) {
    %c0_i32 = arith.constant 0 : i32
    %c0_i32_0 = arith.constant 0 : i32
    %c0_i32_1 = arith.constant 0 : i32
    return %c0_i32, %c0_i32_0 : i32, i32
  }
  func.func @transform_6(%arg0: i32) -> (i32, i32) {
    %c0_i32 = arith.constant 0 : i32
    %c0_i32_0 = arith.constant 0 : i32
    return %arg0, %c0_i32 : i32, i32
  }
}

</mosaic_0001>

<llo_original>
// kernel: _lambda_.3
$region0: #{_lambda_.3}
  #allocation0 [shape = 'u32[]', space=smem, size = 0x4, offset = 0x4, fixed_abs, tag = 'smem constant byte address 0x4 - core index']
  #allocation1 [shape = 'u32[144,128]{1,0:T(1,128)}', space=vmem, size = 0x12000, scoped, tag = 'internal scratch']
  %s0 = inlined_call_operand.vmem [shape: bf16[512,128], index: 0, kind: input, shape index: {}]
  %s1 = inlined_call_operand.vmem [shape: bf16[128,128], index: 1, kind: input, shape index: {}]
  %s2 = inlined_call_operand.vmem [shape: f32[1,128], index: 2, kind: input, shape index: {}]
  %s3 = inlined_call_operand.vmem [shape: bf16[512,128], index: 3, kind: output, shape index: {}]
  %s4 = sld [smem:[#allocation0]]
  $region22: #{_lambda_.3} parent=0
    _
  %s6 = ssub.s32 1, %s4
  %s7 = scalar_select 0, %s6, %s4
  // Predicated region
  $region2: #{_lambda_.3} parent=0 // pred_check
    _
  $region3: #{_lambda_.3} parent=0 // pred_check_branch
    %9 = sbr.rel (0) target = $region5
  $region4: #{_lambda_.3} parent=0 // pred_region
    _
  $region5: #{_lambda_.3} parent=0 // pred_fallthru
    _
  // Predicated region
  $region6: #{_lambda_.3} parent=0 // pred_check
    _
  $region7: #{_lambda_.3} parent=0 // pred_check_branch
    %11 = sbr.rel (0) target = $region9
  $region8: #{_lambda_.3} parent=0 // pred_region
    _
  $region9: #{_lambda_.3} parent=0 // pred_fallthru
    _
  // Predicated region
  $region10: #{_lambda_.3} parent=0 // pred_check
    _
  $region11: #{_lambda_.3} parent=0 // pred_check_branch
    %13 = sbr.rel (0) target = $region13
  $region12: #{_lambda_.3} parent=0 // pred_region
    _
  $region13: #{_lambda_.3} parent=0 // pred_fallthru
    _
  %v15 = vld [vmem:[%s0] sm:$0xf]
  %v16 = vld [vmem:[%s0 + $0x4] sm:$0xf]
  %v17 = vld [vmem:[%s0 + $0x8] sm:$0xf]
  %v18 = vld [vmem:[%s0 + $0xc] sm:$0xf]
  %v19 = vld [vmem:[%s0 + $0x10] sm:$0xf]
  %v20 = vld [vmem:[%s0 + $0x14] sm:$0xf]
  %v21 = vld [vmem:[%s0 + $0x18] sm:$0xf]
  %v22 = vld [vmem:[%s0 + $0x1c] sm:$0xf]
  %v23 = vld [vmem:[%s0 + $0x20] sm:$0xf]
  %v24 = vld [vmem:[%s0 + $0x24] sm:$0xf]
  %v25 = vld [vmem:[%s0 + $0x28] sm:$0xf]
  %v26 = vld [vmem:[%s0 + $0x2c] sm:$0xf]
  %v27 = vld [vmem:[%s0 + $0x30] sm:$0xf]
  %v28 = vld [vmem:[%s0 + $0x34] sm:$0xf]
  %v29 = vld [vmem:[%s0 + $0x38] sm:$0xf]
  %v30 = vld [vmem:[%s0 + $0x3c] sm:$0xf]
  %v31 = vld [vmem:[%s0 + $0x40] sm:$0xf]
  %v32 = vld [vmem:[%s0 + $0x44] sm:$0xf]
  %v33 = vld [vmem:[%s0 + $0x48] sm:$0xf]
  %v34 = vld [vmem:[%s0 + $0x4c] sm:$0xf]
  %v35 = vld [vmem:[%s0 + $0x50] sm:$0xf]
  %v36 = vld [vmem:[%s0 + $0x54] sm:$0xf]
  %v37 = vld [vmem:[%s0 + $0x58] sm:$0xf]
  %v38 = vld [vmem:[%s0 + $0x5c] sm:$0xf]
  %v39 = vld [vmem:[%s0 + $0x60] sm:$0xf]
  %v40 = vld [vmem:[%s0 + $0x64] sm:$0xf]
  %v41 = vld [vmem:[%s0 + $0x68] sm:$0xf]
  %v42 = vld [vmem:[%s0 + $0x6c] sm:$0xf]
  %v43 = vld [vmem:[%s0 + $0x70] sm:$0xf]
  %v44 = vld [vmem:[%s0 + $0x74] sm:$0xf]
  %v45 = vld [vmem:[%s0 + $0x78] sm:$0xf]
  %v46 = vld [vmem:[%s0 + $0x7c] sm:$0xf]
  %v47 = vld [vmem:[%s0 + $0x80] sm:$0xf]
  %v48 = vld [vmem:[%s0 + $0x84] sm:$0xf]
  %v49 = vld [vmem:[%s0 + $0x88] sm:$0xf]
  %v50 = vld [vmem:[%s0 + $0x8c] sm:$0xf]
  %v51 = vld [vmem:[%s0 + $0x90] sm:$0xf]
  %v52 = vld [vmem:[%s0 + $0x94] sm:$0xf]
  %v53 = vld [vmem:[%s0 + $0x98] sm:$0xf]
  %v54 = vld [vmem:[%s0 + $0x9c] sm:$0xf]
  %v55 = vld [vmem:[%s0 + $0xa0] sm:$0xf]
  %v56 = vld [vmem:[%s0 + $0xa4] sm:$0xf]
  %v57 = vld [vmem:[%s0 + $0xa8] sm:$0xf]
  %v58 = vld [vmem:[%s0 + $0xac] sm:$0xf]
  %v59 = vld [vmem:[%s0 + $0xb0] sm:$0xf]
  %v60 = vld [vmem:[%s0 + $0xb4] sm:$0xf]
  %v61 = vld [vmem:[%s0 + $0xb8] sm:$0xf]
  %v62 = vld [vmem:[%s0 + $0xbc] sm:$0xf]
  %v63 = vld [vmem:[%s0 + $0xc0] sm:$0xf]
  %v64 = vld [vmem:[%s0 + $0xc4] sm:$0xf]
  %v65 = vld [vmem:[%s0 + $0xc8] sm:$0xf]
  %v66 = vld [vmem:[%s0 + $0xcc] sm:$0xf]
  %v67 = vld [vmem:[%s0 + $0xd0] sm:$0xf]
  %v68 = vld [vmem:[%s0 + $0xd4] sm:$0xf]
  %v69 = vld [vmem:[%s0 + $0xd8] sm:$0xf]
  %v70 = vld [vmem:[%s0 + $0xdc] sm:$0xf]
  %v71 = vld [vmem:[%s0 + $0xe0] sm:$0xf]
  %v72 = vld [vmem:[%s0 + $0xe4] sm:$0xf]
  %v73 = vld [vmem:[%s0 + $0xe8] sm:$0xf]
  %v74 = vld [vmem:[%s0 + $0xec] sm:$0xf]
  %v75 = vld [vmem:[%s0 + $0xf0] sm:$0xf]
  %v76 = vld [vmem:[%s0 + $0xf4] sm:$0xf]
  %v77 = vld [vmem:[%s0 + $0xf8] sm:$0xf]
  %v78 = vld [vmem:[%s0 + $0xfc] sm:$0xf]
  %v79 = vld [vmem:[%s1] sm:$0xf]
  %v80 = vld [vmem:[%s1 + $0x4] sm:$0xf]
  %v81 = vld [vmem:[%s1 + $0x8] sm:$0xf]
  %v82 = vld [vmem:[%s1 + $0xc] sm:$0xf]
  %v83 = vld [vmem:[%s1 + $0x10] sm:$0xf]
  %v84 = vld [vmem:[%s1 + $0x14] sm:$0xf]
  %v85 = vld [vmem:[%s1 + $0x18] sm:$0xf]
  %v86 = vld [vmem:[%s1 + $0x1c] sm:$0xf]
  %v87 = vld [vmem:[%s1 + $0x20] sm:$0xf]
  %v88 = vld [vmem:[%s1 + $0x24] sm:$0xf]
  %v89 = vld [vmem:[%s1 + $0x28] sm:$0xf]
  %v90 = vld [vmem:[%s1 + $0x2c] sm:$0xf]
  %v91 = vld [vmem:[%s1 + $0x30] sm:$0xf]
  %v92 = vld [vmem:[%s1 + $0x34] sm:$0xf]
  %v93 = vld [vmem:[%s1 + $0x38] sm:$0xf]
  %v94 = vld [vmem:[%s1 + $0x3c] sm:$0xf]
  %v95 = vld [vmem:[%s2] sm:$0x1]
  %v97 = vlaneseq
  %v98 = vshrl.u32 %v97, 7
  %v99 = vsub.s32 0, %v98
  %v100 = vrot.slane %v95, %v99
  %v166 = vunpack.c.l.b16 %v15
  %v167 = vunpack.c.l.b16 %v16
  %v168 = vunpack.c.l.b16 %v17
  %v169 = vunpack.c.l.b16 %v18
  %v170 = vunpack.c.l.b16 %v19
  %v171 = vunpack.c.l.b16 %v20
  %v172 = vunpack.c.l.b16 %v21
  %v173 = vunpack.c.l.b16 %v22
  %v174 = vunpack.c.l.b16 %v23
  %v175 = vunpack.c.l.b16 %v24
  %v176 = vunpack.c.l.b16 %v25
  %v177 = vunpack.c.l.b16 %v26
  %v178 = vunpack.c.l.b16 %v27
  %v179 = vunpack.c.l.b16 %v28
  %v180 = vunpack.c.l.b16 %v29
  %v181 = vunpack.c.l.b16 %v30
  %v182 = vunpack.c.l.b16 %v31
  %v183 = vunpack.c.l.b16 %v32
  %v184 = vunpack.c.l.b16 %v33
  %v185 = vunpack.c.l.b16 %v34
  %v186 = vunpack.c.l.b16 %v35
  %v187 = vunpack.c.l.b16 %v36
  %v188 = vunpack.c.l.b16 %v37
  %v189 = vunpack.c.l.b16 %v38
  %v190 = vunpack.c.l.b16 %v39
  %v191 = vunpack.c.l.b16 %v40
  %v192 = vunpack.c.l.b16 %v41
  %v193 = vunpack.c.l.b16 %v42
  %v194 = vunpack.c.l.b16 %v43
  %v195 = vunpack.c.l.b16 %v44
  %v196 = vunpack.c.l.b16 %v45
  %v197 = vunpack.c.l.b16 %v46
  %v198 = vunpack.c.l.b16 %v47
  %v199 = vunpack.c.l.b16 %v48
  %v200 = vunpack.c.l.b16 %v49
  %v201 = vunpack.c.l.b16 %v50
  %v202 = vunpack.c.l.b16 %v51
  %v203 = vunpack.c.l.b16 %v52
  %v204 = vunpack.c.l.b16 %v53
  %v205 = vunpack.c.l.b16 %v54
  %v206 = vunpack.c.l.b16 %v55
  %v207 = vunpack.c.l.b16 %v56
  %v208 = vunpack.c.l.b16 %v57
  %v209 = vunpack.c.l.b16 %v58
  %v210 = vunpack.c.l.b16 %v59
  %v211 = vunpack.c.l.b16 %v60
  %v212 = vunpack.c.l.b16 %v61
  %v213 = vunpack.c.l.b16 %v62
  %v214 = vunpack.c.l.b16 %v63
  %v215 = vunpack.c.l.b16 %v64
  %v216 = vunpack.c.l.b16 %v65
  %v217 = vunpack.c.l.b16 %v66
  %v218 = vunpack.c.l.b16 %v67
  %v219 = vunpack.c.l.b16 %v68
  %v220 = vunpack.c.l.b16 %v69
  %v221 = vunpack.c.l.b16 %v70
  %v222 = vunpack.c.l.b16 %v71
  %v223 = vunpack.c.l.b16 %v72
  %v224 = vunpack.c.l.b16 %v73
  %v225 = vunpack.c.l.b16 %v74
  %v226 = vunpack.c.l.b16 %v75
  %v227 = vunpack.c.l.b16 %v76
  %v228 = vunpack.c.l.b16 %v77
  %v229 = vunpack.c.l.b16 %v78
  %v230 = vpack.c.b16 %v167, %v166
  %v231 = vpack.c.b16 %v169, %v168
  %v232 = vpack.c.b16 %v171, %v170
  %v233 = vpack.c.b16 %v173, %v172
  %v234 = vpack.c.b16 %v175, %v174
  %v235 = vpack.c.b16 %v177, %v176
  %v236 = vpack.c.b16 %v179, %v178
  %v237 = vpack.c.b16 %v181, %v180
  %v238 = vpack.c.b16 %v183, %v182
  %v239 = vpack.c.b16 %v185, %v184
  %v240 = vpack.c.b16 %v187, %v186
  %v241 = vpack.c.b16 %v189, %v188
  %v242 = vpack.c.b16 %v191, %v190
  %v243 = vpack.c.b16 %v193, %v192
  %v244 = vpack.c.b16 %v195, %v194
  %v245 = vpack.c.b16 %v197, %v196
  %v246 = vpack.c.b16 %v199, %v198
  %v247 = vpack.c.b16 %v201, %v200
  %v248 = vpack.c.b16 %v203, %v202
  %v249 = vpack.c.b16 %v205, %v204
  %v250 = vpack.c.b16 %v207, %v206
  %v251 = vpack.c.b16 %v209, %v208
  %v252 = vpack.c.b16 %v211, %v210
  %v253 = vpack.c.b16 %v213, %v212
  %v254 = vpack.c.b16 %v215, %v214
  %v255 = vpack.c.b16 %v217, %v216
  %v256 = vpack.c.b16 %v219, %v218
  %v257 = vpack.c.b16 %v221, %v220
  %v258 = vpack.c.b16 %v223, %v222
  %v259 = vpack.c.b16 %v225, %v224
  %v260 = vpack.c.b16 %v227, %v226
  %v261 = vpack.c.b16 %v229, %v228
  %v310 = vunpack.c.l.b16 %v79
  %v311 = vunpack.c.l.b16 %v80
  %v312 = vunpack.c.l.b16 %v81
  %v313 = vunpack.c.l.b16 %v82
  %v314 = vunpack.c.l.b16 %v83
  %v315 = vunpack.c.l.b16 %v84
  %v316 = vunpack.c.l.b16 %v85
  %v317 = vunpack.c.l.b16 %v86
  %v318 = vunpack.c.l.b16 %v87
  %v319 = vunpack.c.l.b16 %v88
  %v320 = vunpack.c.l.b16 %v89
  %v321 = vunpack.c.l.b16 %v90
  %v322 = vunpack.c.l.b16 %v91
  %v323 = vunpack.c.l.b16 %v92
  %v324 = vunpack.c.l.b16 %v93
  %v325 = vunpack.c.l.b16 %v94
  %v326 = vpack.c.b16 %v311, %v310
  %v327 = vpack.c.b16 %v313, %v312
  %v328 = vpack.c.b16 %v315, %v314
  %v329 = vpack.c.b16 %v317, %v316
  %v330 = vpack.c.b16 %v319, %v318
  %v331 = vpack.c.b16 %v321, %v320
  %v332 = vpack.c.b16 %v323, %v322
  %v333 = vpack.c.b16 %v325, %v324
  %342 = vmatprep.subr.bf16.mxu0 0
  %343 = vmatpush1.bf16.msra.mxu0 %v326
  %344 = vmatprep.subr.bf16.mxu0 0
  %345 = vmatpush1.bf16.msra.mxu0 %v327
  %346 = vmatprep.subr.bf16.mxu0 0
  %347 = vmatpush1.bf16.msra.mxu0 %v328
  %348 = vmatprep.subr.bf16.mxu0 0
  %349 = vmatpush1.bf16.msra.mxu0 %v329
  %350 = vmatprep.subr.bf16.mxu0 0
  %351 = vmatpush1.bf16.msra.mxu0 %v330
  %352 = vmatprep.subr.bf16.mxu0 0
  %353 = vmatpush1.bf16.msra.mxu0 %v331
  %354 = vmatprep.subr.bf16.mxu0 0
  %355 = vmatpush1.bf16.msra.mxu0 %v332
  %356 = vmatprep.subr.bf16.mxu0 0
  %357 = vmatpush1.bf16.msra.mxu0 %v333
  %358 = vmatprep.subr.bf16.mxu0 0
  %359 = vmatpush1.bf16.msra.mxu0 0
  %360 = vmatprep.subr.bf16.mxu0 0
  %361 = vmatpush1.bf16.msra.mxu0 0
  %362 = vmatprep.subr.bf16.mxu0 0
  %363 = vmatpush1.bf16.msra.mxu0 0
  %364 = vmatprep.subr.bf16.mxu0 0
  %365 = vmatpush1.bf16.msra.mxu0 0
  %366 = vmatprep.subr.bf16.mxu0 0
  %367 = vmatpush1.bf16.msra.mxu0 0
  %368 = vmatprep.subr.bf16.mxu0 0
  %369 = vmatpush1.bf16.msra.mxu0 0
  %370 = vmatprep.subr.bf16.mxu0 0
  %371 = vmatpush1.bf16.msra.mxu0 0
  %372 = vmatprep.subr.bf16.mxu0 0
  %373 = vmatpush1.bf16.msra.mxu0 0
  %374 = vmatprep.mubr.bf16.mxu0 0
  %375 = vmatmul.mubr.bf16.gmra.mrb[0].mxu0 %v230
  %v376 = vpop.f32.mrb[0].mxu0
  %v377 = vadd.f32 %v100, %v376
  %v378 = vpop.f32.mrb[0].mxu0
  %v379 = vpop.f32.mrb[0].mxu0
  %v380 = vadd.f32 %v100, %v379
  %v381 = vpop.f32.mrb[0].mxu0
  %382 = vmatprep.mubr.bf16.mxu0 0
  %383 = vmatmul.mubr.bf16.gmra.mrb[0].mxu0 %v231
  %v384 = vpop.f32.mrb[0].mxu0
  %v385 = vadd.f32 %v100, %v384
  %v386 = vpop.f32.mrb[0].mxu0
  %v387 = vpop.f32.mrb[0].mxu0
  %v388 = vadd.f32 %v100, %v387
  %v389 = vpop.f32.mrb[0].mxu0
  %390 = vmatprep.mubr.bf16.mxu0 0
  %391 = vmatmul.mubr.bf16.gmra.mrb[0].mxu0 %v232
  %v392 = vpop.f32.mrb[0].mxu0
  %v393 = vadd.f32 %v100, %v392
  %v394 = vpop.f32.mrb[0].mxu0
  %v395 = vpop.f32.mrb[0].mxu0
  %v396 = vadd.f32 %v100, %v395
  %v397 = vpop.f32.mrb[0].mxu0
  %398 = vmatprep.mubr.bf16.mxu0 0
  %399 = vmatmul.mubr.bf16.gmra.mrb[0].mxu0 %v233
  %v400 = vpop.f32.mrb[0].mxu0
  %v401 = vadd.f32 %v100, %v400
  %v402 = vpop.f32.mrb[0].mxu0
  %v403 = vpop.f32.mrb[0].mxu0
  %v404 = vadd.f32 %v100, %v403
  %v405 = vpop.f32.mrb[0].mxu0
  %406 = vmatprep.mubr.bf16.mxu0 0
  %407 = vmatmul.mubr.bf16.gmra.mrb[0].mxu0 %v234
  %v408 = vpop.f32.mrb[0].mxu0
  %v409 = vadd.f32 %v100, %v408
  %v410 = vpop.f32.mrb[0].mxu0
  %v411 = vpop.f32.mrb[0].mxu0
  %v412 = vadd.f32 %v100, %v411
  %v413 = vpop.f32.mrb[0].mxu0
  %414 = vmatprep.mubr.bf16.mxu0 0
  %415 = vmatmul.mubr.bf16.gmra.mrb[0].mxu0 %v235
  %v416 = vpop.f32.mrb[0].mxu0
  %v417 = vadd.f32 %v100, %v416
  %v418 = vpop.f32.mrb[0].mxu0
  %v419 = vpop.f32.mrb[0].mxu0
  %v420 = vadd.f32 %v100, %v419
  %v421 = vpop.f32.mrb[0].mxu0
  %422 = vmatprep.mubr.bf16.mxu0 0
  %423 = vmatmul.mubr.bf16.gmra.mrb[0].mxu0 %v236
  %v424 = vpop.f32.mrb[0].mxu0
  %v425 = vadd.f32 %v100, %v424
  %v426 = vpop.f32.mrb[0].mxu0
  %v427 = vpop.f32.mrb[0].mxu0
  %v428 = vadd.f32 %v100, %v427
  %v429 = vpop.f32.mrb[0].mxu0
  %430 = vmatprep.mubr.bf16.mxu0 0
  %431 = vmatmul.mubr.bf16.gmra.mrb[0].mxu0 %v237
  %v432 = vpop.f32.mrb[0].mxu0
  %v433 = vadd.f32 %v100, %v432
  %v434 = vpop.f32.mrb[0].mxu0
  %v435 = vpop.f32.mrb[0].mxu0
  %v436 = vadd.f32 %v100, %v435
  %v437 = vpop.f32.mrb[0].mxu0
  %438 = vmatprep.mubr.bf16.mxu0 0
  %439 = vmatmul.mubr.bf16.gmra.mrb[0].mxu0 %v238
  %v440 = vpop.f32.mrb[0].mxu0
  %v441 = vadd.f32 %v100, %v440
  %v442 = vpop.f32.mrb[0].mxu0
  %v443 = vpop.f32.mrb[0].mxu0
  %v444 = vadd.f32 %v100, %v443
  %v445 = vpop.f32.mrb[0].mxu0
  %446 = vmatprep.mubr.bf16.mxu0 0
  %447 = vmatmul.mubr.bf16.gmra.mrb[0].mxu0 %v239
  %v448 = vpop.f32.mrb[0].mxu0
  %v449 = vadd.f32 %v100, %v448
  %v450 = vpop.f32.mrb[0].mxu0
  %v451 = vpop.f32.mrb[0].mxu0
  %v452 = vadd.f32 %v100, %v451
  %v453 = vpop.f32.mrb[0].mxu0
  %454 = vmatprep.mubr.bf16.mxu0 0
  %455 = vmatmul.mubr.bf16.gmra.mrb[0].mxu0 %v240
  %v456 = vpop.f32.mrb[0].mxu0
  %v457 = vadd.f32 %v100, %v456
  %v458 = vpop.f32.mrb[0].mxu0
  %v459 = vpop.f32.mrb[0].mxu0
  %v460 = vadd.f32 %v100, %v459
  %v461 = vpop.f32.mrb[0].mxu0
  %462 = vmatprep.mubr.bf16.mxu0 0
  %463 = vmatmul.mubr.bf16.gmra.mrb[0].mxu0 %v241
  %v464 = vpop.f32.mrb[0].mxu0
  %v465 = vadd.f32 %v100, %v464
  %v466 = vpop.f32.mrb[0].mxu0
  %v467 = vpop.f32.mrb[0].mxu0
  %v468 = vadd.f32 %v100, %v467
  %v469 = vpop.f32.mrb[0].mxu0
  %470 = vmatprep.mubr.bf16.mxu0 0
  %471 = vmatmul.mubr.bf16.gmra.mrb[0].mxu0 %v242
  %v472 = vpop.f32.mrb[0].mxu0
  %v473 = vadd.f32 %v100, %v472
  %v474 = vpop.f32.mrb[0].mxu0
  %v475 = vpop.f32.mrb[0].mxu0
  %v476 = vadd.f32 %v100, %v475
  %v477 = vpop.f32.mrb[0].mxu0
  %478 = vmatprep.mubr.bf16.mxu0 0
  %479 = vmatmul.mubr.bf16.gmra.mrb[0].mxu0 %v243
  %v480 = vpop.f32.mrb[0].mxu0
  %v481 = vadd.f32 %v100, %v480
  %v482 = vpop.f32.mrb[0].mxu0
  %v483 = vpop.f32.mrb[0].mxu0
  %v484 = vadd.f32 %v100, %v483
  %v485 = vpop.f32.mrb[0].mxu0
  %486 = vmatprep.mubr.bf16.mxu0 0
  %487 = vmatmul.mubr.bf16.gmra.mrb[0].mxu0 %v244
  %v488 = vpop.f32.mrb[0].mxu0
  %v489 = vadd.f32 %v100, %v488
  %v490 = vpop.f32.mrb[0].mxu0
  %v491 = vpop.f32.mrb[0].mxu0
  %v492 = vadd.f32 %v100, %v491
  %v493 = vpop.f32.mrb[0].mxu0
  %494 = vmatprep.mubr.bf16.mxu0 0
  %495 = vmatmul.mubr.bf16.gmra.mrb[0].mxu0 %v245
  %v496 = vpop.f32.mrb[0].mxu0
  %v497 = vadd.f32 %v100, %v496
  %v498 = vpop.f32.mrb[0].mxu0
  %v499 = vpop.f32.mrb[0].mxu0
  %v500 = vadd.f32 %v100, %v499
  %v501 = vpop.f32.mrb[0].mxu0
  %502 = vmatprep.mubr.bf16.mxu0 0
  %503 = vmatmul.mubr.bf16.gmra.mrb[0].mxu0 %v246
  %v504 = vpop.f32.mrb[0].mxu0
  %v505 = vadd.f32 %v100, %v504
  %v506 = vpop.f32.mrb[0].mxu0
  %v507 = vpop.f32.mrb[0].mxu0
  %v508 = vadd.f32 %v100, %v507
  %v509 = vpop.f32.mrb[0].mxu0
  %510 = vmatprep.mubr.bf16.mxu0 0
  %511 = vmatmul.mubr.bf16.gmra.mrb[0].mxu0 %v247
  %v512 = vpop.f32.mrb[0].mxu0
  %v513 = vadd.f32 %v100, %v512
  %v514 = vpop.f32.mrb[0].mxu0
  %v515 = vpop.f32.mrb[0].mxu0
  %v516 = vadd.f32 %v100, %v515
  %v517 = vpop.f32.mrb[0].mxu0
  %518 = vmatprep.mubr.bf16.mxu0 0
  %519 = vmatmul.mubr.bf16.gmra.mrb[0].mxu0 %v248
  %v520 = vpop.f32.mrb[0].mxu0
  %v521 = vadd.f32 %v100, %v520
  %v522 = vpop.f32.mrb[0].mxu0
  %v523 = vpop.f32.mrb[0].mxu0
  %v524 = vadd.f32 %v100, %v523
  %v525 = vpop.f32.mrb[0].mxu0
  %526 = vmatprep.mubr.bf16.mxu0 0
  %527 = vmatmul.mubr.bf16.gmra.mrb[0].mxu0 %v249
  %v528 = vpop.f32.mrb[0].mxu0
  %v529 = vadd.f32 %v100, %v528
  %v530 = vpop.f32.mrb[0].mxu0
  %v531 = vpop.f32.mrb[0].mxu0
  %v532 = vadd.f32 %v100, %v531
  %v533 = vpop.f32.mrb[0].mxu0
  %534 = vmatprep.mubr.bf16.mxu0 0
  %535 = vmatmul.mubr.bf16.gmra.mrb[0].mxu0 %v250
  %v536 = vpop.f32.mrb[0].mxu0
  %v537 = vadd.f32 %v100, %v536
  %v538 = vpop.f32.mrb[0].mxu0
  %v539 = vpop.f32.mrb[0].mxu0
  %v540 = vadd.f32 %v100, %v539
  %v541 = vpop.f32.mrb[0].mxu0
  %542 = vmatprep.mubr.bf16.mxu0 0
  %543 = vmatmul.mubr.bf16.gmra.mrb[0].mxu0 %v251
  %v544 = vpop.f32.mrb[0].mxu0
  %v545 = vadd.f32 %v100, %v544
  %v546 = vpop.f32.mrb[0].mxu0
  %v547 = vpop.f32.mrb[0].mxu0
  %v548 = vadd.f32 %v100, %v547
  %v549 = vpop.f32.mrb[0].mxu0
  %550 = vmatprep.mubr.bf16.mxu0 0
  %551 = vmatmul.mubr.bf16.gmra.mrb[0].mxu0 %v252
  %v552 = vpop.f32.mrb[0].mxu0
  %v553 = vadd.f32 %v100, %v552
  %v554 = vpop.f32.mrb[0].mxu0
  %v555 = vpop.f32.mrb[0].mxu0
  %v556 = vadd.f32 %v100, %v555
  %v557 = vpop.f32.mrb[0].mxu0
  %558 = vmatprep.mubr.bf16.mxu0 0
  %559 = vmatmul.mubr.bf16.gmra.mrb[0].mxu0 %v253
  %v560 = vpop.f32.mrb[0].mxu0
  %v561 = vadd.f32 %v100, %v560
  %v562 = vpop.f32.mrb[0].mxu0
  %v563 = vpop.f32.mrb[0].mxu0
  %v564 = vadd.f32 %v100, %v563
  %v565 = vpop.f32.mrb[0].mxu0
  %566 = vmatprep.mubr.bf16.mxu0 0
  %567 = vmatmul.mubr.bf16.gmra.mrb[0].mxu0 %v254
  %v568 = vpop.f32.mrb[0].mxu0
  %v569 = vadd.f32 %v100, %v568
  %v570 = vpop.f32.mrb[0].mxu0
  %v571 = vpop.f32.mrb[0].mxu0
  %v572 = vadd.f32 %v100, %v571
  %v573 = vpop.f32.mrb[0].mxu0
  %574 = vmatprep.mubr.bf16.mxu0 0
  %575 = vmatmul.mubr.bf16.gmra.mrb[0].mxu0 %v255
  %v576 = vpop.f32.mrb[0].mxu0
  %v577 = vadd.f32 %v100, %v576
  %v578 = vpop.f32.mrb[0].mxu0
  %v579 = vpop.f32.mrb[0].mxu0
  %v580 = vadd.f32 %v100, %v579
  %v581 = vpop.f32.mrb[0].mxu0
  %582 = vmatprep.mubr.bf16.mxu0 0
  %583 = vmatmul.mubr.bf16.gmra.mrb[0].mxu0 %v256
  %v584 = vpop.f32.mrb[0].mxu0
  %v585 = vadd.f32 %v100, %v584
  %v586 = vpop.f32.mrb[0].mxu0
  %v587 = vpop.f32.mrb[0].mxu0
  %v588 = vadd.f32 %v100, %v587
  %v589 = vpop.f32.mrb[0].mxu0
  %590 = vmatprep.mubr.bf16.mxu0 0
  %591 = vmatmul.mubr.bf16.gmra.mrb[0].mxu0 %v257
  %v592 = vpop.f32.mrb[0].mxu0
  %v593 = vadd.f32 %v100, %v592
  %v594 = vpop.f32.mrb[0].mxu0
  %v595 = vpop.f32.mrb[0].mxu0
  %v596 = vadd.f32 %v100, %v595
  %v597 = vpop.f32.mrb[0].mxu0
  %598 = vmatprep.mubr.bf16.mxu0 0
  %599 = vmatmul.mubr.bf16.gmra.mrb[0].mxu0 %v258
  %v600 = vpop.f32.mrb[0].mxu0
  %v601 = vadd.f32 %v100, %v600
  %v602 = vpop.f32.mrb[0].mxu0
  %v603 = vpop.f32.mrb[0].mxu0
  %v604 = vadd.f32 %v100, %v603
  %v605 = vpop.f32.mrb[0].mxu0
  %606 = vmatprep.mubr.bf16.mxu0 0
  %607 = vmatmul.mubr.bf16.gmra.mrb[0].mxu0 %v259
  %v608 = vpop.f32.mrb[0].mxu0
  %v609 = vadd.f32 %v100, %v608
  %v610 = vpop.f32.mrb[0].mxu0
  %v611 = vpop.f32.mrb[0].mxu0
  %v612 = vadd.f32 %v100, %v611
  %v613 = vpop.f32.mrb[0].mxu0
  %614 = vmatprep.mubr.bf16.mxu0 0
  %615 = vmatmul.mubr.bf16.gmra.mrb[0].mxu0 %v260
  %v616 = vpop.f32.mrb[0].mxu0
  %v617 = vadd.f32 %v100, %v616
  %v618 = vpop.f32.mrb[0].mxu0
  %v619 = vpop.f32.mrb[0].mxu0
  %v620 = vadd.f32 %v100, %v619
  %v621 = vpop.f32.mrb[0].mxu0
  %622 = vmatprep.mubr.bf16.mxu0 0
  %623 = vmatmul.mubr.bf16.gmra.mrb[0].mxu0 %v261
  %v624 = vpop.f32.mrb[0].mxu0
  %v625 = vadd.f32 %v100, %v624
  %v626 = vpop.f32.mrb[0].mxu0
  %v627 = vpop.f32.mrb[0].mxu0
  %v628 = vadd.f32 %v100, %v627
  %v629 = vpop.f32.mrb[0].mxu0
  %630 = vdwg.mxu0
  %v631 = vmax.f32 %v377, 0.0
  %v632 = vmax.f32 %v380, 0.0
  %v633 = vmax.f32 %v385, 0.0
  %v634 = vmax.f32 %v388, 0.0
  %v635 = vmax.f32 %v393, 0.0
  %v636 = vmax.f32 %v396, 0.0
  %v637 = vmax.f32 %v401, 0.0
  %v638 = vmax.f32 %v404, 0.0
  %v639 = vmax.f32 %v409, 0.0
  %v640 = vmax.f32 %v412, 0.0
  %v641 = vmax.f32 %v417, 0.0
  %v642 = vmax.f32 %v420, 0.0
  %v643 = vmax.f32 %v425, 0.0
  %v644 = vmax.f32 %v428, 0.0
  %v645 = vmax.f32 %v433, 0.0
  %v646 = vmax.f32 %v436, 0.0
  %v647 = vmax.f32 %v441, 0.0
  %v648 = vmax.f32 %v444, 0.0
  %v649 = vmax.f32 %v449, 0.0
  %v650 = vmax.f32 %v452, 0.0
  %v651 = vmax.f32 %v457, 0.0
  %v652 = vmax.f32 %v460, 0.0
  %v653 = vmax.f32 %v465, 0.0
  %v654 = vmax.f32 %v468, 0.0
  %v655 = vmax.f32 %v473, 0.0
  %v656 = vmax.f32 %v476, 0.0
  %v657 = vmax.f32 %v481, 0.0
  %v658 = vmax.f32 %v484, 0.0
  %v659 = vmax.f32 %v489, 0.0
  %v660 = vmax.f32 %v492, 0.0
  %v661 = vmax.f32 %v497, 0.0
  %v662 = vmax.f32 %v500, 0.0
  %v663 = vmax.f32 %v505, 0.0
  %v664 = vmax.f32 %v508, 0.0
  %v665 = vmax.f32 %v513, 0.0
  %v666 = vmax.f32 %v516, 0.0
  %v667 = vmax.f32 %v521, 0.0
  %v668 = vmax.f32 %v524, 0.0
  %v669 = vmax.f32 %v529, 0.0
  %v670 = vmax.f32 %v532, 0.0
  %v671 = vmax.f32 %v537, 0.0
  %v672 = vmax.f32 %v540, 0.0
  %v673 = vmax.f32 %v545, 0.0
  %v674 = vmax.f32 %v548, 0.0
  %v675 = vmax.f32 %v553, 0.0
  %v676 = vmax.f32 %v556, 0.0
  %v677 = vmax.f32 %v561, 0.0
  %v678 = vmax.f32 %v564, 0.0
  %v679 = vmax.f32 %v569, 0.0
  %v680 = vmax.f32 %v572, 0.0
  %v681 = vmax.f32 %v577, 0.0
  %v682 = vmax.f32 %v580, 0.0
  %v683 = vmax.f32 %v585, 0.0
  %v684 = vmax.f32 %v588, 0.0
  %v685 = vmax.f32 %v593, 0.0
  %v686 = vmax.f32 %v596, 0.0
  %v687 = vmax.f32 %v601, 0.0
  %v688 = vmax.f32 %v604, 0.0
  %v689 = vmax.f32 %v609, 0.0
  %v690 = vmax.f32 %v612, 0.0
  %v691 = vmax.f32 %v617, 0.0
  %v692 = vmax.f32 %v620, 0.0
  %v693 = vmax.f32 %v625, 0.0
  %v694 = vmax.f32 %v628, 0.0
  %v695 = vpack.c.bf16 %v632, %v631
  %v696 = vpack.c.bf16 %v634, %v633
  %v697 = vpack.c.bf16 %v636, %v635
  %v698 = vpack.c.bf16 %v638, %v637
  %v699 = vpack.c.bf16 %v640, %v639
  %v700 = vpack.c.bf16 %v642, %v641
  %v701 = vpack.c.bf16 %v644, %v643
  %v702 = vpack.c.bf16 %v646, %v645
  %v703 = vpack.c.bf16 %v648, %v647
  %v704 = vpack.c.bf16 %v650, %v649
  %v705 = vpack.c.bf16 %v652, %v651
  %v706 = vpack.c.bf16 %v654, %v653
  %v707 = vpack.c.bf16 %v656, %v655
  %v708 = vpack.c.bf16 %v658, %v657
  %v709 = vpack.c.bf16 %v660, %v659
  %v710 = vpack.c.bf16 %v662, %v661
  %v711 = vpack.c.bf16 %v664, %v663
  %v712 = vpack.c.bf16 %v666, %v665
  %v713 = vpack.c.bf16 %v668, %v667
  %v714 = vpack.c.bf16 %v670, %v669
  %v715 = vpack.c.bf16 %v672, %v671
  %v716 = vpack.c.bf16 %v674, %v673
  %v717 = vpack.c.bf16 %v676, %v675
  %v718 = vpack.c.bf16 %v678, %v677
  %v719 = vpack.c.bf16 %v680, %v679
  %v720 = vpack.c.bf16 %v682, %v681
  %v721 = vpack.c.bf16 %v684, %v683
  %v722 = vpack.c.bf16 %v686, %v685
  %v723 = vpack.c.bf16 %v688, %v687
  %v724 = vpack.c.bf16 %v690, %v689
  %v725 = vpack.c.bf16 %v692, %v691
  %v726 = vpack.c.bf16 %v694, %v693
  %v759 = vunpack.c.l.b16 %v695
  %v760 = vunpack.c.h.b16 %v695
  %v761 = vunpack.c.l.b16 %v696
  %v762 = vunpack.c.h.b16 %v696
  %v763 = vunpack.c.l.b16 %v697
  %v764 = vunpack.c.h.b16 %v697
  %v765 = vunpack.c.l.b16 %v698
  %v766 = vunpack.c.h.b16 %v698
  %v767 = vunpack.c.l.b16 %v699
  %v768 = vunpack.c.h.b16 %v699
  %v769 = vunpack.c.l.b16 %v700
  %v770 = vunpack.c.h.b16 %v700
  %v771 = vunpack.c.l.b16 %v701
  %v772 = vunpack.c.h.b16 %v701
  %v773 = vunpack.c.l.b16 %v702
  %v774 = vunpack.c.h.b16 %v702
  %v775 = vunpack.c.l.b16 %v703
  %v776 = vunpack.c.h.b16 %v703
  %v777 = vunpack.c.l.b16 %v704
  %v778 = vunpack.c.h.b16 %v704
  %v779 = vunpack.c.l.b16 %v705
  %v780 = vunpack.c.h.b16 %v705
  %v781 = vunpack.c.l.b16 %v706
  %v782 = vunpack.c.h.b16 %v706
  %v783 = vunpack.c.l.b16 %v707
  %v784 = vunpack.c.h.b16 %v707
  %v785 = vunpack.c.l.b16 %v708
  %v786 = vunpack.c.h.b16 %v708
  %v787 = vunpack.c.l.b16 %v709
  %v788 = vunpack.c.h.b16 %v709
  %v789 = vunpack.c.l.b16 %v710
  %v790 = vunpack.c.h.b16 %v710
  %v791 = vunpack.c.l.b16 %v711
  %v792 = vunpack.c.h.b16 %v711
  %v793 = vunpack.c.l.b16 %v712
  %v794 = vunpack.c.h.b16 %v712
  %v795 = vunpack.c.l.b16 %v713
  %v796 = vunpack.c.h.b16 %v713
  %v797 = vunpack.c.l.b16 %v714
  %v798 = vunpack.c.h.b16 %v714
  %v799 = vunpack.c.l.b16 %v715
  %v800 = vunpack.c.h.b16 %v715
  %v801 = vunpack.c.l.b16 %v716
  %v802 = vunpack.c.h.b16 %v716
  %v803 = vunpack.c.l.b16 %v717
  %v804 = vunpack.c.h.b16 %v717
  %v805 = vunpack.c.l.b16 %v718
  %v806 = vunpack.c.h.b16 %v718
  %v807 = vunpack.c.l.b16 %v719
  %v808 = vunpack.c.h.b16 %v719
  %v809 = vunpack.c.l.b16 %v720
  %v810 = vunpack.c.h.b16 %v720
  %v811 = vunpack.c.l.b16 %v721
  %v812 = vunpack.c.h.b16 %v721
  %v813 = vunpack.c.l.b16 %v722
  %v814 = vunpack.c.h.b16 %v722
  %v815 = vunpack.c.l.b16 %v723
  %v816 = vunpack.c.h.b16 %v723
  %v817 = vunpack.c.l.b16 %v724
  %v818 = vunpack.c.h.b16 %v724
  %v819 = vunpack.c.l.b16 %v725
  %v820 = vunpack.c.h.b16 %v725
  %v821 = vunpack.c.l.b16 %v726
  %v822 = vunpack.c.h.b16 %v726
  %v823 = vpack.c.b16 %v759, %v759
  %v824 = vpack.c.b16 %v760, %v760
  %v825 = vpack.c.b16 %v761, %v761
  %v826 = vpack.c.b16 %v762, %v762
  %v827 = vpack.c.b16 %v763, %v763
  %v828 = vpack.c.b16 %v764, %v764
  %v829 = vpack.c.b16 %v765, %v765
  %v830 = vpack.c.b16 %v766, %v766
  %v831 = vpack.c.b16 %v767, %v767
  %v832 = vpack.c.b16 %v768, %v768
  %v833 = vpack.c.b16 %v769, %v769
  %v834 = vpack.c.b16 %v770, %v770
  %v835 = vpack.c.b16 %v771, %v771
  %v836 = vpack.c.b16 %v772, %v772
  %v837 = vpack.c.b16 %v773, %v773
  %v838 = vpack.c.b16 %v774, %v774
  %v839 = vpack.c.b16 %v775, %v775
  %v840 = vpack.c.b16 %v776, %v776
  %v841 = vpack.c.b16 %v777, %v777
  %v842 = vpack.c.b16 %v778, %v778
  %v843 = vpack.c.b16 %v779, %v779
  %v844 = vpack.c.b16 %v780, %v780
  %v845 = vpack.c.b16 %v781, %v781
  %v846 = vpack.c.b16 %v782, %v782
  %v847 = vpack.c.b16 %v783, %v783
  %v848 = vpack.c.b16 %v784, %v784
  %v849 = vpack.c.b16 %v785, %v785
  %v850 = vpack.c.b16 %v786, %v786
  %v851 = vpack.c.b16 %v787, %v787
  %v852 = vpack.c.b16 %v788, %v788
  %v853 = vpack.c.b16 %v789, %v789
  %v854 = vpack.c.b16 %v790, %v790
  %v855 = vpack.c.b16 %v791, %v791
  %v856 = vpack.c.b16 %v792, %v792
  %v857 = vpack.c.b16 %v793, %v793
  %v858 = vpack.c.b16 %v794, %v794
  %v859 = vpack.c.b16 %v795, %v795
  %v860 = vpack.c.b16 %v796, %v796
  %v861 = vpack.c.b16 %v797, %v797
  %v862 = vpack.c.b16 %v798, %v798
  %v863 = vpack.c.b16 %v799, %v799
  %v864 = vpack.c.b16 %v800, %v800
  %v865 = vpack.c.b16 %v801, %v801
  %v866 = vpack.c.b16 %v802, %v802
  %v867 = vpack.c.b16 %v803, %v803
  %v868 = vpack.c.b16 %v804, %v804
  %v869 = vpack.c.b16 %v805, %v805
  %v870 = vpack.c.b16 %v806, %v806
  %v871 = vpack.c.b16 %v807, %v807
  %v872 = vpack.c.b16 %v808, %v808
  %v873 = vpack.c.b16 %v809, %v809
  %v874 = vpack.c.b16 %v810, %v810
  %v875 = vpack.c.b16 %v811, %v811
  %v876 = vpack.c.b16 %v812, %v812
  %v877 = vpack.c.b16 %v813, %v813
  %v878 = vpack.c.b16 %v814, %v814
  %v879 = vpack.c.b16 %v815, %v815
  %v880 = vpack.c.b16 %v816, %v816
  %v881 = vpack.c.b16 %v817, %v817
  %v882 = vpack.c.b16 %v818, %v818
  %v883 = vpack.c.b16 %v819, %v819
  %v884 = vpack.c.b16 %v820, %v820
  %v885 = vpack.c.b16 %v821, %v821
  %v886 = vpack.c.b16 %v822, %v822
  %951 = vst [vmem:[%s3] sm:$0xf] %v823
  %952 = vst [vmem:[%s3 + $0x4] sm:$0xf] %v824
  %953 = vst [vmem:[%s3 + $0x8] sm:$0xf] %v825
  %954 = vst [vmem:[%s3 + $0xc] sm:$0xf] %v826
  %955 = vst [vmem:[%s3 + $0x10] sm:$0xf] %v827
  %956 = vst [vmem:[%s3 + $0x14] sm:$0xf] %v828
  %957 = vst [vmem:[%s3 + $0x18] sm:$0xf] %v829
  %958 = vst [vmem:[%s3 + $0x1c] sm:$0xf] %v830
  %959 = vst [vmem:[%s3 + $0x20] sm:$0xf] %v831
  %960 = vst [vmem:[%s3 + $0x24] sm:$0xf] %v832
  %961 = vst [vmem:[%s3 + $0x28] sm:$0xf] %v833
  %962 = vst [vmem:[%s3 + $0x2c] sm:$0xf] %v834
  %963 = vst [vmem:[%s3 + $0x30] sm:$0xf] %v835
  %964 = vst [vmem:[%s3 + $0x34] sm:$0xf] %v836
  %965 = vst [vmem:[%s3 + $0x38] sm:$0xf] %v837
  %966 = vst [vmem:[%s3 + $0x3c] sm:$0xf] %v838
  %967 = vst [vmem:[%s3 + $0x40] sm:$0xf] %v839
  %968 = vst [vmem:[%s3 + $0x44] sm:$0xf] %v840
  %969 = vst [vmem:[%s3 + $0x48] sm:$0xf] %v841
  %970 = vst [vmem:[%s3 + $0x4c] sm:$0xf] %v842
  %971 = vst [vmem:[%s3 + $0x50] sm:$0xf] %v843
  %972 = vst [vmem:[%s3 + $0x54] sm:$0xf] %v844
  %973 = vst [vmem:[%s3 + $0x58] sm:$0xf] %v845
  %974 = vst [vmem:[%s3 + $0x5c] sm:$0xf] %v846
  %975 = vst [vmem:[%s3 + $0x60] sm:$0xf] %v847
  %976 = vst [vmem:[%s3 + $0x64] sm:$0xf] %v848
  %977 = vst [vmem:[%s3 + $0x68] sm:$0xf] %v849
  %978 = vst [vmem:[%s3 + $0x6c] sm:$0xf] %v850
  %979 = vst [vmem:[%s3 + $0x70] sm:$0xf] %v851
  %980 = vst [vmem:[%s3 + $0x74] sm:$0xf] %v852
  %981 = vst [vmem:[%s3 + $0x78] sm:$0xf] %v853
  %982 = vst [vmem:[%s3 + $0x7c] sm:$0xf] %v854
  %983 = vst [vmem:[%s3 + $0x80] sm:$0xf] %v855
  %984 = vst [vmem:[%s3 + $0x84] sm:$0xf] %v856
  %985 = vst [vmem:[%s3 + $0x88] sm:$0xf] %v857
  %986 = vst [vmem:[%s3 + $0x8c] sm:$0xf] %v858
  %987 = vst [vmem:[%s3 + $0x90] sm:$0xf] %v859
  %988 = vst [vmem:[%s3 + $0x94] sm:$0xf] %v860
  %989 = vst [vmem:[%s3 + $0x98] sm:$0xf] %v861
  %990 = vst [vmem:[%s3 + $0x9c] sm:$0xf] %v862
  %991 = vst [vmem:[%s3 + $0xa0] sm:$0xf] %v863
  %992 = vst [vmem:[%s3 + $0xa4] sm:$0xf] %v864
  %993 = vst [vmem:[%s3 + $0xa8] sm:$0xf] %v865
  %994 = vst [vmem:[%s3 + $0xac] sm:$0xf] %v866
  %995 = vst [vmem:[%s3 + $0xb0] sm:$0xf] %v867
  %996 = vst [vmem:[%s3 + $0xb4] sm:$0xf] %v868
  %997 = vst [vmem:[%s3 + $0xb8] sm:$0xf] %v869
  %998 = vst [vmem:[%s3 + $0xbc] sm:$0xf] %v870
  %999 = vst [vmem:[%s3 + $0xc0] sm:$0xf] %v871
  %1000 = vst [vmem:[%s3 + $0xc4] sm:$0xf] %v872
  %1001 = vst [vmem:[%s3 + $0xc8] sm:$0xf] %v873
  %1002 = vst [vmem:[%s3 + $0xcc] sm:$0xf] %v874
  %1003 = vst [vmem:[%s3 + $0xd0] sm:$0xf] %v875
  %1004 = vst [vmem:[%s3 + $0xd4] sm:$0xf] %v876
  %1005 = vst [vmem:[%s3 + $0xd8] sm:$0xf] %v877
  %1006 = vst [vmem:[%s3 + $0xdc] sm:$0xf] %v878
  %1007 = vst [vmem:[%s3 + $0xe0] sm:$0xf] %v879
  %1008 = vst [vmem:[%s3 + $0xe4] sm:$0xf] %v880
  %1009 = vst [vmem:[%s3 + $0xe8] sm:$0xf] %v881
  %1010 = vst [vmem:[%s3 + $0xec] sm:$0xf] %v882
  %1011 = vst [vmem:[%s3 + $0xf0] sm:$0xf] %v883
  %1012 = vst [vmem:[%s3 + $0xf4] sm:$0xf] %v884
  %1013 = vst [vmem:[%s3 + $0xf8] sm:$0xf] %v885
  %1014 = vst [vmem:[%s3 + $0xfc] sm:$0xf] %v886
  // Predicated region
  $region14: #{_lambda_.3} parent=0 // pred_check
    _
  $region15: #{_lambda_.3} parent=0 // pred_check_branch
    %1016 = sbr.rel (0) target = $region17
  $region16: #{_lambda_.3} parent=0 // pred_region
    _
  $region17: #{_lambda_.3} parent=0 // pred_fallthru
    _
  // Predicated region
  $region18: #{_lambda_.3} parent=0 // pred_check
    _
  $region19: #{_lambda_.3} parent=0 // pred_check_branch
    %1018 = sbr.rel (0) target = $region21
  $region20: #{_lambda_.3} parent=0 // pred_region
    _
  $region21: #{_lambda_.3} parent=0 // pred_fallthru
    _

// kernel: _lambda_.5
$region0: #{_lambda_.5}
  #allocation0 [shape = 'u32[]', space=smem, size = 0x4, offset = 0x4, fixed_abs, tag = 'smem constant byte address 0x4 - core index']
  #allocation1 [shape = 'u32[144,128]{1,0:T(1,128)}', space=vmem, size = 0x12000, scoped, tag = 'internal scratch']
  %s0 = inlined_call_operand.vmem [shape: bf16[512,128], index: 0, kind: input, shape index: {}]
  %s1 = inlined_call_operand.vmem [shape: bf16[512,128], index: 1, kind: input, shape index: {}]
  %s2 = inlined_call_operand.vmem [shape: bf16[128,128], index: 2, kind: input, shape index: {}]
  %s3 = inlined_call_operand.vmem [shape: f32[1,128], index: 3, kind: input, shape index: {}]
  %s4 = inlined_call_operand.vmem [shape: bf16[128,128], index: 4, kind: input, shape index: {}]
  %s5 = inlined_call_operand.vmem [shape: f32[1,128], index: 5, kind: input, shape index: {}]
  %s6 = inlined_call_operand.vmem [shape: f32[512,128], index: 6, kind: output, shape index: {}]
  %s7 = sld [smem:[#allocation0]]
  $region34: #{_lambda_.5} parent=0
    _
  %s9 = ssub.s32 1, %s7
  %s10 = scalar_select 0, %s9, %s7
  // Predicated region
  $region2: #{_lambda_.5} parent=0 // pred_check
    _
  $region3: #{_lambda_.5} parent=0 // pred_check_branch
    %12 = sbr.rel (0) target = $region5
  $region4: #{_lambda_.5} parent=0 // pred_region
    _
  $region5: #{_lambda_.5} parent=0 // pred_fallthru
    _
  // Predicated region
  $region6: #{_lambda_.5} parent=0 // pred_check
    _
  $region7: #{_lambda_.5} parent=0 // pred_check_branch
    %14 = sbr.rel (0) target = $region9
  $region8: #{_lambda_.5} parent=0 // pred_region
    _
  $region9: #{_lambda_.5} parent=0 // pred_fallthru
    _
  // Predicated region
  $region10: #{_lambda_.5} parent=0 // pred_check
    _
  $region11: #{_lambda_.5} parent=0 // pred_check_branch
    %16 = sbr.rel (0) target = $region13
  $region12: #{_lambda_.5} parent=0 // pred_region
    _
  $region13: #{_lambda_.5} parent=0 // pred_fallthru
    _
  // Predicated region
  $region14: #{_lambda_.5} parent=0 // pred_check
    _
  $region15: #{_lambda_.5} parent=0 // pred_check_branch
    %18 = sbr.rel (0) target = $region17
  $region16: #{_lambda_.5} parent=0 // pred_region
    _
  $region17: #{_lambda_.5} parent=0 // pred_fallthru
    _
  // Predicated region
  $region18: #{_lambda_.5} parent=0 // pred_check
    _
  $region19: #{_lambda_.5} parent=0 // pred_check_branch
    %20 = sbr.rel (0) target = $region21
  $region20: #{_lambda_.5} parent=0 // pred_region
    _
  $region21: #{_lambda_.5} parent=0 // pred_fallthru
    _
  // Predicated region
  $region22: #{_lambda_.5} parent=0 // pred_check
    _
  $region23: #{_lambda_.5} parent=0 // pred_check_branch
    %22 = sbr.rel (0) target = $region25
  $region24: #{_lambda_.5} parent=0 // pred_region
    _
  $region25: #{_lambda_.5} parent=0 // pred_fallthru
    _
  %v24 = vld [vmem:[%s0] sm:$0xf]
  %v25 = vld [vmem:[%s0 + $0x4] sm:$0xf]
  %v26 = vld [vmem:[%s0 + $0x8] sm:$0xf]
  %v27 = vld [vmem:[%s0 + $0xc] sm:$0xf]
  %v28 = vld [vmem:[%s0 + $0x10] sm:$0xf]
  %v29 = vld [vmem:[%s0 + $0x14] sm:$0xf]
  %v30 = vld [vmem:[%s0 + $0x18] sm:$0xf]
  %v31 = vld [vmem:[%s0 + $0x1c] sm:$0xf]
  %v32 = vld [vmem:[%s0 + $0x20] sm:$0xf]
  %v33 = vld [vmem:[%s0 + $0x24] sm:$0xf]
  %v34 = vld [vmem:[%s0 + $0x28] sm:$0xf]
  %v35 = vld [vmem:[%s0 + $0x2c] sm:$0xf]
  %v36 = vld [vmem:[%s0 + $0x30] sm:$0xf]
  %v37 = vld [vmem:[%s0 + $0x34] sm:$0xf]
  %v38 = vld [vmem:[%s0 + $0x38] sm:$0xf]
  %v39 = vld [vmem:[%s0 + $0x3c] sm:$0xf]
  %v40 = vld [vmem:[%s0 + $0x40] sm:$0xf]
  %v41 = vld [vmem:[%s0 + $0x44] sm:$0xf]
  %v42 = vld [vmem:[%s0 + $0x48] sm:$0xf]
  %v43 = vld [vmem:[%s0 + $0x4c] sm:$0xf]
  %v44 = vld [vmem:[%s0 + $0x50] sm:$0xf]
  %v45 = vld [vmem:[%s0 + $0x54] sm:$0xf]
  %v46 = vld [vmem:[%s0 + $0x58] sm:$0xf]
  %v47 = vld [vmem:[%s0 + $0x5c] sm:$0xf]
  %v48 = vld [vmem:[%s0 + $0x60] sm:$0xf]
  %v49 = vld [vmem:[%s0 + $0x64] sm:$0xf]
  %v50 = vld [vmem:[%s0 + $0x68] sm:$0xf]
  %v51 = vld [vmem:[%s0 + $0x6c] sm:$0xf]
  %v52 = vld [vmem:[%s0 + $0x70] sm:$0xf]
  %v53 = vld [vmem:[%s0 + $0x74] sm:$0xf]
  %v54 = vld [vmem:[%s0 + $0x78] sm:$0xf]
  %v55 = vld [vmem:[%s0 + $0x7c] sm:$0xf]
  %v56 = vld [vmem:[%s0 + $0x80] sm:$0xf]
  %v57 = vld [vmem:[%s0 + $0x84] sm:$0xf]
  %v58 = vld [vmem:[%s0 + $0x88] sm:$0xf]
  %v59 = vld [vmem:[%s0 + $0x8c] sm:$0xf]
  %v60 = vld [vmem:[%s0 + $0x90] sm:$0xf]
  %v61 = vld [vmem:[%s0 + $0x94] sm:$0xf]
  %v62 = vld [vmem:[%s0 + $0x98] sm:$0xf]
  %v63 = vld [vmem:[%s0 + $0x9c] sm:$0xf]
  %v64 = vld [vmem:[%s0 + $0xa0] sm:$0xf]
  %v65 = vld [vmem:[%s0 + $0xa4] sm:$0xf]
  %v66 = vld [vmem:[%s0 + $0xa8] sm:$0xf]
  %v67 = vld [vmem:[%s0 + $0xac] sm:$0xf]
  %v68 = vld [vmem:[%s0 + $0xb0] sm:$0xf]
  %v69 = vld [vmem:[%s0 + $0xb4] sm:$0xf]
  %v70 = vld [vmem:[%s0 + $0xb8] sm:$0xf]
  %v71 = vld [vmem:[%s0 + $0xbc] sm:$0xf]
  %v72 = vld [vmem:[%s0 + $0xc0] sm:$0xf]
  %v73 = vld [vmem:[%s0 + $0xc4] sm:$0xf]
  %v74 = vld [vmem:[%s0 + $0xc8] sm:$0xf]
  %v75 = vld [vmem:[%s0 + $0xcc] sm:$0xf]
  %v76 = vld [vmem:[%s0 + $0xd0] sm:$0xf]
  %v77 = vld [vmem:[%s0 + $0xd4] sm:$0xf]
  %v78 = vld [vmem:[%s0 + $0xd8] sm:$0xf]
  %v79 = vld [vmem:[%s0 + $0xdc] sm:$0xf]
  %v80 = vld [vmem:[%s0 + $0xe0] sm:$0xf]
  %v81 = vld [vmem:[%s0 + $0xe4] sm:$0xf]
  %v82 = vld [vmem:[%s0 + $0xe8] sm:$0xf]
  %v83 = vld [vmem:[%s0 + $0xec] sm:$0xf]
  %v84 = vld [vmem:[%s0 + $0xf0] sm:$0xf]
  %v85 = vld [vmem:[%s0 + $0xf4] sm:$0xf]
  %v86 = vld [vmem:[%s0 + $0xf8] sm:$0xf]
  %v87 = vld [vmem:[%s0 + $0xfc] sm:$0xf]
  %v88 = vld [vmem:[%s2] sm:$0xf]
  %v89 = vld [vmem:[%s2 + $0x4] sm:$0xf]
  %v90 = vld [vmem:[%s2 + $0x8] sm:$0xf]
  %v91 = vld [vmem:[%s2 + $0xc] sm:$0xf]
  %v92 = vld [vmem:[%s2 + $0x10] sm:$0xf]
  %v93 = vld [vmem:[%s2 + $0x14] sm:$0xf]
  %v94 = vld [vmem:[%s2 + $0x18] sm:$0xf]
  %v95 = vld [vmem:[%s2 + $0x1c] sm:$0xf]
  %v96 = vld [vmem:[%s2 + $0x20] sm:$0xf]
  %v97 = vld [vmem:[%s2 + $0x24] sm:$0xf]
  %v98 = vld [vmem:[%s2 + $0x28] sm:$0xf]
  %v99 = vld [vmem:[%s2 + $0x2c] sm:$0xf]
  %v100 = vld [vmem:[%s2 + $0x30] sm:$0xf]
  %v101 = vld [vmem:[%s2 + $0x34] sm:$0xf]
  %v102 = vld [vmem:[%s2 + $0x38] sm:$0xf]
  %v103 = vld [vmem:[%s2 + $0x3c] sm:$0xf]
  %v104 = vld [vmem:[%s3] sm:$0x1]
  %v106 = vlaneseq
  %v107 = vshrl.u32 %v106, 7
  %v108 = vsub.s32 0, %v107
  %v109 = vrot.slane %v104, %v108
  %v175 = vunpack.c.l.b16 %v24
  %v176 = vunpack.c.l.b16 %v25
  %v177 = vunpack.c.l.b16 %v26
  %v178 = vunpack.c.l.b16 %v27
  %v179 = vunpack.c.l.b16 %v28
  %v180 = vunpack.c.l.b16 %v29
  %v181 = vunpack.c.l.b16 %v30
  %v182 = vunpack.c.l.b16 %v31
  %v183 = vunpack.c.l.b16 %v32
  %v184 = vunpack.c.l.b16 %v33
  %v185 = vunpack.c.l.b16 %v34
  %v186 = vunpack.c.l.b16 %v35
  %v187 = vunpack.c.l.b16 %v36
  %v188 = vunpack.c.l.b16 %v37
  %v189 = vunpack.c.l.b16 %v38
  %v190 = vunpack.c.l.b16 %v39
  %v191 = vunpack.c.l.b16 %v40
  %v192 = vunpack.c.l.b16 %v41
  %v193 = vunpack.c.l.b16 %v42
  %v194 = vunpack.c.l.b16 %v43
  %v195 = vunpack.c.l.b16 %v44
  %v196 = vunpack.c.l.b16 %v45
  %v197 = vunpack.c.l.b16 %v46
  %v198 = vunpack.c.l.b16 %v47
  %v199 = vunpack.c.l.b16 %v48
  %v200 = vunpack.c.l.b16 %v49
  %v201 = vunpack.c.l.b16 %v50
  %v202 = vunpack.c.l.b16 %v51
  %v203 = vunpack.c.l.b16 %v52
  %v204 = vunpack.c.l.b16 %v53
  %v205 = vunpack.c.l.b16 %v54
  %v206 = vunpack.c.l.b16 %v55
  %v207 = vunpack.c.l.b16 %v56
  %v208 = vunpack.c.l.b16 %v57
  %v209 = vunpack.c.l.b16 %v58
  %v210 = vunpack.c.l.b16 %v59
  %v211 = vunpack.c.l.b16 %v60
  %v212 = vunpack.c.l.b16 %v61
  %v213 = vunpack.c.l.b16 %v62
  %v214 = vunpack.c.l.b16 %v63
  %v215 = vunpack.c.l.b16 %v64
  %v216 = vunpack.c.l.b16 %v65
  %v217 = vunpack.c.l.b16 %v66
  %v218 = vunpack.c.l.b16 %v67
  %v219 = vunpack.c.l.b16 %v68
  %v220 = vunpack.c.l.b16 %v69
  %v221 = vunpack.c.l.b16 %v70
  %v222 = vunpack.c.l.b16 %v71
  %v223 = vunpack.c.l.b16 %v72
  %v224 = vunpack.c.l.b16 %v73
  %v225 = vunpack.c.l.b16 %v74
  %v226 = vunpack.c.l.b16 %v75
  %v227 = vunpack.c.l.b16 %v76
  %v228 = vunpack.c.l.b16 %v77
  %v229 = vunpack.c.l.b16 %v78
  %v230 = vunpack.c.l.b16 %v79
  %v231 = vunpack.c.l.b16 %v80
  %v232 = vunpack.c.l.b16 %v81
  %v233 = vunpack.c.l.b16 %v82
  %v234 = vunpack.c.l.b16 %v83
  %v235 = vunpack.c.l.b16 %v84
  %v236 = vunpack.c.l.b16 %v85
  %v237 = vunpack.c.l.b16 %v86
  %v238 = vunpack.c.l.b16 %v87
  %v239 = vpack.c.b16 %v176, %v175
  %v240 = vpack.c.b16 %v178, %v177
  %v241 = vpack.c.b16 %v180, %v179
  %v242 = vpack.c.b16 %v182, %v181
  %v243 = vpack.c.b16 %v184, %v183
  %v244 = vpack.c.b16 %v186, %v185
  %v245 = vpack.c.b16 %v188, %v187
  %v246 = vpack.c.b16 %v190, %v189
  %v247 = vpack.c.b16 %v192, %v191
  %v248 = vpack.c.b16 %v194, %v193
  %v249 = vpack.c.b16 %v196, %v195
  %v250 = vpack.c.b16 %v198, %v197
  %v251 = vpack.c.b16 %v200, %v199
  %v252 = vpack.c.b16 %v202, %v201
  %v253 = vpack.c.b16 %v204, %v203
  %v254 = vpack.c.b16 %v206, %v205
  %v255 = vpack.c.b16 %v208, %v207
  %v256 = vpack.c.b16 %v210, %v209
  %v257 = vpack.c.b16 %v212, %v211
  %v258 = vpack.c.b16 %v214, %v213
  %v259 = vpack.c.b16 %v216, %v215
  %v260 = vpack.c.b16 %v218, %v217
  %v261 = vpack.c.b16 %v220, %v219
  %v262 = vpack.c.b16 %v222, %v221
  %v263 = vpack.c.b16 %v224, %v223
  %v264 = vpack.c.b16 %v226, %v225
  %v265 = vpack.c.b16 %v228, %v227
  %v266 = vpack.c.b16 %v230, %v229
  %v267 = vpack.c.b16 %v232, %v231
  %v268 = vpack.c.b16 %v234, %v233
  %v269 = vpack.c.b16 %v236, %v235
  %v270 = vpack.c.b16 %v238, %v237
  %v319 = vunpack.c.l.b16 %v88
  %v320 = vunpack.c.l.b16 %v89
  %v321 = vunpack.c.l.b16 %v90
  %v322 = vunpack.c.l.b16 %v91
  %v323 = vunpack.c.l.b16 %v92
  %v324 = vunpack.c.l.b16 %v93
  %v325 = vunpack.c.l.b16 %v94
  %v326 = vunpack.c.l.b16 %v95
  %v327 = vunpack.c.l.b16 %v96
  %v328 = vunpack.c.l.b16 %v97
  %v329 = vunpack.c.l.b16 %v98
  %v330 = vunpack.c.l.b16 %v99
  %v331 = vunpack.c.l.b16 %v100
  %v332 = vunpack.c.l.b16 %v101
  %v333 = vunpack.c.l.b16 %v102
  %v334 = vunpack.c.l.b16 %v103
  %v335 = vpack.c.b16 %v320, %v319
  %v336 = vpack.c.b16 %v322, %v321
  %v337 = vpack.c.b16 %v324, %v323
  %v338 = vpack.c.b16 %v326, %v325
  %v339 = vpack.c.b16 %v328, %v327
  %v340 = vpack.c.b16 %v330, %v329
  %v341 = vpack.c.b16 %v332, %v331
  %v342 = vpack.c.b16 %v334, %v333
  %351 = vmatprep.subr.bf16.mxu0 0
  %352 = vmatpush1.bf16.msra.mxu0 %v335
  %353 = vmatprep.subr.bf16.mxu0 0
  %354 = vmatpush1.bf16.msra.mxu0 %v336
  %355 = vmatprep.subr.bf16.mxu0 0
  %356 = vmatpush1.bf16.msra.mxu0 %v337
  %357 = vmatprep.subr.bf16.mxu0 0
  %358 = vmatpush1.bf16.msra.mxu0 %v338
  %359 = vmatprep.subr.bf16.mxu0 0
  %360 = vmatpush1.bf16.msra.mxu0 %v339
  %361 = vmatprep.subr.bf16.mxu0 0
  %362 = vmatpush1.bf16.msra.mxu0 %v340
  %363 = vmatprep.subr.bf16.mxu0 0
  %364 = vmatpush1.bf16.msra.mxu0 %v341
  %365 = vmatprep.subr.bf16.mxu0 0
  %366 = vmatpush1.bf16.msra.mxu0 %v342
  %367 = vmatprep.subr.bf16.mxu0 0
  %368 = vmatpush1.bf16.msra.mxu0 0
  %369 = vmatprep.subr.bf16.mxu0 0
  %370 = vmatpush1.bf16.msra.mxu0 0
  %371 = vmatprep.subr.bf16.mxu0 0
  %372 = vmatpush1.bf16.msra.mxu0 0
  %373 = vmatprep.subr.bf16.mxu0 0
  %374 = vmatpush1.bf16.msra.mxu0 0
  %375 = vmatprep.subr.bf16.mxu0 0
  %376 = vmatpush1.bf16.msra.mxu0 0
  %377 = vmatprep.subr.bf16.mxu0 0
  %378 = vmatpush1.bf16.msra.mxu0 0
  %379 = vmatprep.subr.bf16.mxu0 0
  %380 = vmatpush1.bf16.msra.mxu0 0
  %381 = vmatprep.subr.bf16.mxu0 0
  %382 = vmatpush1.bf16.msra.mxu0 0
  %383 = vmatprep.mubr.bf16.mxu0 0
  %384 = vmatmul.mubr.bf16.gmra.mrb[0].mxu0 %v239
  %v385 = vpop.f32.mrb[0].mxu0
  %v386 = vadd.f32 %v109, %v385
  %v387 = vpop.f32.mrb[0].mxu0
  %v388 = vpop.f32.mrb[0].mxu0
  %v389 = vadd.f32 %v109, %v388
  %v390 = vpop.f32.mrb[0].mxu0
  %391 = vmatprep.mubr.bf16.mxu0 0
  %392 = vmatmul.mubr.bf16.gmra.mrb[0].mxu0 %v240
  %v393 = vpop.f32.mrb[0].mxu0
  %v394 = vadd.f32 %v109, %v393
  %v395 = vpop.f32.mrb[0].mxu0
  %v396 = vpop.f32.mrb[0].mxu0
  %v397 = vadd.f32 %v109, %v396
  %v398 = vpop.f32.mrb[0].mxu0
  %399 = vmatprep.mubr.bf16.mxu0 0
  %400 = vmatmul.mubr.bf16.gmra.mrb[0].mxu0 %v241
  %v401 = vpop.f32.mrb[0].mxu0
  %v402 = vadd.f32 %v109, %v401
  %v403 = vpop.f32.mrb[0].mxu0
  %v404 = vpop.f32.mrb[0].mxu0
  %v405 = vadd.f32 %v109, %v404
  %v406 = vpop.f32.mrb[0].mxu0
  %407 = vmatprep.mubr.bf16.mxu0 0
  %408 = vmatmul.mubr.bf16.gmra.mrb[0].mxu0 %v242
  %v409 = vpop.f32.mrb[0].mxu0
  %v410 = vadd.f32 %v109, %v409
  %v411 = vpop.f32.mrb[0].mxu0
  %v412 = vpop.f32.mrb[0].mxu0
  %v413 = vadd.f32 %v109, %v412
  %v414 = vpop.f32.mrb[0].mxu0
  %415 = vmatprep.mubr.bf16.mxu0 0
  %416 = vmatmul.mubr.bf16.gmra.mrb[0].mxu0 %v243
  %v417 = vpop.f32.mrb[0].mxu0
  %v418 = vadd.f32 %v109, %v417
  %v419 = vpop.f32.mrb[0].mxu0
  %v420 = vpop.f32.mrb[0].mxu0
  %v421 = vadd.f32 %v109, %v420
  %v422 = vpop.f32.mrb[0].mxu0
  %423 = vmatprep.mubr.bf16.mxu0 0
  %424 = vmatmul.mubr.bf16.gmra.mrb[0].mxu0 %v244
  %v425 = vpop.f32.mrb[0].mxu0
  %v426 = vadd.f32 %v109, %v425
  %v427 = vpop.f32.mrb[0].mxu0
  %v428 = vpop.f32.mrb[0].mxu0
  %v429 = vadd.f32 %v109, %v428
  %v430 = vpop.f32.mrb[0].mxu0
  %431 = vmatprep.mubr.bf16.mxu0 0
  %432 = vmatmul.mubr.bf16.gmra.mrb[0].mxu0 %v245
  %v433 = vpop.f32.mrb[0].mxu0
  %v434 = vadd.f32 %v109, %v433
  %v435 = vpop.f32.mrb[0].mxu0
  %v436 = vpop.f32.mrb[0].mxu0
  %v437 = vadd.f32 %v109, %v436
  %v438 = vpop.f32.mrb[0].mxu0
  %439 = vmatprep.mubr.bf16.mxu0 0
  %440 = vmatmul.mubr.bf16.gmra.mrb[0].mxu0 %v246
  %v441 = vpop.f32.mrb[0].mxu0
  %v442 = vadd.f32 %v109, %v441
  %v443 = vpop.f32.mrb[0].mxu0
  %v444 = vpop.f32.mrb[0].mxu0
  %v445 = vadd.f32 %v109, %v444
  %v446 = vpop.f32.mrb[0].mxu0
  %447 = vmatprep.mubr.bf16.mxu0 0
  %448 = vmatmul.mubr.bf16.gmra.mrb[0].mxu0 %v247
  %v449 = vpop.f32.mrb[0].mxu0
  %v450 = vadd.f32 %v109, %v449
  %v451 = vpop.f32.mrb[0].mxu0
  %v452 = vpop.f32.mrb[0].mxu0
  %v453 = vadd.f32 %v109, %v452
  %v454 = vpop.f32.mrb[0].mxu0
  %455 = vmatprep.mubr.bf16.mxu0 0
  %456 = vmatmul.mubr.bf16.gmra.mrb[0].mxu0 %v248
  %v457 = vpop.f32.mrb[0].mxu0
  %v458 = vadd.f32 %v109, %v457
  %v459 = vpop.f32.mrb[0].mxu0
  %v460 = vpop.f32.mrb[0].mxu0
  %v461 = vadd.f32 %v109, %v460
  %v462 = vpop.f32.mrb[0].mxu0
  %463 = vmatprep.mubr.bf16.mxu0 0
  %464 = vmatmul.mubr.bf16.gmra.mrb[0].mxu0 %v249
  %v465 = vpop.f32.mrb[0].mxu0
  %v466 = vadd.f32 %v109, %v465
  %v467 = vpop.f32.mrb[0].mxu0
  %v468 = vpop.f32.mrb[0].mxu0
  %v469 = vadd.f32 %v109, %v468
  %v470 = vpop.f32.mrb[0].mxu0
  %471 = vmatprep.mubr.bf16.mxu0 0
  %472 = vmatmul.mubr.bf16.gmra.mrb[0].mxu0 %v250
  %v473 = vpop.f32.mrb[0].mxu0
  %v474 = vadd.f32 %v109, %v473
  %v475 = vpop.f32.mrb[0].mxu0
  %v476 = vpop.f32.mrb[0].mxu0
  %v477 = vadd.f32 %v109, %v476
  %v478 = vpop.f32.mrb[0].mxu0
  %479 = vmatprep.mubr.bf16.mxu0 0
  %480 = vmatmul.mubr.bf16.gmra.mrb[0].mxu0 %v251
  %v481 = vpop.f32.mrb[0].mxu0
  %v482 = vadd.f32 %v109, %v481
  %v483 = vpop.f32.mrb[0].mxu0
  %v484 = vpop.f32.mrb[0].mxu0
  %v485 = vadd.f32 %v109, %v484
  %v486 = vpop.f32.mrb[0].mxu0
  %487 = vmatprep.mubr.bf16.mxu0 0
  %488 = vmatmul.mubr.bf16.gmra.mrb[0].mxu0 %v252
  %v489 = vpop.f32.mrb[0].mxu0
  %v490 = vadd.f32 %v109, %v489
  %v491 = vpop.f32.mrb[0].mxu0
  %v492 = vpop.f32.mrb[0].mxu0
  %v493 = vadd.f32 %v109, %v492
  %v494 = vpop.f32.mrb[0].mxu0
  %495 = vmatprep.mubr.bf16.mxu0 0
  %496 = vmatmul.mubr.bf16.gmra.mrb[0].mxu0 %v253
  %v497 = vpop.f32.mrb[0].mxu0
  %v498 = vadd.f32 %v109, %v497
  %v499 = vpop.f32.mrb[0].mxu0
  %v500 = vpop.f32.mrb[0].mxu0
  %v501 = vadd.f32 %v109, %v500
  %v502 = vpop.f32.mrb[0].mxu0
  %503 = vmatprep.mubr.bf16.mxu0 0
  %504 = vmatmul.mubr.bf16.gmra.mrb[0].mxu0 %v254
  %v505 = vpop.f32.mrb[0].mxu0
  %v506 = vadd.f32 %v109, %v505
  %v507 = vpop.f32.mrb[0].mxu0
  %v508 = vpop.f32.mrb[0].mxu0
  %v509 = vadd.f32 %v109, %v508
  %v510 = vpop.f32.mrb[0].mxu0
  %511 = vmatprep.mubr.bf16.mxu0 0
  %512 = vmatmul.mubr.bf16.gmra.mrb[0].mxu0 %v255
  %v513 = vpop.f32.mrb[0].mxu0
  %v514 = vadd.f32 %v109, %v513
  %v515 = vpop.f32.mrb[0].mxu0
  %v516 = vpop.f32.mrb[0].mxu0
  %v517 = vadd.f32 %v109, %v516
  %v518 = vpop.f32.mrb[0].mxu0
  %519 = vmatprep.mubr.bf16.mxu0 0
  %520 = vmatmul.mubr.bf16.gmra.mrb[0].mxu0 %v256
  %v521 = vpop.f32.mrb[0].mxu0
  %v522 = vadd.f32 %v109, %v521
  %v523 = vpop.f32.mrb[0].mxu0
  %v524 = vpop.f32.mrb[0].mxu0
  %v525 = vadd.f32 %v109, %v524
  %v526 = vpop.f32.mrb[0].mxu0
  %527 = vmatprep.mubr.bf16.mxu0 0
  %528 = vmatmul.mubr.bf16.gmra.mrb[0].mxu0 %v257
  %v529 = vpop.f32.mrb[0].mxu0
  %v530 = vadd.f32 %v109, %v529
  %v531 = vpop.f32.mrb[0].mxu0
  %v532 = vpop.f32.mrb[0].mxu0
  %v533 = vadd.f32 %v109, %v532
  %v534 = vpop.f32.mrb[0].mxu0
  %535 = vmatprep.mubr.bf16.mxu0 0
  %536 = vmatmul.mubr.bf16.gmra.mrb[0].mxu0 %v258
  %v537 = vpop.f32.mrb[0].mxu0
  %v538 = vadd.f32 %v109, %v537
  %v539 = vpop.f32.mrb[0].mxu0
  %v540 = vpop.f32.mrb[0].mxu0
  %v541 = vadd.f32 %v109, %v540
  %v542 = vpop.f32.mrb[0].mxu0
  %543 = vmatprep.mubr.bf16.mxu0 0
  %544 = vmatmul.mubr.bf16.gmra.mrb[0].mxu0 %v259
  %v545 = vpop.f32.mrb[0].mxu0
  %v546 = vadd.f32 %v109, %v545
  %v547 = vpop.f32.mrb[0].mxu0
  %v548 = vpop.f32.mrb[0].mxu0
  %v549 = vadd.f32 %v109, %v548
  %v550 = vpop.f32.mrb[0].mxu0
  %551 = vmatprep.mubr.bf16.mxu0 0
  %552 = vmatmul.mubr.bf16.gmra.mrb[0].mxu0 %v260
  %v553 = vpop.f32.mrb[0].mxu0
  %v554 = vadd.f32 %v109, %v553
  %v555 = vpop.f32.mrb[0].mxu0
  %v556 = vpop.f32.mrb[0].mxu0
  %v557 = vadd.f32 %v109, %v556
  %v558 = vpop.f32.mrb[0].mxu0
  %559 = vmatprep.mubr.bf16.mxu0 0
  %560 = vmatmul.mubr.bf16.gmra.mrb[0].mxu0 %v261
  %v561 = vpop.f32.mrb[0].mxu0
  %v562 = vadd.f32 %v109, %v561
  %v563 = vpop.f32.mrb[0].mxu0
  %v564 = vpop.f32.mrb[0].mxu0
  %v565 = vadd.f32 %v109, %v564
  %v566 = vpop.f32.mrb[0].mxu0
  %567 = vmatprep.mubr.bf16.mxu0 0
  %568 = vmatmul.mubr.bf16.gmra.mrb[0].mxu0 %v262
  %v569 = vpop.f32.mrb[0].mxu0
  %v570 = vadd.f32 %v109, %v569
  %v571 = vpop.f32.mrb[0].mxu0
  %v572 = vpop.f32.mrb[0].mxu0
  %v573 = vadd.f32 %v109, %v572
  %v574 = vpop.f32.mrb[0].mxu0
  %575 = vmatprep.mubr.bf16.mxu0 0
  %576 = vmatmul.mubr.bf16.gmra.mrb[0].mxu0 %v263
  %v577 = vpop.f32.mrb[0].mxu0
  %v578 = vadd.f32 %v109, %v577
  %v579 = vpop.f32.mrb[0].mxu0
  %v580 = vpop.f32.mrb[0].mxu0
  %v581 = vadd.f32 %v109, %v580
  %v582 = vpop.f32.mrb[0].mxu0
  %583 = vmatprep.mubr.bf16.mxu0 0
  %584 = vmatmul.mubr.bf16.gmra.mrb[0].mxu0 %v264
  %v585 = vpop.f32.mrb[0].mxu0
  %v586 = vadd.f32 %v109, %v585
  %v587 = vpop.f32.mrb[0].mxu0
  %v588 = vpop.f32.mrb[0].mxu0
  %v589 = vadd.f32 %v109, %v588
  %v590 = vpop.f32.mrb[0].mxu0
  %591 = vmatprep.mubr.bf16.mxu0 0
  %592 = vmatmul.mubr.bf16.gmra.mrb[0].mxu0 %v265
  %v593 = vpop.f32.mrb[0].mxu0
  %v594 = vadd.f32 %v109, %v593
  %v595 = vpop.f32.mrb[0].mxu0
  %v596 = vpop.f32.mrb[0].mxu0
  %v597 = vadd.f32 %v109, %v596
  %v598 = vpop.f32.mrb[0].mxu0
  %599 = vmatprep.mubr.bf16.mxu0 0
  %600 = vmatmul.mubr.bf16.gmra.mrb[0].mxu0 %v266
  %v601 = vpop.f32.mrb[0].mxu0
  %v602 = vadd.f32 %v109, %v601
  %v603 = vpop.f32.mrb[0].mxu0
  %v604 = vpop.f32.mrb[0].mxu0
  %v605 = vadd.f32 %v109, %v604
  %v606 = vpop.f32.mrb[0].mxu0
  %607 = vmatprep.mubr.bf16.mxu0 0
  %608 = vmatmul.mubr.bf16.gmra.mrb[0].mxu0 %v267
  %v609 = vpop.f32.mrb[0].mxu0
  %v610 = vadd.f32 %v109, %v609
  %v611 = vpop.f32.mrb[0].mxu0
  %v612 = vpop.f32.mrb[0].mxu0
  %v613 = vadd.f32 %v109, %v612
  %v614 = vpop.f32.mrb[0].mxu0
  %615 = vmatprep.mubr.bf16.mxu0 0
  %616 = vmatmul.mubr.bf16.gmra.mrb[0].mxu0 %v268
  %v617 = vpop.f32.mrb[0].mxu0
  %v618 = vadd.f32 %v109, %v617
  %v619 = vpop.f32.mrb[0].mxu0
  %v620 = vpop.f32.mrb[0].mxu0
  %v621 = vadd.f32 %v109, %v620
  %v622 = vpop.f32.mrb[0].mxu0
  %623 = vmatprep.mubr.bf16.mxu0 0
  %624 = vmatmul.mubr.bf16.gmra.mrb[0].mxu0 %v269
  %v625 = vpop.f32.mrb[0].mxu0
  %v626 = vadd.f32 %v109, %v625
  %v627 = vpop.f32.mrb[0].mxu0
  %v628 = vpop.f32.mrb[0].mxu0
  %v629 = vadd.f32 %v109, %v628
  %v630 = vpop.f32.mrb[0].mxu0
  %631 = vmatprep.mubr.bf16.mxu0 0
  %632 = vmatmul.mubr.bf16.gmra.mrb[0].mxu0 %v270
  %v633 = vpop.f32.mrb[0].mxu0
  %v634 = vadd.f32 %v109, %v633
  %v635 = vpop.f32.mrb[0].mxu0
  %v636 = vpop.f32.mrb[0].mxu0
  %v637 = vadd.f32 %v109, %v636
  %v638 = vpop.f32.mrb[0].mxu0
  %639 = vdwg.mxu0
  %v640 = vld [vmem:[%s1] sm:$0xf]
  %v641 = vld [vmem:[%s1 + $0x4] sm:$0xf]
  %v642 = vld [vmem:[%s1 + $0x8] sm:$0xf]
  %v643 = vld [vmem:[%s1 + $0xc] sm:$0xf]
  %v644 = vld [vmem:[%s1 + $0x10] sm:$0xf]
  %v645 = vld [vmem:[%s1 + $0x14] sm:$0xf]
  %v646 = vld [vmem:[%s1 + $0x18] sm:$0xf]
  %v647 = vld [vmem:[%s1 + $0x1c] sm:$0xf]
  %v648 = vld [vmem:[%s1 + $0x20] sm:$0xf]
  %v649 = vld [vmem:[%s1 + $0x24] sm:$0xf]
  %v650 = vld [vmem:[%s1 + $0x28] sm:$0xf]
  %v651 = vld [vmem:[%s1 + $0x2c] sm:$0xf]
  %v652 = vld [vmem:[%s1 + $0x30] sm:$0xf]
  %v653 = vld [vmem:[%s1 + $0x34] sm:$0xf]
  %v654 = vld [vmem:[%s1 + $0x38] sm:$0xf]
  %v655 = vld [vmem:[%s1 + $0x3c] sm:$0xf]
  %v656 = vld [vmem:[%s1 + $0x40] sm:$0xf]
  %v657 = vld [vmem:[%s1 + $0x44] sm:$0xf]
  %v658 = vld [vmem:[%s1 + $0x48] sm:$0xf]
  %v659 = vld [vmem:[%s1 + $0x4c] sm:$0xf]
  %v660 = vld [vmem:[%s1 + $0x50] sm:$0xf]
  %v661 = vld [vmem:[%s1 + $0x54] sm:$0xf]
  %v662 = vld [vmem:[%s1 + $0x58] sm:$0xf]
  %v663 = vld [vmem:[%s1 + $0x5c] sm:$0xf]
  %v664 = vld [vmem:[%s1 + $0x60] sm:$0xf]
  %v665 = vld [vmem:[%s1 + $0x64] sm:$0xf]
  %v666 = vld [vmem:[%s1 + $0x68] sm:$0xf]
  %v667 = vld [vmem:[%s1 + $0x6c] sm:$0xf]
  %v668 = vld [vmem:[%s1 + $0x70] sm:$0xf]
  %v669 = vld [vmem:[%s1 + $0x74] sm:$0xf]
  %v670 = vld [vmem:[%s1 + $0x78] sm:$0xf]
  %v671 = vld [vmem:[%s1 + $0x7c] sm:$0xf]
  %v672 = vld [vmem:[%s1 + $0x80] sm:$0xf]
  %v673 = vld [vmem:[%s1 + $0x84] sm:$0xf]
  %v674 = vld [vmem:[%s1 + $0x88] sm:$0xf]
  %v675 = vld [vmem:[%s1 + $0x8c] sm:$0xf]
  %v676 = vld [vmem:[%s1 + $0x90] sm:$0xf]
  %v677 = vld [vmem:[%s1 + $0x94] sm:$0xf]
  %v678 = vld [vmem:[%s1 + $0x98] sm:$0xf]
  %v679 = vld [vmem:[%s1 + $0x9c] sm:$0xf]
  %v680 = vld [vmem:[%s1 + $0xa0] sm:$0xf]
  %v681 = vld [vmem:[%s1 + $0xa4] sm:$0xf]
  %v682 = vld [vmem:[%s1 + $0xa8] sm:$0xf]
  %v683 = vld [vmem:[%s1 + $0xac] sm:$0xf]
  %v684 = vld [vmem:[%s1 + $0xb0] sm:$0xf]
  %v685 = vld [vmem:[%s1 + $0xb4] sm:$0xf]
  %v686 = vld [vmem:[%s1 + $0xb8] sm:$0xf]
  %v687 = vld [vmem:[%s1 + $0xbc] sm:$0xf]
  %v688 = vld [vmem:[%s1 + $0xc0] sm:$0xf]
  %v689 = vld [vmem:[%s1 + $0xc4] sm:$0xf]
  %v690 = vld [vmem:[%s1 + $0xc8] sm:$0xf]
  %v691 = vld [vmem:[%s1 + $0xcc] sm:$0xf]
  %v692 = vld [vmem:[%s1 + $0xd0] sm:$0xf]
  %v693 = vld [vmem:[%s1 + $0xd4] sm:$0xf]
  %v694 = vld [vmem:[%s1 + $0xd8] sm:$0xf]
  %v695 = vld [vmem:[%s1 + $0xdc] sm:$0xf]
  %v696 = vld [vmem:[%s1 + $0xe0] sm:$0xf]
  %v697 = vld [vmem:[%s1 + $0xe4] sm:$0xf]
  %v698 = vld [vmem:[%s1 + $0xe8] sm:$0xf]
  %v699 = vld [vmem:[%s1 + $0xec] sm:$0xf]
  %v700 = vld [vmem:[%s1 + $0xf0] sm:$0xf]
  %v701 = vld [vmem:[%s1 + $0xf4] sm:$0xf]
  %v702 = vld [vmem:[%s1 + $0xf8] sm:$0xf]
  %v703 = vld [vmem:[%s1 + $0xfc] sm:$0xf]
  %v704 = vld [vmem:[%s4] sm:$0xf]
  %v705 = vld [vmem:[%s4 + $0x4] sm:$0xf]
  %v706 = vld [vmem:[%s4 + $0x8] sm:$0xf]
  %v707 = vld [vmem:[%s4 + $0xc] sm:$0xf]
  %v708 = vld [vmem:[%s4 + $0x10] sm:$0xf]
  %v709 = vld [vmem:[%s4 + $0x14] sm:$0xf]
  %v710 = vld [vmem:[%s4 + $0x18] sm:$0xf]
  %v711 = vld [vmem:[%s4 + $0x1c] sm:$0xf]
  %v712 = vld [vmem:[%s4 + $0x20] sm:$0xf]
  %v713 = vld [vmem:[%s4 + $0x24] sm:$0xf]
  %v714 = vld [vmem:[%s4 + $0x28] sm:$0xf]
  %v715 = vld [vmem:[%s4 + $0x2c] sm:$0xf]
  %v716 = vld [vmem:[%s4 + $0x30] sm:$0xf]
  %v717 = vld [vmem:[%s4 + $0x34] sm:$0xf]
  %v718 = vld [vmem:[%s4 + $0x38] sm:$0xf]
  %v719 = vld [vmem:[%s4 + $0x3c] sm:$0xf]
  %v720 = vld [vmem:[%s5] sm:$0x1]
  %v722 = vlaneseq
  %v723 = vshrl.u32 %v722, 7
  %v724 = vsub.s32 0, %v723
  %v725 = vrot.slane %v720, %v724
  %v791 = vunpack.c.l.b16 %v640
  %v792 = vunpack.c.l.b16 %v641
  %v793 = vunpack.c.l.b16 %v642
  %v794 = vunpack.c.l.b16 %v643
  %v795 = vunpack.c.l.b16 %v644
  %v796 = vunpack.c.l.b16 %v645
  %v797 = vunpack.c.l.b16 %v646
  %v798 = vunpack.c.l.b16 %v647
  %v799 = vunpack.c.l.b16 %v648
  %v800 = vunpack.c.l.b16 %v649
  %v801 = vunpack.c.l.b16 %v650
  %v802 = vunpack.c.l.b16 %v651
  %v803 = vunpack.c.l.b16 %v652
  %v804 = vunpack.c.l.b16 %v653
  %v805 = vunpack.c.l.b16 %v654
  %v806 = vunpack.c.l.b16 %v655
  %v807 = vunpack.c.l.b16 %v656
  %v808 = vunpack.c.l.b16 %v657
  %v809 = vunpack.c.l.b16 %v658
  %v810 = vunpack.c.l.b16 %v659
  %v811 = vunpack.c.l.b16 %v660
  %v812 = vunpack.c.l.b16 %v661
  %v813 = vunpack.c.l.b16 %v662
  %v814 = vunpack.c.l.b16 %v663
  %v815 = vunpack.c.l.b16 %v664
  %v816 = vunpack.c.l.b16 %v665
  %v817 = vunpack.c.l.b16 %v666
  %v818 = vunpack.c.l.b16 %v667
  %v819 = vunpack.c.l.b16 %v668
  %v820 = vunpack.c.l.b16 %v669
  %v821 = vunpack.c.l.b16 %v670
  %v822 = vunpack.c.l.b16 %v671
  %v823 = vunpack.c.l.b16 %v672
  %v824 = vunpack.c.l.b16 %v673
  %v825 = vunpack.c.l.b16 %v674
  %v826 = vunpack.c.l.b16 %v675
  %v827 = vunpack.c.l.b16 %v676
  %v828 = vunpack.c.l.b16 %v677
  %v829 = vunpack.c.l.b16 %v678
  %v830 = vunpack.c.l.b16 %v679
  %v831 = vunpack.c.l.b16 %v680
  %v832 = vunpack.c.l.b16 %v681
  %v833 = vunpack.c.l.b16 %v682
  %v834 = vunpack.c.l.b16 %v683
  %v835 = vunpack.c.l.b16 %v684
  %v836 = vunpack.c.l.b16 %v685
  %v837 = vunpack.c.l.b16 %v686
  %v838 = vunpack.c.l.b16 %v687
  %v839 = vunpack.c.l.b16 %v688
  %v840 = vunpack.c.l.b16 %v689
  %v841 = vunpack.c.l.b16 %v690
  %v842 = vunpack.c.l.b16 %v691
  %v843 = vunpack.c.l.b16 %v692
  %v844 = vunpack.c.l.b16 %v693
  %v845 = vunpack.c.l.b16 %v694
  %v846 = vunpack.c.l.b16 %v695
  %v847 = vunpack.c.l.b16 %v696
  %v848 = vunpack.c.l.b16 %v697
  %v849 = vunpack.c.l.b16 %v698
  %v850 = vunpack.c.l.b16 %v699
  %v851 = vunpack.c.l.b16 %v700
  %v852 = vunpack.c.l.b16 %v701
  %v853 = vunpack.c.l.b16 %v702
  %v854 = vunpack.c.l.b16 %v703
  %v855 = vpack.c.b16 %v792, %v791
  %v856 = vpack.c.b16 %v794, %v793
  %v857 = vpack.c.b16 %v796, %v795
  %v858 = vpack.c.b16 %v798, %v797
  %v859 = vpack.c.b16 %v800, %v799
  %v860 = vpack.c.b16 %v802, %v801
  %v861 = vpack.c.b16 %v804, %v803
  %v862 = vpack.c.b16 %v806, %v805
  %v863 = vpack.c.b16 %v808, %v807
  %v864 = vpack.c.b16 %v810, %v809
  %v865 = vpack.c.b16 %v812, %v811
  %v866 = vpack.c.b16 %v814, %v813
  %v867 = vpack.c.b16 %v816, %v815
  %v868 = vpack.c.b16 %v818, %v817
  %v869 = vpack.c.b16 %v820, %v819
  %v870 = vpack.c.b16 %v822, %v821
  %v871 = vpack.c.b16 %v824, %v823
  %v872 = vpack.c.b16 %v826, %v825
  %v873 = vpack.c.b16 %v828, %v827
  %v874 = vpack.c.b16 %v830, %v829
  %v875 = vpack.c.b16 %v832, %v831
  %v876 = vpack.c.b16 %v834, %v833
  %v877 = vpack.c.b16 %v836, %v835
  %v878 = vpack.c.b16 %v838, %v837
  %v879 = vpack.c.b16 %v840, %v839
  %v880 = vpack.c.b16 %v842, %v841
  %v881 = vpack.c.b16 %v844, %v843
  %v882 = vpack.c.b16 %v846, %v845
  %v883 = vpack.c.b16 %v848, %v847
  %v884 = vpack.c.b16 %v850, %v849
  %v885 = vpack.c.b16 %v852, %v851
  %v886 = vpack.c.b16 %v854, %v853
  %v935 = vunpack.c.l.b16 %v704
  %v936 = vunpack.c.l.b16 %v705
  %v937 = vunpack.c.l.b16 %v706
  %v938 = vunpack.c.l.b16 %v707
  %v939 = vunpack.c.l.b16 %v708
  %v940 = vunpack.c.l.b16 %v709
  %v941 = vunpack.c.l.b16 %v710
  %v942 = vunpack.c.l.b16 %v711
  %v943 = vunpack.c.l.b16 %v712
  %v944 = vunpack.c.l.b16 %v713
  %v945 = vunpack.c.l.b16 %v714
  %v946 = vunpack.c.l.b16 %v715
  %v947 = vunpack.c.l.b16 %v716
  %v948 = vunpack.c.l.b16 %v717
  %v949 = vunpack.c.l.b16 %v718
  %v950 = vunpack.c.l.b16 %v719
  %v951 = vpack.c.b16 %v936, %v935
  %v952 = vpack.c.b16 %v938, %v937
  %v953 = vpack.c.b16 %v940, %v939
  %v954 = vpack.c.b16 %v942, %v941
  %v955 = vpack.c.b16 %v944, %v943
  %v956 = vpack.c.b16 %v946, %v945
  %v957 = vpack.c.b16 %v948, %v947
  %v958 = vpack.c.b16 %v950, %v949
  %967 = vmatprep.subr.bf16.mxu0 0
  %968 = vmatpush1.bf16.msra.mxu0 %v951
  %969 = vmatprep.subr.bf16.mxu0 0
  %970 = vmatpush1.bf16.msra.mxu0 %v952
  %971 = vmatprep.subr.bf16.mxu0 0
  %972 = vmatpush1.bf16.msra.mxu0 %v953
  %973 = vmatprep.subr.bf16.mxu0 0
  %974 = vmatpush1.bf16.msra.mxu0 %v954
  %975 = vmatprep.subr.bf16.mxu0 0
  %976 = vmatpush1.bf16.msra.mxu0 %v955
  %977 = vmatprep.subr.bf16.mxu0 0
  %978 = vmatpush1.bf16.msra.mxu0 %v956
  %979 = vmatprep.subr.bf16.mxu0 0
  %980 = vmatpush1.bf16.msra.mxu0 %v957
  %981 = vmatprep.subr.bf16.mxu0 0
  %982 = vmatpush1.bf16.msra.mxu0 %v958
  %983 = vmatprep.subr.bf16.mxu0 0
  %984 = vmatpush1.bf16.msra.mxu0 0
  %985 = vmatprep.subr.bf16.mxu0 0
  %986 = vmatpush1.bf16.msra.mxu0 0
  %987 = vmatprep.subr.bf16.mxu0 0
  %988 = vmatpush1.bf16.msra.mxu0 0
  %989 = vmatprep.subr.bf16.mxu0 0
  %990 = vmatpush1.bf16.msra.mxu0 0
  %991 = vmatprep.subr.bf16.mxu0 0
  %992 = vmatpush1.bf16.msra.mxu0 0
  %993 = vmatprep.subr.bf16.mxu0 0
  %994 = vmatpush1.bf16.msra.mxu0 0
  %995 = vmatprep.subr.bf16.mxu0 0
  %996 = vmatpush1.bf16.msra.mxu0 0
  %997 = vmatprep.subr.bf16.mxu0 0
  %998 = vmatpush1.bf16.msra.mxu0 0
  %999 = vmatprep.mubr.bf16.mxu0 0
  %1000 = vmatmul.mubr.bf16.gmra.mrb[0].mxu0 %v855
  %v1001 = vpop.f32.mrb[0].mxu0
  %v1002 = vadd.f32 %v725, %v1001
  %v1003 = vpop.f32.mrb[0].mxu0
  %v1004 = vpop.f32.mrb[0].mxu0
  %v1005 = vadd.f32 %v725, %v1004
  %v1006 = vpop.f32.mrb[0].mxu0
  %1007 = vmatprep.mubr.bf16.mxu0 0
  %1008 = vmatmul.mubr.bf16.gmra.mrb[0].mxu0 %v856
  %v1009 = vpop.f32.mrb[0].mxu0
  %v1010 = vadd.f32 %v725, %v1009
  %v1011 = vpop.f32.mrb[0].mxu0
  %v1012 = vpop.f32.mrb[0].mxu0
  %v1013 = vadd.f32 %v725, %v1012
  %v1014 = vpop.f32.mrb[0].mxu0
  %1015 = vmatprep.mubr.bf16.mxu0 0
  %1016 = vmatmul.mubr.bf16.gmra.mrb[0].mxu0 %v857
  %v1017 = vpop.f32.mrb[0].mxu0
  %v1018 = vadd.f32 %v725, %v1017
  %v1019 = vpop.f32.mrb[0].mxu0
  %v1020 = vpop.f32.mrb[0].mxu0
  %v1021 = vadd.f32 %v725, %v1020
  %v1022 = vpop.f32.mrb[0].mxu0
  %1023 = vmatprep.mubr.bf16.mxu0 0
  %1024 = vmatmul.mubr.bf16.gmra.mrb[0].mxu0 %v858
  %v1025 = vpop.f32.mrb[0].mxu0
  %v1026 = vadd.f32 %v725, %v1025
  %v1027 = vpop.f32.mrb[0].mxu0
  %v1028 = vpop.f32.mrb[0].mxu0
  %v1029 = vadd.f32 %v725, %v1028
  %v1030 = vpop.f32.mrb[0].mxu0
  %1031 = vmatprep.mubr.bf16.mxu0 0
  %1032 = vmatmul.mubr.bf16.gmra.mrb[0].mxu0 %v859
  %v1033 = vpop.f32.mrb[0].mxu0
  %v1034 = vadd.f32 %v725, %v1033
  %v1035 = vpop.f32.mrb[0].mxu0
  %v1036 = vpop.f32.mrb[0].mxu0
  %v1037 = vadd.f32 %v725, %v1036
  %v1038 = vpop.f32.mrb[0].mxu0
  %1039 = vmatprep.mubr.bf16.mxu0 0
  %1040 = vmatmul.mubr.bf16.gmra.mrb[0].mxu0 %v860
  %v1041 = vpop.f32.mrb[0].mxu0
  %v1042 = vadd.f32 %v725, %v1041
  %v1043 = vpop.f32.mrb[0].mxu0
  %v1044 = vpop.f32.mrb[0].mxu0
  %v1045 = vadd.f32 %v725, %v1044
  %v1046 = vpop.f32.mrb[0].mxu0
  %1047 = vmatprep.mubr.bf16.mxu0 0
  %1048 = vmatmul.mubr.bf16.gmra.mrb[0].mxu0 %v861
  %v1049 = vpop.f32.mrb[0].mxu0
  %v1050 = vadd.f32 %v725, %v1049
  %v1051 = vpop.f32.mrb[0].mxu0
  %v1052 = vpop.f32.mrb[0].mxu0
  %v1053 = vadd.f32 %v725, %v1052
  %v1054 = vpop.f32.mrb[0].mxu0
  %1055 = vmatprep.mubr.bf16.mxu0 0
  %1056 = vmatmul.mubr.bf16.gmra.mrb[0].mxu0 %v862
  %v1057 = vpop.f32.mrb[0].mxu0
  %v1058 = vadd.f32 %v725, %v1057
  %v1059 = vpop.f32.mrb[0].mxu0
  %v1060 = vpop.f32.mrb[0].mxu0
  %v1061 = vadd.f32 %v725, %v1060
  %v1062 = vpop.f32.mrb[0].mxu0
  %1063 = vmatprep.mubr.bf16.mxu0 0
  %1064 = vmatmul.mubr.bf16.gmra.mrb[0].mxu0 %v863
  %v1065 = vpop.f32.mrb[0].mxu0
  %v1066 = vadd.f32 %v725, %v1065
  %v1067 = vpop.f32.mrb[0].mxu0
  %v1068 = vpop.f32.mrb[0].mxu0
  %v1069 = vadd.f32 %v725, %v1068
  %v1070 = vpop.f32.mrb[0].mxu0
  %1071 = vmatprep.mubr.bf16.mxu0 0
  %1072 = vmatmul.mubr.bf16.gmra.mrb[0].mxu0 %v864
  %v1073 = vpop.f32.mrb[0].mxu0
  %v1074 = vadd.f32 %v725, %v1073
  %v1075 = vpop.f32.mrb[0].mxu0
  %v1076 = vpop.f32.mrb[0].mxu0
  %v1077 = vadd.f32 %v725, %v1076
  %v1078 = vpop.f32.mrb[0].mxu0
  %1079 = vmatprep.mubr.bf16.mxu0 0
  %1080 = vmatmul.mubr.bf16.gmra.mrb[0].mxu0 %v865
  %v1081 = vpop.f32.mrb[0].mxu0
  %v1082 = vadd.f32 %v725, %v1081
  %v1083 = vpop.f32.mrb[0].mxu0
  %v1084 = vpop.f32.mrb[0].mxu0
  %v1085 = vadd.f32 %v725, %v1084
  %v1086 = vpop.f32.mrb[0].mxu0
  %1087 = vmatprep.mubr.bf16.mxu0 0
  %1088 = vmatmul.mubr.bf16.gmra.mrb[0].mxu0 %v866
  %v1089 = vpop.f32.mrb[0].mxu0
  %v1090 = vadd.f32 %v725, %v1089
  %v1091 = vpop.f32.mrb[0].mxu0
  %v1092 = vpop.f32.mrb[0].mxu0
  %v1093 = vadd.f32 %v725, %v1092
  %v1094 = vpop.f32.mrb[0].mxu0
  %1095 = vmatprep.mubr.bf16.mxu0 0
  %1096 = vmatmul.mubr.bf16.gmra.mrb[0].mxu0 %v867
  %v1097 = vpop.f32.mrb[0].mxu0
  %v1098 = vadd.f32 %v725, %v1097
  %v1099 = vpop.f32.mrb[0].mxu0
  %v1100 = vpop.f32.mrb[0].mxu0
  %v1101 = vadd.f32 %v725, %v1100
  %v1102 = vpop.f32.mrb[0].mxu0
  %1103 = vmatprep.mubr.bf16.mxu0 0
  %1104 = vmatmul.mubr.bf16.gmra.mrb[0].mxu0 %v868
  %v1105 = vpop.f32.mrb[0].mxu0
  %v1106 = vadd.f32 %v725, %v1105
  %v1107 = vpop.f32.mrb[0].mxu0
  %v1108 = vpop.f32.mrb[0].mxu0
  %v1109 = vadd.f32 %v725, %v1108
  %v1110 = vpop.f32.mrb[0].mxu0
  %1111 = vmatprep.mubr.bf16.mxu0 0
  %1112 = vmatmul.mubr.bf16.gmra.mrb[0].mxu0 %v869
  %v1113 = vpop.f32.mrb[0].mxu0
  %v1114 = vadd.f32 %v725, %v1113
  %v1115 = vpop.f32.mrb[0].mxu0
  %v1116 = vpop.f32.mrb[0].mxu0
  %v1117 = vadd.f32 %v725, %v1116
  %v1118 = vpop.f32.mrb[0].mxu0
  %1119 = vmatprep.mubr.bf16.mxu0 0
  %1120 = vmatmul.mubr.bf16.gmra.mrb[0].mxu0 %v870
  %v1121 = vpop.f32.mrb[0].mxu0
  %v1122 = vadd.f32 %v725, %v1121
  %v1123 = vpop.f32.mrb[0].mxu0
  %v1124 = vpop.f32.mrb[0].mxu0
  %v1125 = vadd.f32 %v725, %v1124
  %v1126 = vpop.f32.mrb[0].mxu0
  %1127 = vmatprep.mubr.bf16.mxu0 0
  %1128 = vmatmul.mubr.bf16.gmra.mrb[0].mxu0 %v871
  %v1129 = vpop.f32.mrb[0].mxu0
  %v1130 = vadd.f32 %v725, %v1129
  %v1131 = vpop.f32.mrb[0].mxu0
  %v1132 = vpop.f32.mrb[0].mxu0
  %v1133 = vadd.f32 %v725, %v1132
  %v1134 = vpop.f32.mrb[0].mxu0
  %1135 = vmatprep.mubr.bf16.mxu0 0
  %1136 = vmatmul.mubr.bf16.gmra.mrb[0].mxu0 %v872
  %v1137 = vpop.f32.mrb[0].mxu0
  %v1138 = vadd.f32 %v725, %v1137
  %v1139 = vpop.f32.mrb[0].mxu0
  %v1140 = vpop.f32.mrb[0].mxu0
  %v1141 = vadd.f32 %v725, %v1140
  %v1142 = vpop.f32.mrb[0].mxu0
  %1143 = vmatprep.mubr.bf16.mxu0 0
  %1144 = vmatmul.mubr.bf16.gmra.mrb[0].mxu0 %v873
  %v1145 = vpop.f32.mrb[0].mxu0
  %v1146 = vadd.f32 %v725, %v1145
  %v1147 = vpop.f32.mrb[0].mxu0
  %v1148 = vpop.f32.mrb[0].mxu0
  %v1149 = vadd.f32 %v725, %v1148
  %v1150 = vpop.f32.mrb[0].mxu0
  %1151 = vmatprep.mubr.bf16.mxu0 0
  %1152 = vmatmul.mubr.bf16.gmra.mrb[0].mxu0 %v874
  %v1153 = vpop.f32.mrb[0].mxu0
  %v1154 = vadd.f32 %v725, %v1153
  %v1155 = vpop.f32.mrb[0].mxu0
  %v1156 = vpop.f32.mrb[0].mxu0
  %v1157 = vadd.f32 %v725, %v1156
  %v1158 = vpop.f32.mrb[0].mxu0
  %1159 = vmatprep.mubr.bf16.mxu0 0
  %1160 = vmatmul.mubr.bf16.gmra.mrb[0].mxu0 %v875
  %v1161 = vpop.f32.mrb[0].mxu0
  %v1162 = vadd.f32 %v725, %v1161
  %v1163 = vpop.f32.mrb[0].mxu0
  %v1164 = vpop.f32.mrb[0].mxu0
  %v1165 = vadd.f32 %v725, %v1164
  %v1166 = vpop.f32.mrb[0].mxu0
  %1167 = vmatprep.mubr.bf16.mxu0 0
  %1168 = vmatmul.mubr.bf16.gmra.mrb[0].mxu0 %v876
  %v1169 = vpop.f32.mrb[0].mxu0
  %v1170 = vadd.f32 %v725, %v1169
  %v1171 = vpop.f32.mrb[0].mxu0
  %v1172 = vpop.f32.mrb[0].mxu0
  %v1173 = vadd.f32 %v725, %v1172
  %v1174 = vpop.f32.mrb[0].mxu0
  %1175 = vmatprep.mubr.bf16.mxu0 0
  %1176 = vmatmul.mubr.bf16.gmra.mrb[0].mxu0 %v877
  %v1177 = vpop.f32.mrb[0].mxu0
  %v1178 = vadd.f32 %v725, %v1177
  %v1179 = vpop.f32.mrb[0].mxu0
  %v1180 = vpop.f32.mrb[0].mxu0
  %v1181 = vadd.f32 %v725, %v1180
  %v1182 = vpop.f32.mrb[0].mxu0
  %1183 = vmatprep.mubr.bf16.mxu0 0
  %1184 = vmatmul.mubr.bf16.gmra.mrb[0].mxu0 %v878
  %v1185 = vpop.f32.mrb[0].mxu0
  %v1186 = vadd.f32 %v725, %v1185
  %v1187 = vpop.f32.mrb[0].mxu0
  %v1188 = vpop.f32.mrb[0].mxu0
  %v1189 = vadd.f32 %v725, %v1188
  %v1190 = vpop.f32.mrb[0].mxu0
  %1191 = vmatprep.mubr.bf16.mxu0 0
  %1192 = vmatmul.mubr.bf16.gmra.mrb[0].mxu0 %v879
  %v1193 = vpop.f32.mrb[0].mxu0
  %v1194 = vadd.f32 %v725, %v1193
  %v1195 = vpop.f32.mrb[0].mxu0
  %v1196 = vpop.f32.mrb[0].mxu0
  %v1197 = vadd.f32 %v725, %v1196
  %v1198 = vpop.f32.mrb[0].mxu0
  %1199 = vmatprep.mubr.bf16.mxu0 0
  %1200 = vmatmul.mubr.bf16.gmra.mrb[0].mxu0 %v880
  %v1201 = vpop.f32.mrb[0].mxu0
  %v1202 = vadd.f32 %v725, %v1201
  %v1203 = vpop.f32.mrb[0].mxu0
  %v1204 = vpop.f32.mrb[0].mxu0
  %v1205 = vadd.f32 %v725, %v1204
  %v1206 = vpop.f32.mrb[0].mxu0
  %1207 = vmatprep.mubr.bf16.mxu0 0
  %1208 = vmatmul.mubr.bf16.gmra.mrb[0].mxu0 %v881
  %v1209 = vpop.f32.mrb[0].mxu0
  %v1210 = vadd.f32 %v725, %v1209
  %v1211 = vpop.f32.mrb[0].mxu0
  %v1212 = vpop.f32.mrb[0].mxu0
  %v1213 = vadd.f32 %v725, %v1212
  %v1214 = vpop.f32.mrb[0].mxu0
  %1215 = vmatprep.mubr.bf16.mxu0 0
  %1216 = vmatmul.mubr.bf16.gmra.mrb[0].mxu0 %v882
  %v1217 = vpop.f32.mrb[0].mxu0
  %v1218 = vadd.f32 %v725, %v1217
  %v1219 = vpop.f32.mrb[0].mxu0
  %v1220 = vpop.f32.mrb[0].mxu0
  %v1221 = vadd.f32 %v725, %v1220
  %v1222 = vpop.f32.mrb[0].mxu0
  %1223 = vmatprep.mubr.bf16.mxu0 0
  %1224 = vmatmul.mubr.bf16.gmra.mrb[0].mxu0 %v883
  %v1225 = vpop.f32.mrb[0].mxu0
  %v1226 = vadd.f32 %v725, %v1225
  %v1227 = vpop.f32.mrb[0].mxu0
  %v1228 = vpop.f32.mrb[0].mxu0
  %v1229 = vadd.f32 %v725, %v1228
  %v1230 = vpop.f32.mrb[0].mxu0
  %1231 = vmatprep.mubr.bf16.mxu0 0
  %1232 = vmatmul.mubr.bf16.gmra.mrb[0].mxu0 %v884
  %v1233 = vpop.f32.mrb[0].mxu0
  %v1234 = vadd.f32 %v725, %v1233
  %v1235 = vpop.f32.mrb[0].mxu0
  %v1236 = vpop.f32.mrb[0].mxu0
  %v1237 = vadd.f32 %v725, %v1236
  %v1238 = vpop.f32.mrb[0].mxu0
  %1239 = vmatprep.mubr.bf16.mxu0 0
  %1240 = vmatmul.mubr.bf16.gmra.mrb[0].mxu0 %v885
  %v1241 = vpop.f32.mrb[0].mxu0
  %v1242 = vadd.f32 %v725, %v1241
  %v1243 = vpop.f32.mrb[0].mxu0
  %v1244 = vpop.f32.mrb[0].mxu0
  %v1245 = vadd.f32 %v725, %v1244
  %v1246 = vpop.f32.mrb[0].mxu0
  %1247 = vmatprep.mubr.bf16.mxu0 0
  %1248 = vmatmul.mubr.bf16.gmra.mrb[0].mxu0 %v886
  %v1249 = vpop.f32.mrb[0].mxu0
  %v1250 = vadd.f32 %v725, %v1249
  %v1251 = vpop.f32.mrb[0].mxu0
  %v1252 = vpop.f32.mrb[0].mxu0
  %v1253 = vadd.f32 %v725, %v1252
  %v1254 = vpop.f32.mrb[0].mxu0
  %1255 = vdwg.mxu0
  %v1256 = vadd.f32 %v386, %v1002
  %v1257 = vadd.f32 %v389, %v1005
  %v1258 = vadd.f32 %v394, %v1010
  %v1259 = vadd.f32 %v397, %v1013
  %v1260 = vadd.f32 %v402, %v1018
  %v1261 = vadd.f32 %v405, %v1021
  %v1262 = vadd.f32 %v410, %v1026
  %v1263 = vadd.f32 %v413, %v1029
  %v1264 = vadd.f32 %v418, %v1034
  %v1265 = vadd.f32 %v421, %v1037
  %v1266 = vadd.f32 %v426, %v1042
  %v1267 = vadd.f32 %v429, %v1045
  %v1268 = vadd.f32 %v434, %v1050
  %v1269 = vadd.f32 %v437, %v1053
  %v1270 = vadd.f32 %v442, %v1058
  %v1271 = vadd.f32 %v445, %v1061
  %v1272 = vadd.f32 %v450, %v1066
  %v1273 = vadd.f32 %v453, %v1069
  %v1274 = vadd.f32 %v458, %v1074
  %v1275 = vadd.f32 %v461, %v1077
  %v1276 = vadd.f32 %v466, %v1082
  %v1277 = vadd.f32 %v469, %v1085
  %v1278 = vadd.f32 %v474, %v1090
  %v1279 = vadd.f32 %v477, %v1093
  %v1280 = vadd.f32 %v482, %v1098
  %v1281 = vadd.f32 %v485, %v1101
  %v1282 = vadd.f32 %v490, %v1106
  %v1283 = vadd.f32 %v493, %v1109
  %v1284 = vadd.f32 %v498, %v1114
  %v1285 = vadd.f32 %v501, %v1117
  %v1286 = vadd.f32 %v506, %v1122
  %v1287 = vadd.f32 %v509, %v1125
  %v1288 = vadd.f32 %v514, %v1130
  %v1289 = vadd.f32 %v517, %v1133
  %v1290 = vadd.f32 %v522, %v1138
  %v1291 = vadd.f32 %v525, %v1141
  %v1292 = vadd.f32 %v530, %v1146
  %v1293 = vadd.f32 %v533, %v1149
  %v1294 = vadd.f32 %v538, %v1154
  %v1295 = vadd.f32 %v541, %v1157
  %v1296 = vadd.f32 %v546, %v1162
  %v1297 = vadd.f32 %v549, %v1165
  %v1298 = vadd.f32 %v554, %v1170
  %v1299 = vadd.f32 %v557, %v1173
  %v1300 = vadd.f32 %v562, %v1178
  %v1301 = vadd.f32 %v565, %v1181
  %v1302 = vadd.f32 %v570, %v1186
  %v1303 = vadd.f32 %v573, %v1189
  %v1304 = vadd.f32 %v578, %v1194
  %v1305 = vadd.f32 %v581, %v1197
  %v1306 = vadd.f32 %v586, %v1202
  %v1307 = vadd.f32 %v589, %v1205
  %v1308 = vadd.f32 %v594, %v1210
  %v1309 = vadd.f32 %v597, %v1213
  %v1310 = vadd.f32 %v602, %v1218
  %v1311 = vadd.f32 %v605, %v1221
  %v1312 = vadd.f32 %v610, %v1226
  %v1313 = vadd.f32 %v613, %v1229
  %v1314 = vadd.f32 %v618, %v1234
  %v1315 = vadd.f32 %v621, %v1237
  %v1316 = vadd.f32 %v626, %v1242
  %v1317 = vadd.f32 %v629, %v1245
  %v1318 = vadd.f32 %v634, %v1250
  %v1319 = vadd.f32 %v637, %v1253
  %v1320 = vmax.f32 %v1256, 0.0
  %v1321 = vmax.f32 %v1257, 0.0
  %v1322 = vmax.f32 %v1258, 0.0
  %v1323 = vmax.f32 %v1259, 0.0
  %v1324 = vmax.f32 %v1260, 0.0
  %v1325 = vmax.f32 %v1261, 0.0
  %v1326 = vmax.f32 %v1262, 0.0
  %v1327 = vmax.f32 %v1263, 0.0
  %v1328 = vmax.f32 %v1264, 0.0
  %v1329 = vmax.f32 %v1265, 0.0
  %v1330 = vmax.f32 %v1266, 0.0
  %v1331 = vmax.f32 %v1267, 0.0
  %v1332 = vmax.f32 %v1268, 0.0
  %v1333 = vmax.f32 %v1269, 0.0
  %v1334 = vmax.f32 %v1270, 0.0
  %v1335 = vmax.f32 %v1271, 0.0
  %v1336 = vmax.f32 %v1272, 0.0
  %v1337 = vmax.f32 %v1273, 0.0
  %v1338 = vmax.f32 %v1274, 0.0
  %v1339 = vmax.f32 %v1275, 0.0
  %v1340 = vmax.f32 %v1276, 0.0
  %v1341 = vmax.f32 %v1277, 0.0
  %v1342 = vmax.f32 %v1278, 0.0
  %v1343 = vmax.f32 %v1279, 0.0
  %v1344 = vmax.f32 %v1280, 0.0
  %v1345 = vmax.f32 %v1281, 0.0
  %v1346 = vmax.f32 %v1282, 0.0
  %v1347 = vmax.f32 %v1283, 0.0
  %v1348 = vmax.f32 %v1284, 0.0
  %v1349 = vmax.f32 %v1285, 0.0
  %v1350 = vmax.f32 %v1286, 0.0
  %v1351 = vmax.f32 %v1287, 0.0
  %v1352 = vmax.f32 %v1288, 0.0
  %v1353 = vmax.f32 %v1289, 0.0
  %v1354 = vmax.f32 %v1290, 0.0
  %v1355 = vmax.f32 %v1291, 0.0
  %v1356 = vmax.f32 %v1292, 0.0
  %v1357 = vmax.f32 %v1293, 0.0
  %v1358 = vmax.f32 %v1294, 0.0
  %v1359 = vmax.f32 %v1295, 0.0
  %v1360 = vmax.f32 %v1296, 0.0
  %v1361 = vmax.f32 %v1297, 0.0
  %v1362 = vmax.f32 %v1298, 0.0
  %v1363 = vmax.f32 %v1299, 0.0
  %v1364 = vmax.f32 %v1300, 0.0
  %v1365 = vmax.f32 %v1301, 0.0
  %v1366 = vmax.f32 %v1302, 0.0
  %v1367 = vmax.f32 %v1303, 0.0
  %v1368 = vmax.f32 %v1304, 0.0
  %v1369 = vmax.f32 %v1305, 0.0
  %v1370 = vmax.f32 %v1306, 0.0
  %v1371 = vmax.f32 %v1307, 0.0
  %v1372 = vmax.f32 %v1308, 0.0
  %v1373 = vmax.f32 %v1309, 0.0
  %v1374 = vmax.f32 %v1310, 0.0
  %v1375 = vmax.f32 %v1311, 0.0
  %v1376 = vmax.f32 %v1312, 0.0
  %v1377 = vmax.f32 %v1313, 0.0
  %v1378 = vmax.f32 %v1314, 0.0
  %v1379 = vmax.f32 %v1315, 0.0
  %v1380 = vmax.f32 %v1316, 0.0
  %v1381 = vmax.f32 %v1317, 0.0
  %v1382 = vmax.f32 %v1318, 0.0
  %v1383 = vmax.f32 %v1319, 0.0
  %1384 = vst [vmem:[%s6] sm:$0xff] %v1320
  %1385 = vst [vmem:[%s6 + $0x8] sm:$0xff] %v1321
  %1386 = vst [vmem:[%s6 + $0x10] sm:$0xff] %v1322
  %1387 = vst [vmem:[%s6 + $0x18] sm:$0xff] %v1323
  %1388 = vst [vmem:[%s6 + $0x20] sm:$0xff] %v1324
  %1389 = vst [vmem:[%s6 + $0x28] sm:$0xff] %v1325
  %1390 = vst [vmem:[%s6 + $0x30] sm:$0xff] %v1326
  %1391 = vst [vmem:[%s6 + $0x38] sm:$0xff] %v1327
  %1392 = vst [vmem:[%s6 + $0x40] sm:$0xff] %v1328
  %1393 = vst [vmem:[%s6 + $0x48] sm:$0xff] %v1329
  %1394 = vst [vmem:[%s6 + $0x50] sm:$0xff] %v1330
  %1395 = vst [vmem:[%s6 + $0x58] sm:$0xff] %v1331
  %1396 = vst [vmem:[%s6 + $0x60] sm:$0xff] %v1332
  %1397 = vst [vmem:[%s6 + $0x68] sm:$0xff] %v1333
  %1398 = vst [vmem:[%s6 + $0x70] sm:$0xff] %v1334
  %1399 = vst [vmem:[%s6 + $0x78] sm:$0xff] %v1335
  %1400 = vst [vmem:[%s6 + $0x80] sm:$0xff] %v1336
  %1401 = vst [vmem:[%s6 + $0x88] sm:$0xff] %v1337
  %1402 = vst [vmem:[%s6 + $0x90] sm:$0xff] %v1338
  %1403 = vst [vmem:[%s6 + $0x98] sm:$0xff] %v1339
  %1404 = vst [vmem:[%s6 + $0xa0] sm:$0xff] %v1340
  %1405 = vst [vmem:[%s6 + $0xa8] sm:$0xff] %v1341
  %1406 = vst [vmem:[%s6 + $0xb0] sm:$0xff] %v1342
  %1407 = vst [vmem:[%s6 + $0xb8] sm:$0xff] %v1343
  %1408 = vst [vmem:[%s6 + $0xc0] sm:$0xff] %v1344
  %1409 = vst [vmem:[%s6 + $0xc8] sm:$0xff] %v1345
  %1410 = vst [vmem:[%s6 + $0xd0] sm:$0xff] %v1346
  %1411 = vst [vmem:[%s6 + $0xd8] sm:$0xff] %v1347
  %1412 = vst [vmem:[%s6 + $0xe0] sm:$0xff] %v1348
  %1413 = vst [vmem:[%s6 + $0xe8] sm:$0xff] %v1349
  %1414 = vst [vmem:[%s6 + $0xf0] sm:$0xff] %v1350
  %1415 = vst [vmem:[%s6 + $0xf8] sm:$0xff] %v1351
  %1416 = vst [vmem:[%s6 + $0x100] sm:$0xff] %v1352
  %1417 = vst [vmem:[%s6 + $0x108] sm:$0xff] %v1353
  %1418 = vst [vmem:[%s6 + $0x110] sm:$0xff] %v1354
  %1419 = vst [vmem:[%s6 + $0x118] sm:$0xff] %v1355
  %1420 = vst [vmem:[%s6 + $0x120] sm:$0xff] %v1356
  %1421 = vst [vmem:[%s6 + $0x128] sm:$0xff] %v1357
  %1422 = vst [vmem:[%s6 + $0x130] sm:$0xff] %v1358
  %1423 = vst [vmem:[%s6 + $0x138] sm:$0xff] %v1359
  %1424 = vst [vmem:[%s6 + $0x140] sm:$0xff] %v1360
  %1425 = vst [vmem:[%s6 + $0x148] sm:$0xff] %v1361
  %1426 = vst [vmem:[%s6 + $0x150] sm:$0xff] %v1362
  %1427 = vst [vmem:[%s6 + $0x158] sm:$0xff] %v1363
  %1428 = vst [vmem:[%s6 + $0x160] sm:$0xff] %v1364
  %1429 = vst [vmem:[%s6 + $0x168] sm:$0xff] %v1365
  %1430 = vst [vmem:[%s6 + $0x170] sm:$0xff] %v1366
  %1431 = vst [vmem:[%s6 + $0x178] sm:$0xff] %v1367
  %1432 = vst [vmem:[%s6 + $0x180] sm:$0xff] %v1368
  %1433 = vst [vmem:[%s6 + $0x188] sm:$0xff] %v1369
  %1434 = vst [vmem:[%s6 + $0x190] sm:$0xff] %v1370
  %1435 = vst [vmem:[%s6 + $0x198] sm:$0xff] %v1371
  %1436 = vst [vmem:[%s6 + $0x1a0] sm:$0xff] %v1372
  %1437 = vst [vmem:[%s6 + $0x1a8] sm:$0xff] %v1373
  %1438 = vst [vmem:[%s6 + $0x1b0] sm:$0xff] %v1374
  %1439 = vst [vmem:[%s6 + $0x1b8] sm:$0xff] %v1375
  %1440 = vst [vmem:[%s6 + $0x1c0] sm:$0xff] %v1376
  %1441 = vst [vmem:[%s6 + $0x1c8] sm:$0xff] %v1377
  %1442 = vst [vmem:[%s6 + $0x1d0] sm:$0xff] %v1378
  %1443 = vst [vmem:[%s6 + $0x1d8] sm:$0xff] %v1379
  %1444 = vst [vmem:[%s6 + $0x1e0] sm:$0xff] %v1380
  %1445 = vst [vmem:[%s6 + $0x1e8] sm:$0xff] %v1381
  %1446 = vst [vmem:[%s6 + $0x1f0] sm:$0xff] %v1382
  %1447 = vst [vmem:[%s6 + $0x1f8] sm:$0xff] %v1383
  // Predicated region
  $region26: #{_lambda_.5} parent=0 // pred_check
    _
  $region27: #{_lambda_.5} parent=0 // pred_check_branch
    %1449 = sbr.rel (0) target = $region29
  $region28: #{_lambda_.5} parent=0 // pred_region
    _
  $region29: #{_lambda_.5} parent=0 // pred_fallthru
    _
  // Predicated region
  $region30: #{_lambda_.5} parent=0 // pred_check
    _
  $region31: #{_lambda_.5} parent=0 // pred_check_branch
    %1451 = sbr.rel (0) target = $region33
  $region32: #{_lambda_.5} parent=0 // pred_region
    _
  $region33: #{_lambda_.5} parent=0 // pred_fallthru
    _

// kernel: _lambda_.4
$region0: #{_lambda_.4}
  #allocation0 [shape = 'u32[]', space=smem, size = 0x4, offset = 0x4, fixed_abs, tag = 'smem constant byte address 0x4 - core index']
  #allocation1 [shape = 'u32[144,128]{1,0:T(1,128)}', space=vmem, size = 0x12000, scoped, tag = 'internal scratch']
  %s0 = inlined_call_operand.vmem [shape: bf16[2,18,18,128], index: 0, kind: input, shape index: {}]
  %s1 = inlined_call_operand.vmem [shape: bf16[9,128,128], index: 1, kind: input, shape index: {}]
  %s2 = inlined_call_operand.vmem [shape: f32[1,128], index: 2, kind: input, shape index: {}]
  %s3 = inlined_call_operand.vmem [shape: bf16[2,256,128], index: 3, kind: output, shape index: {}]
  %s4 = sld [smem:[#allocation0]]
  $region45: #{_lambda_.4} parent=0
    _
  %s6 = ssub.s32 1, %s4
  %s7 = scalar_select 0, %s6, %s4
  loop: start=0, step=1, limit=4
  $region2: #{_lambda_.4} parent=0 // loop_pre_header
    _
  $region3: #{_lambda_.4} parent=0 // loop_header
    %s9 = sphi 0, %s13
    %p10 = scmp.ge.s32.totalorder %s9, 4
    %s19 = sphi 0, %s21
    %s22 = sphi 0, %s19
    %s23 = sphi 0, %s22
    %s39 = sphi 0, %s23
    %s43 = sphi 0, %s43
    %s45 = sphi 0, %s43
    %s46 = sphi 0, %s45
    %s60 = sphi 0, %s46
    %s64 = sphi 0, %s64
    %s66 = sphi 0, %s64
    %s67 = sphi 0, %s66
    %s81 = sphi 0, %s67
    %s87 = sphi 0, %s89
    %s90 = sphi 0, %s87
    %s91 = sphi 0, %s90
    %s107 = sphi 0, %s91
  $region4: #{_lambda_.4} parent=0 // loop_header_branch
    %12 = sbr.rel (%p10) target = $region8
  $region5: #{_lambda_.4} parent=0 // loop_body
    %s14 = ssub.s32 %s9, 1
    %s15 = ssub.s32 %s9, 2
    %s16 = sadd.s32 %s9, 1
    %s17 = ssub.s32 %s9, %s16
    %p18 = scmp.eq.s32.totalorder %s17, 0
    %s20 = sadd.s32 %s19, 1
    %s21 = scalar_select %p18, %s19, %s20
    %p24 = pneg %p18
    %p25 = scmp.eq.s32.totalorder %s9, 1
    %p26 = por %p24, %p25
    %p27 = scmp.ne.s32.totalorder %s19, %s22
    %p28 = scmp.eq.s32.totalorder %s9, 0
    %p29 = por %p27, %p28
    %p30 = scmp.ne.s32.totalorder %s19, %s22
    %p31 = scmp.eq.s32.totalorder %s14, 1
    %p32 = por %p30, %p31
    %p33 = scmp.ne.s32.totalorder %s22, %s23
    %p34 = scmp.eq.s32.totalorder %s14, 0
    %p35 = por %p33, %p34
    %p36 = scmp.ne.s32.totalorder %s22, %s23
    %p37 = scmp.eq.s32.totalorder %s15, 1
    %p38 = por %p36, %p37
    %p40 = scmp.ne.s32.totalorder %s23, %s39
    %p41 = scmp.eq.s32.totalorder %s15, 0
    %p42 = por %p40, %p41
    %s44 = sadd.s32 %s43, 1
    %p47 = scmp.eq.s32.totalorder %s9, 1
    %p48 = scmp.ne.s32.totalorder %s43, %s45
    %p49 = scmp.eq.s32.totalorder %s9, 0
    %p50 = por %p48, %p49
    %p51 = scmp.ne.s32.totalorder %s43, %s45
    %p52 = scmp.eq.s32.totalorder %s14, 1
    %p53 = por %p51, %p52
    %p54 = scmp.ne.s32.totalorder %s45, %s46
    %p55 = scmp.eq.s32.totalorder %s14, 0
    %p56 = por %p54, %p55
    %p57 = scmp.ne.s32.totalorder %s45, %s46
    %p58 = scmp.eq.s32.totalorder %s15, 1
    %p59 = por %p57, %p58
    %p61 = scmp.ne.s32.totalorder %s46, %s60
    %p62 = scmp.eq.s32.totalorder %s15, 0
    %p63 = por %p61, %p62
    %s65 = sadd.s32 %s64, 1
    %p68 = scmp.eq.s32.totalorder %s9, 1
    %p69 = scmp.ne.s32.totalorder %s64, %s66
    %p70 = scmp.eq.s32.totalorder %s9, 0
    %p71 = por %p69, %p70
    %p72 = scmp.ne.s32.totalorder %s64, %s66
    %p73 = scmp.eq.s32.totalorder %s14, 1
    %p74 = por %p72, %p73
    %p75 = scmp.ne.s32.totalorder %s66, %s67
    %p76 = scmp.eq.s32.totalorder %s14, 0
    %p77 = por %p75, %p76
    %p78 = scmp.ne.s32.totalorder %s66, %s67
    %p79 = scmp.eq.s32.totalorder %s15, 1
    %p80 = por %p78, %p79
    %p82 = scmp.ne.s32.totalorder %s67, %s81
    %p83 = scmp.eq.s32.totalorder %s15, 0
    %p84 = por %p82, %p83
    %s85 = ssub.s32 %s9, %s16
    %p86 = scmp.eq.s32.totalorder %s85, 0
    %s88 = sadd.s32 %s87, 1
    %s89 = scalar_select %p86, %s87, %s88
    %p92 = pneg %p86
    %p93 = scmp.eq.s32.totalorder %s9, 1
    %p94 = por %p92, %p93
    %p95 = scmp.ne.s32.totalorder %s87, %s90
    %p96 = scmp.eq.s32.totalorder %s9, 0
    %p97 = por %p95, %p96
    %p98 = scmp.ne.s32.totalorder %s87, %s90
    %p99 = scmp.eq.s32.totalorder %s14, 1
    %p100 = por %p98, %p99
    %p101 = scmp.ne.s32.totalorder %s90, %s91
    %p102 = scmp.eq.s32.totalorder %s14, 0
    %p103 = por %p101, %p102
    %p104 = scmp.ne.s32.totalorder %s90, %s91
    %p105 = scmp.eq.s32.totalorder %s15, 1
    %p106 = por %p104, %p105
    %p108 = scmp.ne.s32.totalorder %s91, %s107
    %p109 = scmp.eq.s32.totalorder %s15, 0
    %p110 = por %p108, %p109
    %p111 = scmp.le.s32.totalorder 1, %s9
    %p112 = scmp.lt.s32.totalorder %s9, 3
    %p113 = pnand %p111, %p112
    %p114 = pneg %p113
    // Predicated region
    $region9: #{_lambda_.4} parent=5 // pred_check
      _
    $region10: #{_lambda_.4} parent=5 // pred_check_branch
      %116 = sbr.rel (%p113) target = $region12
    $region11: #{_lambda_.4} parent=5 // pred_region
      %s117 = ssub.s32 %s9, 1
      // Predicated region
      $region13: #{_lambda_.4} parent=11 // pred_check
        %p118 = pneg %p56
      $region14: #{_lambda_.4} parent=11 // pred_check_branch
        %120 = sbr.rel (%p118) target = $region16
      $region15: #{_lambda_.4} parent=11 // pred_region
        _
      $region16: #{_lambda_.4} parent=11 // pred_fallthru
        _
      // Predicated region
      $region17: #{_lambda_.4} parent=11 // pred_check
        %p121 = pneg %p77
      $region18: #{_lambda_.4} parent=11 // pred_check_branch
        %123 = sbr.rel (%p121) target = $region20
      $region19: #{_lambda_.4} parent=11 // pred_region
        _
      $region20: #{_lambda_.4} parent=11 // pred_fallthru
        _
    $region12: #{_lambda_.4} parent=5 // pred_fallthru
      _
    %p124 = scmp.lt.s32.totalorder %s9, 2
    // Predicated region
    $region21: #{_lambda_.4} parent=5 // pred_check
      %p125 = pneg %p124
    $region22: #{_lambda_.4} parent=5 // pred_check_branch
      %127 = sbr.rel (%p125) target = $region24
    $region23: #{_lambda_.4} parent=5 // pred_region
      // Predicated region
      $region25: #{_lambda_.4} parent=23 // pred_check
        %p128 = pneg %p29
      $region26: #{_lambda_.4} parent=23 // pred_check_branch
        %130 = sbr.rel (%p128) target = $region28
      $region27: #{_lambda_.4} parent=23 // pred_region
        %p131 = scmp.lt.s32.totalorder %s9, 1
        %s132 = scalar_select %p131, %s9, 1
        %s133 = smul.addr %s132, 54
        %s134 = smul.addr %s133, 4
        %s135 = scalar_lea.vmem %s0, %s134
      $region28: #{_lambda_.4} parent=23 // pred_fallthru
        _
    $region24: #{_lambda_.4} parent=5 // pred_fallthru
      _
    %p136 = scmp.le.s32.totalorder 1, %s9
    %p137 = scmp.lt.s32.totalorder %s9, 3
    %p138 = pnand %p136, %p137
    %p139 = pneg %p138
    // Predicated region
    $region29: #{_lambda_.4} parent=5 // pred_check
      _
    $region30: #{_lambda_.4} parent=5 // pred_check_branch
      %141 = sbr.rel (%p138) target = $region32
    $region31: #{_lambda_.4} parent=5 // pred_region
      %s142 = ssub.s32 %s9, 1
      %p143 = scmp.lt.s32.totalorder %s14, 1
      %s144 = scalar_select %p143, %s14, 1
      %s145 = smul.addr %s144, 54
      %s146 = smul.addr %s145, 4
      %s147 = scalar_lea.vmem %s0, %s146
      %p148 = pneg %p35
      %p149 = pneg %p32
      %p150 = pneg %p56
      %p151 = pneg %p53
      %p152 = pneg %p77
      %p153 = pneg %p74
      %p154 = pneg %p103
      %p155 = pneg %p100
      %p156 = scmp.lt.s32.totalorder %s14, 1
      %s157 = scalar_select %p156, %s14, 1
      %s158 = smul.addr %s157, 32
      %s159 = smul.addr %s158, 4
      %s160 = scalar_lea.vmem %s3, %s159
      %p161 = scmp.lt.s32.totalorder %s14, 1
      %s162 = scalar_select %p161, %s14, 1
      %s163 = smul.addr %s162, 54
      %s164 = smul.addr %s163, 4
      %s165 = scalar_lea.vmem %s0, %s164
      %p166 = scmp.lt.s32.totalorder %s14, 1
      %s167 = scalar_select %p166, %s14, 1
      %s168 = smul.addr %s167, 32
      %s169 = smul.addr %s168, 4
      %s170 = scalar_lea.vmem %s3, %s169
      %v172 = vld [vmem:[%s165] sm:$0xf]
      %v173 = vld [vmem:[%s165 + $0x4] sm:$0xf]
      %v174 = vld [vmem:[%s165 + $0x8] sm:$0x1]
      %v175 = vld [vmem:[%s165 + $0xc] sm:$0xf]
      %v176 = vld [vmem:[%s165 + $0x10] sm:$0xf]
      %v177 = vld [vmem:[%s165 + $0x14] sm:$0x1]
      %v178 = vld [vmem:[%s165 + $0x18] sm:$0xf]
      %v179 = vld [vmem:[%s165 + $0x1c] sm:$0xf]
      %v180 = vld [vmem:[%s165 + $0x20] sm:$0x1]
      %v181 = vld [vmem:[%s165 + $0x24] sm:$0xf]
      %v182 = vld [vmem:[%s165 + $0x28] sm:$0xf]
      %v183 = vld [vmem:[%s165 + $0x2c] sm:$0x1]
      %v184 = vld [vmem:[%s165 + $0x30] sm:$0xf]
      %v185 = vld [vmem:[%s165 + $0x34] sm:$0xf]
      %v186 = vld [vmem:[%s165 + $0x38] sm:$0x1]
      %v187 = vld [vmem:[%s165 + $0x3c] sm:$0xf]
      %v188 = vld [vmem:[%s165 + $0x40] sm:$0xf]
      %v189 = vld [vmem:[%s165 + $0x44] sm:$0x1]
      %v190 = vld [vmem:[%s165 + $0x48] sm:$0xf]
      %v191 = vld [vmem:[%s165 + $0x4c] sm:$0xf]
      %v192 = vld [vmem:[%s165 + $0x50] sm:$0x1]
      %v193 = vld [vmem:[%s165 + $0x54] sm:$0xf]
      %v194 = vld [vmem:[%s165 + $0x58] sm:$0xf]
      %v195 = vld [vmem:[%s165 + $0x5c] sm:$0x1]
      %v196 = vld [vmem:[%s165 + $0x60] sm:$0xf]
      %v197 = vld [vmem:[%s165 + $0x64] sm:$0xf]
      %v198 = vld [vmem:[%s165 + $0x68] sm:$0x1]
      %v199 = vld [vmem:[%s165 + $0x6c] sm:$0xf]
      %v200 = vld [vmem:[%s165 + $0x70] sm:$0xf]
      %v201 = vld [vmem:[%s165 + $0x74] sm:$0x1]
      %v202 = vld [vmem:[%s165 + $0x78] sm:$0xf]
      %v203 = vld [vmem:[%s165 + $0x7c] sm:$0xf]
      %v204 = vld [vmem:[%s165 + $0x80] sm:$0x1]
      %v205 = vld [vmem:[%s165 + $0x84] sm:$0xf]
      %v206 = vld [vmem:[%s165 + $0x88] sm:$0xf]
      %v207 = vld [vmem:[%s165 + $0x8c] sm:$0x1]
      %v208 = vld [vmem:[%s165 + $0x90] sm:$0xf]
      %v209 = vld [vmem:[%s165 + $0x94] sm:$0xf]
      %v210 = vld [vmem:[%s165 + $0x98] sm:$0x1]
      %v211 = vld [vmem:[%s165 + $0x9c] sm:$0xf]
      %v212 = vld [vmem:[%s165 + $0xa0] sm:$0xf]
      %v213 = vld [vmem:[%s165 + $0xa4] sm:$0x1]
      %v214 = vld [vmem:[%s165 + $0xa8] sm:$0xf]
      %v215 = vld [vmem:[%s165 + $0xac] sm:$0xf]
      %v216 = vld [vmem:[%s165 + $0xb0] sm:$0x1]
      %v217 = vld [vmem:[%s165 + $0xb4] sm:$0xf]
      %v218 = vld [vmem:[%s165 + $0xb8] sm:$0xf]
      %v219 = vld [vmem:[%s165 + $0xbc] sm:$0x1]
      %v220 = vld [vmem:[%s165 + $0xc0] sm:$0xf]
      %v221 = vld [vmem:[%s165 + $0xc4] sm:$0xf]
      %v222 = vld [vmem:[%s165 + $0xc8] sm:$0x1]
      %v223 = vld [vmem:[%s165 + $0xcc] sm:$0xf]
      %v224 = vld [vmem:[%s165 + $0xd0] sm:$0xf]
      %v225 = vld [vmem:[%s165 + $0xd4] sm:$0x1]
      %v226 = vld [vmem:[%s1] sm:$0xf]
      %v227 = vld [vmem:[%s1 + $0x4] sm:$0xf]
      %v228 = vld [vmem:[%s1 + $0x8] sm:$0xf]
      %v229 = vld [vmem:[%s1 + $0xc] sm:$0xf]
      %v230 = vld [vmem:[%s1 + $0x10] sm:$0xf]
      %v231 = vld [vmem:[%s1 + $0x14] sm:$0xf]
      %v232 = vld [vmem:[%s1 + $0x18] sm:$0xf]
      %v233 = vld [vmem:[%s1 + $0x1c] sm:$0xf]
      %v234 = vld [vmem:[%s1 + $0x20] sm:$0xf]
      %v235 = vld [vmem:[%s1 + $0x24] sm:$0xf]
      %v236 = vld [vmem:[%s1 + $0x28] sm:$0xf]
      %v237 = vld [vmem:[%s1 + $0x2c] sm:$0xf]
      %v238 = vld [vmem:[%s1 + $0x30] sm:$0xf]
      %v239 = vld [vmem:[%s1 + $0x34] sm:$0xf]
      %v240 = vld [vmem:[%s1 + $0x38] sm:$0xf]
      %v241 = vld [vmem:[%s1 + $0x3c] sm:$0xf]
      %vm242 = vsmask.f32 3328
      %vm243 = vsmask.f32 7440
      %vm244 = vmor %vm242, %vm243
      %v246 = vshrl.u32 %v172, 16
      %v248 = vrot.slane %v246, 4
      %v249 = vshll.u32 %v172, 16
      %v251 = vrot.slane %v249, 5
      %v252 = vor.u32 %v248, %v251
      %v253 = vrot.slane %v252, 4
      %v255 = vshll.u32 %v173, 16
      %v257 = vrot.slane %v255, 5
      %v258 = vsel %vm244, %v253, %v257
      %v259 = vshrl.u32 %v173, 16
      %v261 = vrot.slane %v259, 4
      %v262 = vor.u32 %v261, %v257
      %v263 = vrot.slane %v262, 4
      %v265 = vshll.u32 %v174, 16
      %v267 = vrot.slane %v265, 5
      %v268 = vsel %vm244, %v263, %v267
      %v270 = vshrl.u32 %v175, 16
      %v272 = vrot.slane %v270, 4
      %v273 = vshll.u32 %v175, 16
      %v275 = vrot.slane %v273, 5
      %v276 = vor.u32 %v272, %v275
      %v277 = vrot.slane %v276, 4
      %v279 = vshll.u32 %v176, 16
      %v281 = vrot.slane %v279, 5
      %v282 = vsel %vm244, %v277, %v281
      %v283 = vshrl.u32 %v176, 16
      %v285 = vrot.slane %v283, 4
      %v286 = vor.u32 %v285, %v281
      %v287 = vrot.slane %v286, 4
      %v289 = vshll.u32 %v177, 16
      %v291 = vrot.slane %v289, 5
      %v292 = vsel %vm244, %v287, %v291
      %v294 = vshrl.u32 %v178, 16
      %v296 = vrot.slane %v294, 4
      %v297 = vshll.u32 %v178, 16
      %v299 = vrot.slane %v297, 5
      %v300 = vor.u32 %v296, %v299
      %v301 = vrot.slane %v300, 4
      %v303 = vshll.u32 %v179, 16
      %v305 = vrot.slane %v303, 5
      %v306 = vsel %vm244, %v301, %v305
      %v307 = vshrl.u32 %v179, 16
      %v309 = vrot.slane %v307, 4
      %v310 = vor.u32 %v309, %v305
      %v311 = vrot.slane %v310, 4
      %v313 = vshll.u32 %v180, 16
      %v315 = vrot.slane %v313, 5
      %v316 = vsel %vm244, %v311, %v315
      %v318 = vshrl.u32 %v181, 16
      %v320 = vrot.slane %v318, 4
      %v321 = vshll.u32 %v181, 16
      %v323 = vrot.slane %v321, 5
      %v324 = vor.u32 %v320, %v323
      %v325 = vrot.slane %v324, 4
      %v327 = vshll.u32 %v182, 16
      %v329 = vrot.slane %v327, 5
      %v330 = vsel %vm244, %v325, %v329
      %v331 = vshrl.u32 %v182, 16
      %v333 = vrot.slane %v331, 4
      %v334 = vor.u32 %v333, %v329
      %v335 = vrot.slane %v334, 4
      %v337 = vshll.u32 %v183, 16
      %v339 = vrot.slane %v337, 5
      %v340 = vsel %vm244, %v335, %v339
      %v342 = vshrl.u32 %v184, 16
      %v344 = vrot.slane %v342, 4
      %v345 = vshll.u32 %v184, 16
      %v347 = vrot.slane %v345, 5
      %v348 = vor.u32 %v344, %v347
      %v349 = vrot.slane %v348, 4
      %v351 = vshll.u32 %v185, 16
      %v353 = vrot.slane %v351, 5
      %v354 = vsel %vm244, %v349, %v353
      %v355 = vshrl.u32 %v185, 16
      %v357 = vrot.slane %v355, 4
      %v358 = vor.u32 %v357, %v353
      %v359 = vrot.slane %v358, 4
      %v361 = vshll.u32 %v186, 16
      %v363 = vrot.slane %v361, 5
      %v364 = vsel %vm244, %v359, %v363
      %v366 = vshrl.u32 %v187, 16
      %v368 = vrot.slane %v366, 4
      %v369 = vshll.u32 %v187, 16
      %v371 = vrot.slane %v369, 5
      %v372 = vor.u32 %v368, %v371
      %v373 = vrot.slane %v372, 4
      %v375 = vshll.u32 %v188, 16
      %v377 = vrot.slane %v375, 5
      %v378 = vsel %vm244, %v373, %v377
      %v379 = vshrl.u32 %v188, 16
      %v381 = vrot.slane %v379, 4
      %v382 = vor.u32 %v381, %v377
      %v383 = vrot.slane %v382, 4
      %v385 = vshll.u32 %v189, 16
      %v387 = vrot.slane %v385, 5
      %v388 = vsel %vm244, %v383, %v387
      %v390 = vshrl.u32 %v190, 16
      %v392 = vrot.slane %v390, 4
      %v393 = vshll.u32 %v190, 16
      %v395 = vrot.slane %v393, 5
      %v396 = vor.u32 %v392, %v395
      %v397 = vrot.slane %v396, 4
      %v399 = vshll.u32 %v191, 16
      %v401 = vrot.slane %v399, 5
      %v402 = vsel %vm244, %v397, %v401
      %v403 = vshrl.u32 %v191, 16
      %v405 = vrot.slane %v403, 4
      %v406 = vor.u32 %v405, %v401
      %v407 = vrot.slane %v406, 4
      %v409 = vshll.u32 %v192, 16
      %v411 = vrot.slane %v409, 5
      %v412 = vsel %vm244, %v407, %v411
      %v414 = vshrl.u32 %v193, 16
      %v416 = vrot.slane %v414, 4
      %v417 = vshll.u32 %v193, 16
      %v419 = vrot.slane %v417, 5
      %v420 = vor.u32 %v416, %v419
      %v421 = vrot.slane %v420, 4
      %v423 = vshll.u32 %v194, 16
      %v425 = vrot.slane %v423, 5
      %v426 = vsel %vm244, %v421, %v425
      %v427 = vshrl.u32 %v194, 16
      %v429 = vrot.slane %v427, 4
      %v430 = vor.u32 %v429, %v425
      %v431 = vrot.slane %v430, 4
      %v433 = vshll.u32 %v195, 16
      %v435 = vrot.slane %v433, 5
      %v436 = vsel %vm244, %v431, %v435
      %v438 = vshrl.u32 %v196, 16
      %v440 = vrot.slane %v438, 4
      %v441 = vshll.u32 %v196, 16
      %v443 = vrot.slane %v441, 5
      %v444 = vor.u32 %v440, %v443
      %v445 = vrot.slane %v444, 4
      %v447 = vshll.u32 %v197, 16
      %v449 = vrot.slane %v447, 5
      %v450 = vsel %vm244, %v445, %v449
      %v451 = vshrl.u32 %v197, 16
      %v453 = vrot.slane %v451, 4
      %v454 = vor.u32 %v453, %v449
      %v455 = vrot.slane %v454, 4
      %v457 = vshll.u32 %v198, 16
      %v459 = vrot.slane %v457, 5
      %v460 = vsel %vm244, %v455, %v459
      %v462 = vshrl.u32 %v199, 16
      %v464 = vrot.slane %v462, 4
      %v465 = vshll.u32 %v199, 16
      %v467 = vrot.slane %v465, 5
      %v468 = vor.u32 %v464, %v467
      %v469 = vrot.slane %v468, 4
      %v471 = vshll.u32 %v200, 16
      %v473 = vrot.slane %v471, 5
      %v474 = vsel %vm244, %v469, %v473
      %v475 = vshrl.u32 %v200, 16
      %v477 = vrot.slane %v475, 4
      %v478 = vor.u32 %v477, %v473
      %v479 = vrot.slane %v478, 4
      %v481 = vshll.u32 %v201, 16
      %v483 = vrot.slane %v481, 5
      %v484 = vsel %vm244, %v479, %v483
      %v486 = vshrl.u32 %v202, 16
      %v488 = vrot.slane %v486, 4
      %v489 = vshll.u32 %v202, 16
      %v491 = vrot.slane %v489, 5
      %v492 = vor.u32 %v488, %v491
      %v493 = vrot.slane %v492, 4
      %v495 = vshll.u32 %v203, 16
      %v497 = vrot.slane %v495, 5
      %v498 = vsel %vm244, %v493, %v497
      %v499 = vshrl.u32 %v203, 16
      %v501 = vrot.slane %v499, 4
      %v502 = vor.u32 %v501, %v497
      %v503 = vrot.slane %v502, 4
      %v505 = vshll.u32 %v204, 16
      %v507 = vrot.slane %v505, 5
      %v508 = vsel %vm244, %v503, %v507
      %v510 = vshrl.u32 %v205, 16
      %v512 = vrot.slane %v510, 4
      %v513 = vshll.u32 %v205, 16
      %v515 = vrot.slane %v513, 5
      %v516 = vor.u32 %v512, %v515
      %v517 = vrot.slane %v516, 4
      %v519 = vshll.u32 %v206, 16
      %v521 = vrot.slane %v519, 5
      %v522 = vsel %vm244, %v517, %v521
      %v523 = vshrl.u32 %v206, 16
      %v525 = vrot.slane %v523, 4
      %v526 = vor.u32 %v525, %v521
      %v527 = vrot.slane %v526, 4
      %v529 = vshll.u32 %v207, 16
      %v531 = vrot.slane %v529, 5
      %v532 = vsel %vm244, %v527, %v531
      %v534 = vshrl.u32 %v208, 16
      %v536 = vrot.slane %v534, 4
      %v537 = vshll.u32 %v208, 16
      %v539 = vrot.slane %v537, 5
      %v540 = vor.u32 %v536, %v539
      %v541 = vrot.slane %v540, 4
      %v543 = vshll.u32 %v209, 16
      %v545 = vrot.slane %v543, 5
      %v546 = vsel %vm244, %v541, %v545
      %v547 = vshrl.u32 %v209, 16
      %v549 = vrot.slane %v547, 4
      %v550 = vor.u32 %v549, %v545
      %v551 = vrot.slane %v550, 4
      %v553 = vshll.u32 %v210, 16
      %v555 = vrot.slane %v553, 5
      %v556 = vsel %vm244, %v551, %v555
      %v558 = vshrl.u32 %v211, 16
      %v560 = vrot.slane %v558, 4
      %v561 = vshll.u32 %v211, 16
      %v563 = vrot.slane %v561, 5
      %v564 = vor.u32 %v560, %v563
      %v565 = vrot.slane %v564, 4
      %v567 = vshll.u32 %v212, 16
      %v569 = vrot.slane %v567, 5
      %v570 = vsel %vm244, %v565, %v569
      %v571 = vshrl.u32 %v212, 16
      %v573 = vrot.slane %v571, 4
      %v574 = vor.u32 %v573, %v569
      %v575 = vrot.slane %v574, 4
      %v577 = vshll.u32 %v213, 16
      %v579 = vrot.slane %v577, 5
      %v580 = vsel %vm244, %v575, %v579
      %v582 = vshrl.u32 %v214, 16
      %v584 = vrot.slane %v582, 4
      %v585 = vshll.u32 %v214, 16
      %v587 = vrot.slane %v585, 5
      %v588 = vor.u32 %v584, %v587
      %v589 = vrot.slane %v588, 4
      %v591 = vshll.u32 %v215, 16
      %v593 = vrot.slane %v591, 5
      %v594 = vsel %vm244, %v589, %v593
      %v595 = vshrl.u32 %v215, 16
      %v597 = vrot.slane %v595, 4
      %v598 = vor.u32 %v597, %v593
      %v599 = vrot.slane %v598, 4
      %v601 = vshll.u32 %v216, 16
      %v603 = vrot.slane %v601, 5
      %v604 = vsel %vm244, %v599, %v603
      %v606 = vshrl.u32 %v217, 16
      %v608 = vrot.slane %v606, 4
      %v609 = vshll.u32 %v217, 16
      %v611 = vrot.slane %v609, 5
      %v612 = vor.u32 %v608, %v611
      %v613 = vrot.slane %v612, 4
      %v615 = vshll.u32 %v218, 16
      %v617 = vrot.slane %v615, 5
      %v618 = vsel %vm244, %v613, %v617
      %v619 = vshrl.u32 %v218, 16
      %v621 = vrot.slane %v619, 4
      %v622 = vor.u32 %v621, %v617
      %v623 = vrot.slane %v622, 4
      %v625 = vshll.u32 %v219, 16
      %v627 = vrot.slane %v625, 5
      %v628 = vsel %vm244, %v623, %v627
      %s629 = scalar_lea.vmem %s1, 64
      %v630 = vld [vmem:[%s629] sm:$0xf]
      %v631 = vld [vmem:[%s629 + $0x4] sm:$0xf]
      %v632 = vld [vmem:[%s629 + $0x8] sm:$0xf]
      %v633 = vld [vmem:[%s629 + $0xc] sm:$0xf]
      %v634 = vld [vmem:[%s629 + $0x10] sm:$0xf]
      %v635 = vld [vmem:[%s629 + $0x14] sm:$0xf]
      %v636 = vld [vmem:[%s629 + $0x18] sm:$0xf]
      %v637 = vld [vmem:[%s629 + $0x1c] sm:$0xf]
      %v638 = vld [vmem:[%s629 + $0x20] sm:$0xf]
      %v639 = vld [vmem:[%s629 + $0x24] sm:$0xf]
      %v640 = vld [vmem:[%s629 + $0x28] sm:$0xf]
      %v641 = vld [vmem:[%s629 + $0x2c] sm:$0xf]
      %v642 = vld [vmem:[%s629 + $0x30] sm:$0xf]
      %v643 = vld [vmem:[%s629 + $0x34] sm:$0xf]
      %v644 = vld [vmem:[%s629 + $0x38] sm:$0xf]
      %v645 = vld [vmem:[%s629 + $0x3c] sm:$0xf]
      %v646 = vunpack.c.l.b16 %v258
      %v647 = vunpack.c.l.b16 %v268
      %v648 = vunpack.c.l.b16 %v282
      %v649 = vunpack.c.l.b16 %v292
      %v650 = vunpack.c.l.b16 %v306
      %v651 = vunpack.c.l.b16 %v316
      %v652 = vunpack.c.l.b16 %v330
      %v653 = vunpack.c.l.b16 %v340
      %v654 = vunpack.c.l.b16 %v354
      %v655 = vunpack.c.l.b16 %v364
      %v656 = vunpack.c.l.b16 %v378
      %v657 = vunpack.c.l.b16 %v388
      %v658 = vunpack.c.l.b16 %v402
      %v659 = vunpack.c.l.b16 %v412
      %v660 = vunpack.c.l.b16 %v426
      %v661 = vunpack.c.l.b16 %v436
      %v662 = vunpack.c.l.b16 %v450
      %v663 = vunpack.c.l.b16 %v460
      %v664 = vunpack.c.l.b16 %v474
      %v665 = vunpack.c.l.b16 %v484
      %v666 = vunpack.c.l.b16 %v498
      %v667 = vunpack.c.l.b16 %v508
      %v668 = vunpack.c.l.b16 %v522
      %v669 = vunpack.c.l.b16 %v532
      %v670 = vunpack.c.l.b16 %v546
      %v671 = vunpack.c.l.b16 %v556
      %v672 = vunpack.c.l.b16 %v570
      %v673 = vunpack.c.l.b16 %v580
      %v674 = vunpack.c.l.b16 %v594
      %v675 = vunpack.c.l.b16 %v604
      %v676 = vunpack.c.l.b16 %v618
      %v677 = vunpack.c.l.b16 %v628
      %v678 = vpack.c.b16 %v647, %v646
      %v679 = vpack.c.b16 %v649, %v648
      %v680 = vpack.c.b16 %v651, %v650
      %v681 = vpack.c.b16 %v653, %v652
      %v682 = vpack.c.b16 %v655, %v654
      %v683 = vpack.c.b16 %v657, %v656
      %v684 = vpack.c.b16 %v659, %v658
      %v685 = vpack.c.b16 %v661, %v660
      %v686 = vpack.c.b16 %v663, %v662
      %v687 = vpack.c.b16 %v665, %v664
      %v688 = vpack.c.b16 %v667, %v666
      %v689 = vpack.c.b16 %v669, %v668
      %v690 = vpack.c.b16 %v671, %v670
      %v691 = vpack.c.b16 %v673, %v672
      %v692 = vpack.c.b16 %v675, %v674
      %v693 = vpack.c.b16 %v677, %v676
      %v726 = vunpack.c.l.b16 %v630
      %v727 = vunpack.c.l.b16 %v631
      %v728 = vunpack.c.l.b16 %v632
      %v729 = vunpack.c.l.b16 %v633
      %v730 = vunpack.c.l.b16 %v634
      %v731 = vunpack.c.l.b16 %v635
      %v732 = vunpack.c.l.b16 %v636
      %v733 = vunpack.c.l.b16 %v637
      %v734 = vunpack.c.l.b16 %v638
      %v735 = vunpack.c.l.b16 %v639
      %v736 = vunpack.c.l.b16 %v640
      %v737 = vunpack.c.l.b16 %v641
      %v738 = vunpack.c.l.b16 %v642
      %v739 = vunpack.c.l.b16 %v643
      %v740 = vunpack.c.l.b16 %v644
      %v741 = vunpack.c.l.b16 %v645
      %v742 = vpack.c.b16 %v727, %v726
      %v743 = vpack.c.b16 %v729, %v728
      %v744 = vpack.c.b16 %v731, %v730
      %v745 = vpack.c.b16 %v733, %v732
      %v746 = vpack.c.b16 %v735, %v734
      %v747 = vpack.c.b16 %v737, %v736
      %v748 = vpack.c.b16 %v739, %v738
      %v749 = vpack.c.b16 %v741, %v740
      %758 = vmatprep.subr.bf16.mxu0 0
      %759 = vmatpush1.bf16.msra.mxu0 %v742
      %760 = vmatprep.subr.bf16.mxu0 0
      %761 = vmatpush1.bf16.msra.mxu0 %v743
      %762 = vmatprep.subr.bf16.mxu0 0
      %763 = vmatpush1.bf16.msra.mxu0 %v744
      %764 = vmatprep.subr.bf16.mxu0 0
      %765 = vmatpush1.bf16.msra.mxu0 %v745
      %766 = vmatprep.subr.bf16.mxu0 0
      %767 = vmatpush1.bf16.msra.mxu0 %v746
      %768 = vmatprep.subr.bf16.mxu0 0
      %769 = vmatpush1.bf16.msra.mxu0 %v747
      %770 = vmatprep.subr.bf16.mxu0 0
      %771 = vmatpush1.bf16.msra.mxu0 %v748
      %772 = vmatprep.subr.bf16.mxu0 0
      %773 = vmatpush1.bf16.msra.mxu0 %v749
      %774 = vmatprep.subr.bf16.mxu0 0
      %775 = vmatpush1.bf16.msra.mxu0 0
      %776 = vmatprep.subr.bf16.mxu0 0
      %777 = vmatpush1.bf16.msra.mxu0 0
      %778 = vmatprep.subr.bf16.mxu0 0
      %779 = vmatpush1.bf16.msra.mxu0 0
      %780 = vmatprep.subr.bf16.mxu0 0
      %781 = vmatpush1.bf16.msra.mxu0 0
      %782 = vmatprep.subr.bf16.mxu0 0
      %783 = vmatpush1.bf16.msra.mxu0 0
      %784 = vmatprep.subr.bf16.mxu0 0
      %785 = vmatpush1.bf16.msra.mxu0 0
      %786 = vmatprep.subr.bf16.mxu0 0
      %787 = vmatpush1.bf16.msra.mxu0 0
      %788 = vmatprep.subr.bf16.mxu0 0
      %789 = vmatpush1.bf16.msra.mxu0 0
      %790 = vmatprep.mubr.bf16.mxu0 0
      %791 = vmatmul.mubr.bf16.gmra.mrb[0].mxu0 %v678
      %v792 = vpop.f32.mrb[0].mxu0
      %v793 = vadd.f32 0.0, %v792
      %v794 = vpop.f32.mrb[0].mxu0
      %v795 = vpop.f32.mrb[0].mxu0
      %v796 = vadd.f32 0.0, %v795
      %v797 = vpop.f32.mrb[0].mxu0
      %798 = vmatprep.mubr.bf16.mxu0 0
      %799 = vmatmul.mubr.bf16.gmra.mrb[0].mxu0 %v679
      %v800 = vpop.f32.mrb[0].mxu0
      %v801 = vadd.f32 0.0, %v800
      %v802 = vpop.f32.mrb[0].mxu0
      %v803 = vpop.f32.mrb[0].mxu0
      %v804 = vadd.f32 0.0, %v803
      %v805 = vpop.f32.mrb[0].mxu0
      %806 = vmatprep.mubr.bf16.mxu0 0
      %807 = vmatmul.mubr.bf16.gmra.mrb[0].mxu0 %v680
      %v808 = vpop.f32.mrb[0].mxu0
      %v809 = vadd.f32 0.0, %v808
      %v810 = vpop.f32.mrb[0].mxu0
      %v811 = vpop.f32.mrb[0].mxu0
      %v812 = vadd.f32 0.0, %v811
      %v813 = vpop.f32.mrb[0].mxu0
      %814 = vmatprep.mubr.bf16.mxu0 0
      %815 = vmatmul.mubr.bf16.gmra.mrb[0].mxu0 %v681
      %v816 = vpop.f32.mrb[0].mxu0
      %v817 = vadd.f32 0.0, %v816
      %v818 = vpop.f32.mrb[0].mxu0
      %v819 = vpop.f32.mrb[0].mxu0
      %v820 = vadd.f32 0.0, %v819
      %v821 = vpop.f32.mrb[0].mxu0
      %822 = vmatprep.mubr.bf16.mxu0 0
      %823 = vmatmul.mubr.bf16.gmra.mrb[0].mxu0 %v682
      %v824 = vpop.f32.mrb[0].mxu0
      %v825 = vadd.f32 0.0, %v824
      %v826 = vpop.f32.mrb[0].mxu0
      %v827 = vpop.f32.mrb[0].mxu0
      %v828 = vadd.f32 0.0, %v827
      %v829 = vpop.f32.mrb[0].mxu0
      %830 = vmatprep.mubr.bf16.mxu0 0
      %831 = vmatmul.mubr.bf16.gmra.mrb[0].mxu0 %v683
      %v832 = vpop.f32.mrb[0].mxu0
      %v833 = vadd.f32 0.0, %v832
      %v834 = vpop.f32.mrb[0].mxu0
      %v835 = vpop.f32.mrb[0].mxu0
      %v836 = vadd.f32 0.0, %v835
      %v837 = vpop.f32.mrb[0].mxu0
      %838 = vmatprep.mubr.bf16.mxu0 0
      %839 = vmatmul.mubr.bf16.gmra.mrb[0].mxu0 %v684
      %v840 = vpop.f32.mrb[0].mxu0
      %v841 = vadd.f32 0.0, %v840
      %v842 = vpop.f32.mrb[0].mxu0
      %v843 = vpop.f32.mrb[0].mxu0
      %v844 = vadd.f32 0.0, %v843
      %v845 = vpop.f32.mrb[0].mxu0
      %846 = vmatprep.mubr.bf16.mxu0 0
      %847 = vmatmul.mubr.bf16.gmra.mrb[0].mxu0 %v685
      %v848 = vpop.f32.mrb[0].mxu0
      %v849 = vadd.f32 0.0, %v848
      %v850 = vpop.f32.mrb[0].mxu0
      %v851 = vpop.f32.mrb[0].mxu0
      %v852 = vadd.f32 0.0, %v851
      %v853 = vpop.f32.mrb[0].mxu0
      %854 = vmatprep.mubr.bf16.mxu0 0
      %855 = vmatmul.mubr.bf16.gmra.mrb[0].mxu0 %v686
      %v856 = vpop.f32.mrb[0].mxu0
      %v857 = vadd.f32 0.0, %v856
      %v858 = vpop.f32.mrb[0].mxu0
      %v859 = vpop.f32.mrb[0].mxu0
      %v860 = vadd.f32 0.0, %v859
      %v861 = vpop.f32.mrb[0].mxu0
      %862 = vmatprep.mubr.bf16.mxu0 0
      %863 = vmatmul.mubr.bf16.gmra.mrb[0].mxu0 %v687
      %v864 = vpop.f32.mrb[0].mxu0
      %v865 = vadd.f32 0.0, %v864
      %v866 = vpop.f32.mrb[0].mxu0
      %v867 = vpop.f32.mrb[0].mxu0
      %v868 = vadd.f32 0.0, %v867
      %v869 = vpop.f32.mrb[0].mxu0
      %870 = vmatprep.mubr.bf16.mxu0 0
      %871 = vmatmul.mubr.bf16.gmra.mrb[0].mxu0 %v688
      %v872 = vpop.f32.mrb[0].mxu0
      %v873 = vadd.f32 0.0, %v872
      %v874 = vpop.f32.mrb[0].mxu0
      %v875 = vpop.f32.mrb[0].mxu0
      %v876 = vadd.f32 0.0, %v875
      %v877 = vpop.f32.mrb[0].mxu0
      %878 = vmatprep.mubr.bf16.mxu0 0
      %879 = vmatmul.mubr.bf16.gmra.mrb[0].mxu0 %v689
      %v880 = vpop.f32.mrb[0].mxu0
      %v881 = vadd.f32 0.0, %v880
      %v882 = vpop.f32.mrb[0].mxu0
      %v883 = vpop.f32.mrb[0].mxu0
      %v884 = vadd.f32 0.0, %v883
      %v885 = vpop.f32.mrb[0].mxu0
      %886 = vmatprep.mubr.bf16.mxu0 0
      %887 = vmatmul.mubr.bf16.gmra.mrb[0].mxu0 %v690
      %v888 = vpop.f32.mrb[0].mxu0
      %v889 = vadd.f32 0.0, %v888
      %v890 = vpop.f32.mrb[0].mxu0
      %v891 = vpop.f32.mrb[0].mxu0
      %v892 = vadd.f32 0.0, %v891
      %v893 = vpop.f32.mrb[0].mxu0
      %894 = vmatprep.mubr.bf16.mxu0 0
      %895 = vmatmul.mubr.bf16.gmra.mrb[0].mxu0 %v691
      %v896 = vpop.f32.mrb[0].mxu0
      %v897 = vadd.f32 0.0, %v896
      %v898 = vpop.f32.mrb[0].mxu0
      %v899 = vpop.f32.mrb[0].mxu0
      %v900 = vadd.f32 0.0, %v899
      %v901 = vpop.f32.mrb[0].mxu0
      %902 = vmatprep.mubr.bf16.mxu0 0
      %903 = vmatmul.mubr.bf16.gmra.mrb[0].mxu0 %v692
      %v904 = vpop.f32.mrb[0].mxu0
      %v905 = vadd.f32 0.0, %v904
      %v906 = vpop.f32.mrb[0].mxu0
      %v907 = vpop.f32.mrb[0].mxu0
      %v908 = vadd.f32 0.0, %v907
      %v909 = vpop.f32.mrb[0].mxu0
      %910 = vmatprep.mubr.bf16.mxu0 0
      %911 = vmatmul.mubr.bf16.gmra.mrb[0].mxu0 %v693
      %v912 = vpop.f32.mrb[0].mxu0
      %v913 = vadd.f32 0.0, %v912
      %v914 = vpop.f32.mrb[0].mxu0
      %v915 = vpop.f32.mrb[0].mxu0
      %v916 = vadd.f32 0.0, %v915
      %v917 = vpop.f32.mrb[0].mxu0
      %918 = vdwg.mxu0
      %v951 = vunpack.c.l.b16 %v172
      %v952 = vunpack.c.l.b16 %v173
      %v953 = vunpack.c.l.b16 %v175
      %v954 = vunpack.c.l.b16 %v176
      %v955 = vunpack.c.l.b16 %v178
      %v956 = vunpack.c.l.b16 %v179
      %v957 = vunpack.c.l.b16 %v181
      %v958 = vunpack.c.l.b16 %v182
      %v959 = vunpack.c.l.b16 %v184
      %v960 = vunpack.c.l.b16 %v185
      %v961 = vunpack.c.l.b16 %v187
      %v962 = vunpack.c.l.b16 %v188
      %v963 = vunpack.c.l.b16 %v190
      %v964 = vunpack.c.l.b16 %v191
      %v965 = vunpack.c.l.b16 %v193
      %v966 = vunpack.c.l.b16 %v194
      %v967 = vunpack.c.l.b16 %v196
      %v968 = vunpack.c.l.b16 %v197
      %v969 = vunpack.c.l.b16 %v199
      %v970 = vunpack.c.l.b16 %v200
      %v971 = vunpack.c.l.b16 %v202
      %v972 = vunpack.c.l.b16 %v203
      %v973 = vunpack.c.l.b16 %v205
      %v974 = vunpack.c.l.b16 %v206
      %v975 = vunpack.c.l.b16 %v208
      %v976 = vunpack.c.l.b16 %v209
      %v977 = vunpack.c.l.b16 %v211
      %v978 = vunpack.c.l.b16 %v212
      %v979 = vunpack.c.l.b16 %v214
      %v980 = vunpack.c.l.b16 %v215
      %v981 = vunpack.c.l.b16 %v217
      %v982 = vunpack.c.l.b16 %v218
      %v983 = vpack.c.b16 %v952, %v951
      %v984 = vpack.c.b16 %v954, %v953
      %v985 = vpack.c.b16 %v956, %v955
      %v986 = vpack.c.b16 %v958, %v957
      %v987 = vpack.c.b16 %v960, %v959
      %v988 = vpack.c.b16 %v962, %v961
      %v989 = vpack.c.b16 %v964, %v963
      %v990 = vpack.c.b16 %v966, %v965
      %v991 = vpack.c.b16 %v968, %v967
      %v992 = vpack.c.b16 %v970, %v969
      %v993 = vpack.c.b16 %v972, %v971
      %v994 = vpack.c.b16 %v974, %v973
      %v995 = vpack.c.b16 %v976, %v975
      %v996 = vpack.c.b16 %v978, %v977
      %v997 = vpack.c.b16 %v980, %v979
      %v998 = vpack.c.b16 %v982, %v981
      %v1031 = vunpack.c.l.b16 %v226
      %v1032 = vunpack.c.l.b16 %v227
      %v1033 = vunpack.c.l.b16 %v228
      %v1034 = vunpack.c.l.b16 %v229
      %v1035 = vunpack.c.l.b16 %v230
      %v1036 = vunpack.c.l.b16 %v231
      %v1037 = vunpack.c.l.b16 %v232
      %v1038 = vunpack.c.l.b16 %v233
      %v1039 = vunpack.c.l.b16 %v234
      %v1040 = vunpack.c.l.b16 %v235
      %v1041 = vunpack.c.l.b16 %v236
      %v1042 = vunpack.c.l.b16 %v237
      %v1043 = vunpack.c.l.b16 %v238
      %v1044 = vunpack.c.l.b16 %v239
      %v1045 = vunpack.c.l.b16 %v240
      %v1046 = vunpack.c.l.b16 %v241
      %v1047 = vpack.c.b16 %v1032, %v1031
      %v1048 = vpack.c.b16 %v1034, %v1033
      %v1049 = vpack.c.b16 %v1036, %v1035
      %v1050 = vpack.c.b16 %v1038, %v1037
      %v1051 = vpack.c.b16 %v1040, %v1039
      %v1052 = vpack.c.b16 %v1042, %v1041
      %v1053 = vpack.c.b16 %v1044, %v1043
      %v1054 = vpack.c.b16 %v1046, %v1045
      %1063 = vmatprep.subr.bf16.mxu0 0
      %1064 = vmatpush1.bf16.msra.mxu0 %v1047
      %1065 = vmatprep.subr.bf16.mxu0 0
      %1066 = vmatpush1.bf16.msra.mxu0 %v1048
      %1067 = vmatprep.subr.bf16.mxu0 0
      %1068 = vmatpush1.bf16.msra.mxu0 %v1049
      %1069 = vmatprep.subr.bf16.mxu0 0
      %1070 = vmatpush1.bf16.msra.mxu0 %v1050
      %1071 = vmatprep.subr.bf16.mxu0 0
      %1072 = vmatpush1.bf16.msra.mxu0 %v1051
      %1073 = vmatprep.subr.bf16.mxu0 0
      %1074 = vmatpush1.bf16.msra.mxu0 %v1052
      %1075 = vmatprep.subr.bf16.mxu0 0
      %1076 = vmatpush1.bf16.msra.mxu0 %v1053
      %1077 = vmatprep.subr.bf16.mxu0 0
      %1078 = vmatpush1.bf16.msra.mxu0 %v1054
      %1079 = vmatprep.subr.bf16.mxu0 0
      %1080 = vmatpush1.bf16.msra.mxu0 0
      %1081 = vmatprep.subr.bf16.mxu0 0
      %1082 = vmatpush1.bf16.msra.mxu0 0
      %1083 = vmatprep.subr.bf16.mxu0 0
      %1084 = vmatpush1.bf16.msra.mxu0 0
      %1085 = vmatprep.subr.bf16.mxu0 0
      %1086 = vmatpush1.bf16.msra.mxu0 0
      %1087 = vmatprep.subr.bf16.mxu0 0
      %1088 = vmatpush1.bf16.msra.mxu0 0
      %1089 = vmatprep.subr.bf16.mxu0 0
      %1090 = vmatpush1.bf16.msra.mxu0 0
      %1091 = vmatprep.subr.bf16.mxu0 0
      %1092 = vmatpush1.bf16.msra.mxu0 0
      %1093 = vmatprep.subr.bf16.mxu0 0
      %1094 = vmatpush1.bf16.msra.mxu0 0
      %1095 = vmatprep.mubr.bf16.mxu0 0
      %1096 = vmatmul.mubr.bf16.gmra.mrb[0].mxu0 %v983
      %v1097 = vpop.f32.mrb[0].mxu0
      %v1098 = vadd.f32 %v793, %v1097
      %v1099 = vpop.f32.mrb[0].mxu0
      %v1100 = vpop.f32.mrb[0].mxu0
      %v1101 = vadd.f32 %v796, %v1100
      %v1102 = vpop.f32.mrb[0].mxu0
      %1103 = vmatprep.mubr.bf16.mxu0 0
      %1104 = vmatmul.mubr.bf16.gmra.mrb[0].mxu0 %v984
      %v1105 = vpop.f32.mrb[0].mxu0
      %v1106 = vadd.f32 %v801, %v1105
      %v1107 = vpop.f32.mrb[0].mxu0
      %v1108 = vpop.f32.mrb[0].mxu0
      %v1109 = vadd.f32 %v804, %v1108
      %v1110 = vpop.f32.mrb[0].mxu0
      %1111 = vmatprep.mubr.bf16.mxu0 0
      %1112 = vmatmul.mubr.bf16.gmra.mrb[0].mxu0 %v985
      %v1113 = vpop.f32.mrb[0].mxu0
      %v1114 = vadd.f32 %v809, %v1113
      %v1115 = vpop.f32.mrb[0].mxu0
      %v1116 = vpop.f32.mrb[0].mxu0
      %v1117 = vadd.f32 %v812, %v1116
      %v1118 = vpop.f32.mrb[0].mxu0
      %1119 = vmatprep.mubr.bf16.mxu0 0
      %1120 = vmatmul.mubr.bf16.gmra.mrb[0].mxu0 %v986
      %v1121 = vpop.f32.mrb[0].mxu0
      %v1122 = vadd.f32 %v817, %v1121
      %v1123 = vpop.f32.mrb[0].mxu0
      %v1124 = vpop.f32.mrb[0].mxu0
      %v1125 = vadd.f32 %v820, %v1124
      %v1126 = vpop.f32.mrb[0].mxu0
      %1127 = vmatprep.mubr.bf16.mxu0 0
      %1128 = vmatmul.mubr.bf16.gmra.mrb[0].mxu0 %v987
      %v1129 = vpop.f32.mrb[0].mxu0
      %v1130 = vadd.f32 %v825, %v1129
      %v1131 = vpop.f32.mrb[0].mxu0
      %v1132 = vpop.f32.mrb[0].mxu0
      %v1133 = vadd.f32 %v828, %v1132
      %v1134 = vpop.f32.mrb[0].mxu0
      %1135 = vmatprep.mubr.bf16.mxu0 0
      %1136 = vmatmul.mubr.bf16.gmra.mrb[0].mxu0 %v988
      %v1137 = vpop.f32.mrb[0].mxu0
      %v1138 = vadd.f32 %v833, %v1137
      %v1139 = vpop.f32.mrb[0].mxu0
      %v1140 = vpop.f32.mrb[0].mxu0
      %v1141 = vadd.f32 %v836, %v1140
      %v1142 = vpop.f32.mrb[0].mxu0
      %1143 = vmatprep.mubr.bf16.mxu0 0
      %1144 = vmatmul.mubr.bf16.gmra.mrb[0].mxu0 %v989
      %v1145 = vpop.f32.mrb[0].mxu0
      %v1146 = vadd.f32 %v841, %v1145
      %v1147 = vpop.f32.mrb[0].mxu0
      %v1148 = vpop.f32.mrb[0].mxu0
      %v1149 = vadd.f32 %v844, %v1148
      %v1150 = vpop.f32.mrb[0].mxu0
      %1151 = vmatprep.mubr.bf16.mxu0 0
      %1152 = vmatmul.mubr.bf16.gmra.mrb[0].mxu0 %v990
      %v1153 = vpop.f32.mrb[0].mxu0
      %v1154 = vadd.f32 %v849, %v1153
      %v1155 = vpop.f32.mrb[0].mxu0
      %v1156 = vpop.f32.mrb[0].mxu0
      %v1157 = vadd.f32 %v852, %v1156
      %v1158 = vpop.f32.mrb[0].mxu0
      %1159 = vmatprep.mubr.bf16.mxu0 0
      %1160 = vmatmul.mubr.bf16.gmra.mrb[0].mxu0 %v991
      %v1161 = vpop.f32.mrb[0].mxu0
      %v1162 = vadd.f32 %v857, %v1161
      %v1163 = vpop.f32.mrb[0].mxu0
      %v1164 = vpop.f32.mrb[0].mxu0
      %v1165 = vadd.f32 %v860, %v1164
      %v1166 = vpop.f32.mrb[0].mxu0
      %1167 = vmatprep.mubr.bf16.mxu0 0
      %1168 = vmatmul.mubr.bf16.gmra.mrb[0].mxu0 %v992
      %v1169 = vpop.f32.mrb[0].mxu0
      %v1170 = vadd.f32 %v865, %v1169
      %v1171 = vpop.f32.mrb[0].mxu0
      %v1172 = vpop.f32.mrb[0].mxu0
      %v1173 = vadd.f32 %v868, %v1172
      %v1174 = vpop.f32.mrb[0].mxu0
      %1175 = vmatprep.mubr.bf16.mxu0 0
      %1176 = vmatmul.mubr.bf16.gmra.mrb[0].mxu0 %v993
      %v1177 = vpop.f32.mrb[0].mxu0
      %v1178 = vadd.f32 %v873, %v1177
      %v1179 = vpop.f32.mrb[0].mxu0
      %v1180 = vpop.f32.mrb[0].mxu0
      %v1181 = vadd.f32 %v876, %v1180
      %v1182 = vpop.f32.mrb[0].mxu0
      %1183 = vmatprep.mubr.bf16.mxu0 0
      %1184 = vmatmul.mubr.bf16.gmra.mrb[0].mxu0 %v994
      %v1185 = vpop.f32.mrb[0].mxu0
      %v1186 = vadd.f32 %v881, %v1185
      %v1187 = vpop.f32.mrb[0].mxu0
      %v1188 = vpop.f32.mrb[0].mxu0
      %v1189 = vadd.f32 %v884, %v1188
      %v1190 = vpop.f32.mrb[0].mxu0
      %1191 = vmatprep.mubr.bf16.mxu0 0
      %1192 = vmatmul.mubr.bf16.gmra.mrb[0].mxu0 %v995
      %v1193 = vpop.f32.mrb[0].mxu0
      %v1194 = vadd.f32 %v889, %v1193
      %v1195 = vpop.f32.mrb[0].mxu0
      %v1196 = vpop.f32.mrb[0].mxu0
      %v1197 = vadd.f32 %v892, %v1196
      %v1198 = vpop.f32.mrb[0].mxu0
      %1199 = vmatprep.mubr.bf16.mxu0 0
      %1200 = vmatmul.mubr.bf16.gmra.mrb[0].mxu0 %v996
      %v1201 = vpop.f32.mrb[0].mxu0
      %v1202 = vadd.f32 %v897, %v1201
      %v1203 = vpop.f32.mrb[0].mxu0
      %v1204 = vpop.f32.mrb[0].mxu0
      %v1205 = vadd.f32 %v900, %v1204
      %v1206 = vpop.f32.mrb[0].mxu0
      %1207 = vmatprep.mubr.bf16.mxu0 0
      %1208 = vmatmul.mubr.bf16.gmra.mrb[0].mxu0 %v997
      %v1209 = vpop.f32.mrb[0].mxu0
      %v1210 = vadd.f32 %v905, %v1209
      %v1211 = vpop.f32.mrb[0].mxu0
      %v1212 = vpop.f32.mrb[0].mxu0
      %v1213 = vadd.f32 %v908, %v1212
      %v1214 = vpop.f32.mrb[0].mxu0
      %1215 = vmatprep.mubr.bf16.mxu0 0
      %1216 = vmatmul.mubr.bf16.gmra.mrb[0].mxu0 %v998
      %v1217 = vpop.f32.mrb[0].mxu0
      %v1218 = vadd.f32 %v913, %v1217
      %v1219 = vpop.f32.mrb[0].mxu0
      %v1220 = vpop.f32.mrb[0].mxu0
      %v1221 = vadd.f32 %v916, %v1220
      %v1222 = vpop.f32.mrb[0].mxu0
      %1223 = vdwg.mxu0
      %vm1240 = vcmask 1042432
      %vm1241 = vcmask 1046532
      %vm1242 = vmor %vm1240, %vm1241
      %v1243 = vrot.slane %v172, 5
      %v1244 = vrot.slane %v1243, 4
      %v1245 = vrot.slane %v173, 5
      %v1246 = vsel %vm1242, %v1244, %v1245
      %v1247 = vrot.slane %v1245, 4
      %v1248 = vrot.slane %v174, 5
      %v1249 = vsel %vm1242, %v1247, %v1248
      %v1250 = vrot.slane %v175, 5
      %v1251 = vrot.slane %v1250, 4
      %v1252 = vrot.slane %v176, 5
      %v1253 = vsel %vm1242, %v1251, %v1252
      %v1254 = vrot.slane %v1252, 4
      %v1255 = vrot.slane %v177, 5
      %v1256 = vsel %vm1242, %v1254, %v1255
      %v1257 = vrot.slane %v178, 5
      %v1258 = vrot.slane %v1257, 4
      %v1259 = vrot.slane %v179, 5
      %v1260 = vsel %vm1242, %v1258, %v1259
      %v1261 = vrot.slane %v1259, 4
      %v1262 = vrot.slane %v180, 5
      %v1263 = vsel %vm1242, %v1261, %v1262
      %v1264 = vrot.slane %v181, 5
      %v1265 = vrot.slane %v1264, 4
      %v1266 = vrot.slane %v182, 5
      %v1267 = vsel %vm1242, %v1265, %v1266
      %v1268 = vrot.slane %v1266, 4
      %v1269 = vrot.slane %v183, 5
      %v1270 = vsel %vm1242, %v1268, %v1269
      %v1271 = vrot.slane %v184, 5
      %v1272 = vrot.slane %v1271, 4
      %v1273 = vrot.slane %v185, 5
      %v1274 = vsel %vm1242, %v1272, %v1273
      %v1275 = vrot.slane %v1273, 4
      %v1276 = vrot.slane %v186, 5
      %v1277 = vsel %vm1242, %v1275, %v1276
      %v1278 = vrot.slane %v187, 5
      %v1279 = vrot.slane %v1278, 4
      %v1280 = vrot.slane %v188, 5
      %v1281 = vsel %vm1242, %v1279, %v1280
      %v1282 = vrot.slane %v1280, 4
      %v1283 = vrot.slane %v189, 5
      %v1284 = vsel %vm1242, %v1282, %v1283
      %v1285 = vrot.slane %v190, 5
      %v1286 = vrot.slane %v1285, 4
      %v1287 = vrot.slane %v191, 5
      %v1288 = vsel %vm1242, %v1286, %v1287
      %v1289 = vrot.slane %v1287, 4
      %v1290 = vrot.slane %v192, 5
      %v1291 = vsel %vm1242, %v1289, %v1290
      %v1292 = vrot.slane %v193, 5
      %v1293 = vrot.slane %v1292, 4
      %v1294 = vrot.slane %v194, 5
      %v1295 = vsel %vm1242, %v1293, %v1294
      %v1296 = vrot.slane %v1294, 4
      %v1297 = vrot.slane %v195, 5
      %v1298 = vsel %vm1242, %v1296, %v1297
      %v1299 = vrot.slane %v196, 5
      %v1300 = vrot.slane %v1299, 4
      %v1301 = vrot.slane %v197, 5
      %v1302 = vsel %vm1242, %v1300, %v1301
      %v1303 = vrot.slane %v1301, 4
      %v1304 = vrot.slane %v198, 5
      %v1305 = vsel %vm1242, %v1303, %v1304
      %v1306 = vrot.slane %v199, 5
      %v1307 = vrot.slane %v1306, 4
      %v1308 = vrot.slane %v200, 5
      %v1309 = vsel %vm1242, %v1307, %v1308
      %v1310 = vrot.slane %v1308, 4
      %v1311 = vrot.slane %v201, 5
      %v1312 = vsel %vm1242, %v1310, %v1311
      %v1313 = vrot.slane %v202, 5
      %v1314 = vrot.slane %v1313, 4
      %v1315 = vrot.slane %v203, 5
      %v1316 = vsel %vm1242, %v1314, %v1315
      %v1317 = vrot.slane %v1315, 4
      %v1318 = vrot.slane %v204, 5
      %v1319 = vsel %vm1242, %v1317, %v1318
      %v1320 = vrot.slane %v205, 5
      %v1321 = vrot.slane %v1320, 4
      %v1322 = vrot.slane %v206, 5
      %v1323 = vsel %vm1242, %v1321, %v1322
      %v1324 = vrot.slane %v1322, 4
      %v1325 = vrot.slane %v207, 5
      %v1326 = vsel %vm1242, %v1324, %v1325
      %v1327 = vrot.slane %v208, 5
      %v1328 = vrot.slane %v1327, 4
      %v1329 = vrot.slane %v209, 5
      %v1330 = vsel %vm1242, %v1328, %v1329
      %v1331 = vrot.slane %v1329, 4
      %v1332 = vrot.slane %v210, 5
      %v1333 = vsel %vm1242, %v1331, %v1332
      %v1334 = vrot.slane %v211, 5
      %v1335 = vrot.slane %v1334, 4
      %v1336 = vrot.slane %v212, 5
      %v1337 = vsel %vm1242, %v1335, %v1336
      %v1338 = vrot.slane %v1336, 4
      %v1339 = vrot.slane %v213, 5
      %v1340 = vsel %vm1242, %v1338, %v1339
      %v1341 = vrot.slane %v214, 5
      %v1342 = vrot.slane %v1341, 4
      %v1343 = vrot.slane %v215, 5
      %v1344 = vsel %vm1242, %v1342, %v1343
      %v1345 = vrot.slane %v1343, 4
      %v1346 = vrot.slane %v216, 5
      %v1347 = vsel %vm1242, %v1345, %v1346
      %v1348 = vrot.slane %v217, 5
      %v1349 = vrot.slane %v1348, 4
      %v1350 = vrot.slane %v218, 5
      %v1351 = vsel %vm1242, %v1349, %v1350
      %v1352 = vrot.slane %v1350, 4
      %v1353 = vrot.slane %v219, 5
      %v1354 = vsel %vm1242, %v1352, %v1353
      %s1355 = scalar_lea.vmem %s1, 128
      %v1356 = vld [vmem:[%s1355] sm:$0xf]
      %v1357 = vld [vmem:[%s1355 + $0x4] sm:$0xf]
      %v1358 = vld [vmem:[%s1355 + $0x8] sm:$0xf]
      %v1359 = vld [vmem:[%s1355 + $0xc] sm:$0xf]
      %v1360 = vld [vmem:[%s1355 + $0x10] sm:$0xf]
      %v1361 = vld [vmem:[%s1355 + $0x14] sm:$0xf]
      %v1362 = vld [vmem:[%s1355 + $0x18] sm:$0xf]
      %v1363 = vld [vmem:[%s1355 + $0x1c] sm:$0xf]
      %v1364 = vld [vmem:[%s1355 + $0x20] sm:$0xf]
      %v1365 = vld [vmem:[%s1355 + $0x24] sm:$0xf]
      %v1366 = vld [vmem:[%s1355 + $0x28] sm:$0xf]
      %v1367 = vld [vmem:[%s1355 + $0x2c] sm:$0xf]
      %v1368 = vld [vmem:[%s1355 + $0x30] sm:$0xf]
      %v1369 = vld [vmem:[%s1355 + $0x34] sm:$0xf]
      %v1370 = vld [vmem:[%s1355 + $0x38] sm:$0xf]
      %v1371 = vld [vmem:[%s1355 + $0x3c] sm:$0xf]
      %v1372 = vunpack.c.l.b16 %v1246
      %v1373 = vunpack.c.l.b16 %v1249
      %v1374 = vunpack.c.l.b16 %v1253
      %v1375 = vunpack.c.l.b16 %v1256
      %v1376 = vunpack.c.l.b16 %v1260
      %v1377 = vunpack.c.l.b16 %v1263
      %v1378 = vunpack.c.l.b16 %v1267
      %v1379 = vunpack.c.l.b16 %v1270
      %v1380 = vunpack.c.l.b16 %v1274
      %v1381 = vunpack.c.l.b16 %v1277
      %v1382 = vunpack.c.l.b16 %v1281
      %v1383 = vunpack.c.l.b16 %v1284
      %v1384 = vunpack.c.l.b16 %v1288
      %v1385 = vunpack.c.l.b16 %v1291
      %v1386 = vunpack.c.l.b16 %v1295
      %v1387 = vunpack.c.l.b16 %v1298
      %v1388 = vunpack.c.l.b16 %v1302
      %v1389 = vunpack.c.l.b16 %v1305
      %v1390 = vunpack.c.l.b16 %v1309
      %v1391 = vunpack.c.l.b16 %v1312
      %v1392 = vunpack.c.l.b16 %v1316
      %v1393 = vunpack.c.l.b16 %v1319
      %v1394 = vunpack.c.l.b16 %v1323
      %v1395 = vunpack.c.l.b16 %v1326
      %v1396 = vunpack.c.l.b16 %v1330
      %v1397 = vunpack.c.l.b16 %v1333
      %v1398 = vunpack.c.l.b16 %v1337
      %v1399 = vunpack.c.l.b16 %v1340
      %v1400 = vunpack.c.l.b16 %v1344
      %v1401 = vunpack.c.l.b16 %v1347
      %v1402 = vunpack.c.l.b16 %v1351
      %v1403 = vunpack.c.l.b16 %v1354
      %v1404 = vpack.c.b16 %v1373, %v1372
      %v1405 = vpack.c.b16 %v1375, %v1374
      %v1406 = vpack.c.b16 %v1377, %v1376
      %v1407 = vpack.c.b16 %v1379, %v1378
      %v1408 = vpack.c.b16 %v1381, %v1380
      %v1409 = vpack.c.b16 %v1383, %v1382
      %v1410 = vpack.c.b16 %v1385, %v1384
      %v1411 = vpack.c.b16 %v1387, %v1386
      %v1412 = vpack.c.b16 %v1389, %v1388
      %v1413 = vpack.c.b16 %v1391, %v1390
      %v1414 = vpack.c.b16 %v1393, %v1392
      %v1415 = vpack.c.b16 %v1395, %v1394
      %v1416 = vpack.c.b16 %v1397, %v1396
      %v1417 = vpack.c.b16 %v1399, %v1398
      %v1418 = vpack.c.b16 %v1401, %v1400
      %v1419 = vpack.c.b16 %v1403, %v1402
      %v1452 = vunpack.c.l.b16 %v1356
      %v1453 = vunpack.c.l.b16 %v1357
      %v1454 = vunpack.c.l.b16 %v1358
      %v1455 = vunpack.c.l.b16 %v1359
      %v1456 = vunpack.c.l.b16 %v1360
      %v1457 = vunpack.c.l.b16 %v1361
      %v1458 = vunpack.c.l.b16 %v1362
      %v1459 = vunpack.c.l.b16 %v1363
      %v1460 = vunpack.c.l.b16 %v1364
      %v1461 = vunpack.c.l.b16 %v1365
      %v1462 = vunpack.c.l.b16 %v1366
      %v1463 = vunpack.c.l.b16 %v1367
      %v1464 = vunpack.c.l.b16 %v1368
      %v1465 = vunpack.c.l.b16 %v1369
      %v1466 = vunpack.c.l.b16 %v1370
      %v1467 = vunpack.c.l.b16 %v1371
      %v1468 = vpack.c.b16 %v1453, %v1452
      %v1469 = vpack.c.b16 %v1455, %v1454
      %v1470 = vpack.c.b16 %v1457, %v1456
      %v1471 = vpack.c.b16 %v1459, %v1458
      %v1472 = vpack.c.b16 %v1461, %v1460
      %v1473 = vpack.c.b16 %v1463, %v1462
      %v1474 = vpack.c.b16 %v1465, %v1464
      %v1475 = vpack.c.b16 %v1467, %v1466
      %1484 = vmatprep.subr.bf16.mxu0 0
      %1485 = vmatpush1.bf16.msra.mxu0 %v1468
      %1486 = vmatprep.subr.bf16.mxu0 0
      %1487 = vmatpush1.bf16.msra.mxu0 %v1469
      %1488 = vmatprep.subr.bf16.mxu0 0
      %1489 = vmatpush1.bf16.msra.mxu0 %v1470
      %1490 = vmatprep.subr.bf16.mxu0 0
      %1491 = vmatpush1.bf16.msra.mxu0 %v1471
      %1492 = vmatprep.subr.bf16.mxu0 0
      %1493 = vmatpush1.bf16.msra.mxu0 %v1472
      %1494 = vmatprep.subr.bf16.mxu0 0
      %1495 = vmatpush1.bf16.msra.mxu0 %v1473
      %1496 = vmatprep.subr.bf16.mxu0 0
      %1497 = vmatpush1.bf16.msra.mxu0 %v1474
      %1498 = vmatprep.subr.bf16.mxu0 0
      %1499 = vmatpush1.bf16.msra.mxu0 %v1475
      %1500 = vmatprep.subr.bf16.mxu0 0
      %1501 = vmatpush1.bf16.msra.mxu0 0
      %1502 = vmatprep.subr.bf16.mxu0 0
      %1503 = vmatpush1.bf16.msra.mxu0 0
      %1504 = vmatprep.subr.bf16.mxu0 0
      %1505 = vmatpush1.bf16.msra.mxu0 0
      %1506 = vmatprep.subr.bf16.mxu0 0
      %1507 = vmatpush1.bf16.msra.mxu0 0
      %1508 = vmatprep.subr.bf16.mxu0 0
      %1509 = vmatpush1.bf16.msra.mxu0 0
      %1510 = vmatprep.subr.bf16.mxu0 0
      %1511 = vmatpush1.bf16.msra.mxu0 0
      %1512 = vmatprep.subr.bf16.mxu0 0
      %1513 = vmatpush1.bf16.msra.mxu0 0
      %1514 = vmatprep.subr.bf16.mxu0 0
      %1515 = vmatpush1.bf16.msra.mxu0 0
      %1516 = vmatprep.mubr.bf16.mxu0 0
      %1517 = vmatmul.mubr.bf16.gmra.mrb[0].mxu0 %v1404
      %v1518 = vpop.f32.mrb[0].mxu0
      %v1519 = vadd.f32 0.0, %v1518
      %v1520 = vpop.f32.mrb[0].mxu0
      %v1521 = vpop.f32.mrb[0].mxu0
      %v1522 = vadd.f32 0.0, %v1521
      %v1523 = vpop.f32.mrb[0].mxu0
      %1524 = vmatprep.mubr.bf16.mxu0 0
      %1525 = vmatmul.mubr.bf16.gmra.mrb[0].mxu0 %v1405
      %v1526 = vpop.f32.mrb[0].mxu0
      %v1527 = vadd.f32 0.0, %v1526
      %v1528 = vpop.f32.mrb[0].mxu0
      %v1529 = vpop.f32.mrb[0].mxu0
      %v1530 = vadd.f32 0.0, %v1529
      %v1531 = vpop.f32.mrb[0].mxu0
      %1532 = vmatprep.mubr.bf16.mxu0 0
      %1533 = vmatmul.mubr.bf16.gmra.mrb[0].mxu0 %v1406
      %v1534 = vpop.f32.mrb[0].mxu0
      %v1535 = vadd.f32 0.0, %v1534
      %v1536 = vpop.f32.mrb[0].mxu0
      %v1537 = vpop.f32.mrb[0].mxu0
      %v1538 = vadd.f32 0.0, %v1537
      %v1539 = vpop.f32.mrb[0].mxu0
      %1540 = vmatprep.mubr.bf16.mxu0 0
      %1541 = vmatmul.mubr.bf16.gmra.mrb[0].mxu0 %v1407
      %v1542 = vpop.f32.mrb[0].mxu0
      %v1543 = vadd.f32 0.0, %v1542
      %v1544 = vpop.f32.mrb[0].mxu0
      %v1545 = vpop.f32.mrb[0].mxu0
      %v1546 = vadd.f32 0.0, %v1545
      %v1547 = vpop.f32.mrb[0].mxu0
      %1548 = vmatprep.mubr.bf16.mxu0 0
      %1549 = vmatmul.mubr.bf16.gmra.mrb[0].mxu0 %v1408
      %v1550 = vpop.f32.mrb[0].mxu0
      %v1551 = vadd.f32 0.0, %v1550
      %v1552 = vpop.f32.mrb[0].mxu0
      %v1553 = vpop.f32.mrb[0].mxu0
      %v1554 = vadd.f32 0.0, %v1553
      %v1555 = vpop.f32.mrb[0].mxu0
      %1556 = vmatprep.mubr.bf16.mxu0 0
      %1557 = vmatmul.mubr.bf16.gmra.mrb[0].mxu0 %v1409
      %v1558 = vpop.f32.mrb[0].mxu0
      %v1559 = vadd.f32 0.0, %v1558
      %v1560 = vpop.f32.mrb[0].mxu0
      %v1561 = vpop.f32.mrb[0].mxu0
      %v1562 = vadd.f32 0.0, %v1561
      %v1563 = vpop.f32.mrb[0].mxu0
      %1564 = vmatprep.mubr.bf16.mxu0 0
      %1565 = vmatmul.mubr.bf16.gmra.mrb[0].mxu0 %v1410
      %v1566 = vpop.f32.mrb[0].mxu0
      %v1567 = vadd.f32 0.0, %v1566
      %v1568 = vpop.f32.mrb[0].mxu0
      %v1569 = vpop.f32.mrb[0].mxu0
      %v1570 = vadd.f32 0.0, %v1569
      %v1571 = vpop.f32.mrb[0].mxu0
      %1572 = vmatprep.mubr.bf16.mxu0 0
      %1573 = vmatmul.mubr.bf16.gmra.mrb[0].mxu0 %v1411
      %v1574 = vpop.f32.mrb[0].mxu0
      %v1575 = vadd.f32 0.0, %v1574
      %v1576 = vpop.f32.mrb[0].mxu0
      %v1577 = vpop.f32.mrb[0].mxu0
      %v1578 = vadd.f32 0.0, %v1577
      %v1579 = vpop.f32.mrb[0].mxu0
      %1580 = vmatprep.mubr.bf16.mxu0 0
      %1581 = vmatmul.mubr.bf16.gmra.mrb[0].mxu0 %v1412
      %v1582 = vpop.f32.mrb[0].mxu0
      %v1583 = vadd.f32 0.0, %v1582
      %v1584 = vpop.f32.mrb[0].mxu0
      %v1585 = vpop.f32.mrb[0].mxu0
      %v1586 = vadd.f32 0.0, %v1585
      %v1587 = vpop.f32.mrb[0].mxu0
      %1588 = vmatprep.mubr.bf16.mxu0 0
      %1589 = vmatmul.mubr.bf16.gmra.mrb[0].mxu0 %v1413
      %v1590 = vpop.f32.mrb[0].mxu0
      %v1591 = vadd.f32 0.0, %v1590
      %v1592 = vpop.f32.mrb[0].mxu0
      %v1593 = vpop.f32.mrb[0].mxu0
      %v1594 = vadd.f32 0.0, %v1593
      %v1595 = vpop.f32.mrb[0].mxu0
      %1596 = vmatprep.mubr.bf16.mxu0 0
      %1597 = vmatmul.mubr.bf16.gmra.mrb[0].mxu0 %v1414
      %v1598 = vpop.f32.mrb[0].mxu0
      %v1599 = vadd.f32 0.0, %v1598
      %v1600 = vpop.f32.mrb[0].mxu0
      %v1601 = vpop.f32.mrb[0].mxu0
      %v1602 = vadd.f32 0.0, %v1601
      %v1603 = vpop.f32.mrb[0].mxu0
      %1604 = vmatprep.mubr.bf16.mxu0 0
      %1605 = vmatmul.mubr.bf16.gmra.mrb[0].mxu0 %v1415
      %v1606 = vpop.f32.mrb[0].mxu0
      %v1607 = vadd.f32 0.0, %v1606
      %v1608 = vpop.f32.mrb[0].mxu0
      %v1609 = vpop.f32.mrb[0].mxu0
      %v1610 = vadd.f32 0.0, %v1609
      %v1611 = vpop.f32.mrb[0].mxu0
      %1612 = vmatprep.mubr.bf16.mxu0 0
      %1613 = vmatmul.mubr.bf16.gmra.mrb[0].mxu0 %v1416
      %v1614 = vpop.f32.mrb[0].mxu0
      %v1615 = vadd.f32 0.0, %v1614
      %v1616 = vpop.f32.mrb[0].mxu0
      %v1617 = vpop.f32.mrb[0].mxu0
      %v1618 = vadd.f32 0.0, %v1617
      %v1619 = vpop.f32.mrb[0].mxu0
      %1620 = vmatprep.mubr.bf16.mxu0 0
      %1621 = vmatmul.mubr.bf16.gmra.mrb[0].mxu0 %v1417
      %v1622 = vpop.f32.mrb[0].mxu0
      %v1623 = vadd.f32 0.0, %v1622
      %v1624 = vpop.f32.mrb[0].mxu0
      %v1625 = vpop.f32.mrb[0].mxu0
      %v1626 = vadd.f32 0.0, %v1625
      %v1627 = vpop.f32.mrb[0].mxu0
      %1628 = vmatprep.mubr.bf16.mxu0 0
      %1629 = vmatmul.mubr.bf16.gmra.mrb[0].mxu0 %v1418
      %v1630 = vpop.f32.mrb[0].mxu0
      %v1631 = vadd.f32 0.0, %v1630
      %v1632 = vpop.f32.mrb[0].mxu0
      %v1633 = vpop.f32.mrb[0].mxu0
      %v1634 = vadd.f32 0.0, %v1633
      %v1635 = vpop.f32.mrb[0].mxu0
      %1636 = vmatprep.mubr.bf16.mxu0 0
      %1637 = vmatmul.mubr.bf16.gmra.mrb[0].mxu0 %v1419
      %v1638 = vpop.f32.mrb[0].mxu0
      %v1639 = vadd.f32 0.0, %v1638
      %v1640 = vpop.f32.mrb[0].mxu0
      %v1641 = vpop.f32.mrb[0].mxu0
      %v1642 = vadd.f32 0.0, %v1641
      %v1643 = vpop.f32.mrb[0].mxu0
      %1644 = vdwg.mxu0
      %v1645 = vadd.f32 %v1098, %v1519
      %v1646 = vadd.f32 %v1101, %v1522
      %v1647 = vadd.f32 %v1106, %v1527
      %v1648 = vadd.f32 %v1109, %v1530
      %v1649 = vadd.f32 %v1114, %v1535
      %v1650 = vadd.f32 %v1117, %v1538
      %v1651 = vadd.f32 %v1122, %v1543
      %v1652 = vadd.f32 %v1125, %v1546
      %v1653 = vadd.f32 %v1130, %v1551
      %v1654 = vadd.f32 %v1133, %v1554
      %v1655 = vadd.f32 %v1138, %v1559
      %v1656 = vadd.f32 %v1141, %v1562
      %v1657 = vadd.f32 %v1146, %v1567
      %v1658 = vadd.f32 %v1149, %v1570
      %v1659 = vadd.f32 %v1154, %v1575
      %v1660 = vadd.f32 %v1157, %v1578
      %v1661 = vadd.f32 %v1162, %v1583
      %v1662 = vadd.f32 %v1165, %v1586
      %v1663 = vadd.f32 %v1170, %v1591
      %v1664 = vadd.f32 %v1173, %v1594
      %v1665 = vadd.f32 %v1178, %v1599
      %v1666 = vadd.f32 %v1181, %v1602
      %v1667 = vadd.f32 %v1186, %v1607
      %v1668 = vadd.f32 %v1189, %v1610
      %v1669 = vadd.f32 %v1194, %v1615
      %v1670 = vadd.f32 %v1197, %v1618
      %v1671 = vadd.f32 %v1202, %v1623
      %v1672 = vadd.f32 %v1205, %v1626
      %v1673 = vadd.f32 %v1210, %v1631
      %v1674 = vadd.f32 %v1213, %v1634
      %v1675 = vadd.f32 %v1218, %v1639
      %v1676 = vadd.f32 %v1221, %v1642
      %s1677 = scalar_lea.vmem %s1, 192
      %v1678 = vld [vmem:[%s1677] sm:$0xf]
      %v1679 = vld [vmem:[%s1677 + $0x4] sm:$0xf]
      %v1680 = vld [vmem:[%s1677 + $0x8] sm:$0xf]
      %v1681 = vld [vmem:[%s1677 + $0xc] sm:$0xf]
      %v1682 = vld [vmem:[%s1677 + $0x10] sm:$0xf]
      %v1683 = vld [vmem:[%s1677 + $0x14] sm:$0xf]
      %v1684 = vld [vmem:[%s1677 + $0x18] sm:$0xf]
      %v1685 = vld [vmem:[%s1677 + $0x1c] sm:$0xf]
      %v1686 = vld [vmem:[%s1677 + $0x20] sm:$0xf]
      %v1687 = vld [vmem:[%s1677 + $0x24] sm:$0xf]
      %v1688 = vld [vmem:[%s1677 + $0x28] sm:$0xf]
      %v1689 = vld [vmem:[%s1677 + $0x2c] sm:$0xf]
      %v1690 = vld [vmem:[%s1677 + $0x30] sm:$0xf]
      %v1691 = vld [vmem:[%s1677 + $0x34] sm:$0xf]
      %v1692 = vld [vmem:[%s1677 + $0x38] sm:$0xf]
      %v1693 = vld [vmem:[%s1677 + $0x3c] sm:$0xf]
      %v1696 = vunpack.c.l.b16 %v220
      %v1697 = vunpack.c.l.b16 %v221
      %v1698 = vpack.c.b16 %v1697, %v1696
      %v1716 = vunpack.c.l.b16 %v1678
      %v1717 = vunpack.c.l.b16 %v1679
      %v1718 = vunpack.c.l.b16 %v1680
      %v1719 = vunpack.c.l.b16 %v1681
      %v1720 = vunpack.c.l.b16 %v1682
      %v1721 = vunpack.c.l.b16 %v1683
      %v1722 = vunpack.c.l.b16 %v1684
      %v1723 = vunpack.c.l.b16 %v1685
      %v1724 = vunpack.c.l.b16 %v1686
      %v1725 = vunpack.c.l.b16 %v1687
      %v1726 = vunpack.c.l.b16 %v1688
      %v1727 = vunpack.c.l.b16 %v1689
      %v1728 = vunpack.c.l.b16 %v1690
      %v1729 = vunpack.c.l.b16 %v1691
      %v1730 = vunpack.c.l.b16 %v1692
      %v1731 = vunpack.c.l.b16 %v1693
      %v1732 = vpack.c.b16 %v1717, %v1716
      %v1733 = vpack.c.b16 %v1719, %v1718
      %v1734 = vpack.c.b16 %v1721, %v1720
      %v1735 = vpack.c.b16 %v1723, %v1722
      %v1736 = vpack.c.b16 %v1725, %v1724
      %v1737 = vpack.c.b16 %v1727, %v1726
      %v1738 = vpack.c.b16 %v1729, %v1728
      %v1739 = vpack.c.b16 %v1731, %v1730
      %1748 = vmatprep.subr.bf16.mxu0 0
      %1749 = vmatpush1.bf16.msra.mxu0 %v1732
      %1750 = vmatprep.subr.bf16.mxu0 0
      %1751 = vmatpush1.bf16.msra.mxu0 %v1733
      %1752 = vmatprep.subr.bf16.mxu0 0
      %1753 = vmatpush1.bf16.msra.mxu0 %v1734
      %1754 = vmatprep.subr.bf16.mxu0 0
      %1755 = vmatpush1.bf16.msra.mxu0 %v1735
      %1756 = vmatprep.subr.bf16.mxu0 0
      %1757 = vmatpush1.bf16.msra.mxu0 %v1736
      %1758 = vmatprep.subr.bf16.mxu0 0
      %1759 = vmatpush1.bf16.msra.mxu0 %v1737
      %1760 = vmatprep.subr.bf16.mxu0 0
      %1761 = vmatpush1.bf16.msra.mxu0 %v1738
      %1762 = vmatprep.subr.bf16.mxu0 0
      %1763 = vmatpush1.bf16.msra.mxu0 %v1739
      %1764 = vmatprep.subr.bf16.mxu0 0
      %1765 = vmatpush1.bf16.msra.mxu0 0
      %1766 = vmatprep.subr.bf16.mxu0 0
      %1767 = vmatpush1.bf16.msra.mxu0 0
      %1768 = vmatprep.subr.bf16.mxu0 0
      %1769 = vmatpush1.bf16.msra.mxu0 0
      %1770 = vmatprep.subr.bf16.mxu0 0
      %1771 = vmatpush1.bf16.msra.mxu0 0
      %1772 = vmatprep.subr.bf16.mxu0 0
      %1773 = vmatpush1.bf16.msra.mxu0 0
      %1774 = vmatprep.subr.bf16.mxu0 0
      %1775 = vmatpush1.bf16.msra.mxu0 0
      %1776 = vmatprep.subr.bf16.mxu0 0
      %1777 = vmatpush1.bf16.msra.mxu0 0
      %1778 = vmatprep.subr.bf16.mxu0 0
      %1779 = vmatpush1.bf16.msra.mxu0 0
      %1780 = vmatprep.mubr.bf16.mxu0 0
      %1781 = vmatmul.mubr.bf16.gmra.mrb[0].mxu0 %v984
      %v1782 = vpop.f32.mrb[0].mxu0
      %v1783 = vadd.f32 0.0, %v1782
      %v1784 = vpop.f32.mrb[0].mxu0
      %v1785 = vpop.f32.mrb[0].mxu0
      %v1786 = vadd.f32 0.0, %v1785
      %v1787 = vpop.f32.mrb[0].mxu0
      %1788 = vmatprep.mubr.bf16.mxu0 0
      %1789 = vmatmul.mubr.bf16.gmra.mrb[0].mxu0 %v985
      %v1790 = vpop.f32.mrb[0].mxu0
      %v1791 = vadd.f32 0.0, %v1790
      %v1792 = vpop.f32.mrb[0].mxu0
      %v1793 = vpop.f32.mrb[0].mxu0
      %v1794 = vadd.f32 0.0, %v1793
      %v1795 = vpop.f32.mrb[0].mxu0
      %1796 = vmatprep.mubr.bf16.mxu0 0
      %1797 = vmatmul.mubr.bf16.gmra.mrb[0].mxu0 %v986
      %v1798 = vpop.f32.mrb[0].mxu0
      %v1799 = vadd.f32 0.0, %v1798
      %v1800 = vpop.f32.mrb[0].mxu0
      %v1801 = vpop.f32.mrb[0].mxu0
      %v1802 = vadd.f32 0.0, %v1801
      %v1803 = vpop.f32.mrb[0].mxu0
      %1804 = vmatprep.mubr.bf16.mxu0 0
      %1805 = vmatmul.mubr.bf16.gmra.mrb[0].mxu0 %v987
      %v1806 = vpop.f32.mrb[0].mxu0
      %v1807 = vadd.f32 0.0, %v1806
      %v1808 = vpop.f32.mrb[0].mxu0
      %v1809 = vpop.f32.mrb[0].mxu0
      %v1810 = vadd.f32 0.0, %v1809
      %v1811 = vpop.f32.mrb[0].mxu0
      %1812 = vmatprep.mubr.bf16.mxu0 0
      %1813 = vmatmul.mubr.bf16.gmra.mrb[0].mxu0 %v988
      %v1814 = vpop.f32.mrb[0].mxu0
      %v1815 = vadd.f32 0.0, %v1814
      %v1816 = vpop.f32.mrb[0].mxu0
      %v1817 = vpop.f32.mrb[0].mxu0
      %v1818 = vadd.f32 0.0, %v1817
      %v1819 = vpop.f32.mrb[0].mxu0
      %1820 = vmatprep.mubr.bf16.mxu0 0
      %1821 = vmatmul.mubr.bf16.gmra.mrb[0].mxu0 %v989
      %v1822 = vpop.f32.mrb[0].mxu0
      %v1823 = vadd.f32 0.0, %v1822
      %v1824 = vpop.f32.mrb[0].mxu0
      %v1825 = vpop.f32.mrb[0].mxu0
      %v1826 = vadd.f32 0.0, %v1825
      %v1827 = vpop.f32.mrb[0].mxu0
      %1828 = vmatprep.mubr.bf16.mxu0 0
      %1829 = vmatmul.mubr.bf16.gmra.mrb[0].mxu0 %v990
      %v1830 = vpop.f32.mrb[0].mxu0
      %v1831 = vadd.f32 0.0, %v1830
      %v1832 = vpop.f32.mrb[0].mxu0
      %v1833 = vpop.f32.mrb[0].mxu0
      %v1834 = vadd.f32 0.0, %v1833
      %v1835 = vpop.f32.mrb[0].mxu0
      %1836 = vmatprep.mubr.bf16.mxu0 0
      %1837 = vmatmul.mubr.bf16.gmra.mrb[0].mxu0 %v991
      %v1838 = vpop.f32.mrb[0].mxu0
      %v1839 = vadd.f32 0.0, %v1838
      %v1840 = vpop.f32.mrb[0].mxu0
      %v1841 = vpop.f32.mrb[0].mxu0
      %v1842 = vadd.f32 0.0, %v1841
      %v1843 = vpop.f32.mrb[0].mxu0
      %1844 = vmatprep.mubr.bf16.mxu0 0
      %1845 = vmatmul.mubr.bf16.gmra.mrb[0].mxu0 %v992
      %v1846 = vpop.f32.mrb[0].mxu0
      %v1847 = vadd.f32 0.0, %v1846
      %v1848 = vpop.f32.mrb[0].mxu0
      %v1849 = vpop.f32.mrb[0].mxu0
      %v1850 = vadd.f32 0.0, %v1849
      %v1851 = vpop.f32.mrb[0].mxu0
      %1852 = vmatprep.mubr.bf16.mxu0 0
      %1853 = vmatmul.mubr.bf16.gmra.mrb[0].mxu0 %v993
      %v1854 = vpop.f32.mrb[0].mxu0
      %v1855 = vadd.f32 0.0, %v1854
      %v1856 = vpop.f32.mrb[0].mxu0
      %v1857 = vpop.f32.mrb[0].mxu0
      %v1858 = vadd.f32 0.0, %v1857
      %v1859 = vpop.f32.mrb[0].mxu0
      %1860 = vmatprep.mubr.bf16.mxu0 0
      %1861 = vmatmul.mubr.bf16.gmra.mrb[0].mxu0 %v994
      %v1862 = vpop.f32.mrb[0].mxu0
      %v1863 = vadd.f32 0.0, %v1862
      %v1864 = vpop.f32.mrb[0].mxu0
      %v1865 = vpop.f32.mrb[0].mxu0
      %v1866 = vadd.f32 0.0, %v1865
      %v1867 = vpop.f32.mrb[0].mxu0
      %1868 = vmatprep.mubr.bf16.mxu0 0
      %1869 = vmatmul.mubr.bf16.gmra.mrb[0].mxu0 %v995
      %v1870 = vpop.f32.mrb[0].mxu0
      %v1871 = vadd.f32 0.0, %v1870
      %v1872 = vpop.f32.mrb[0].mxu0
      %v1873 = vpop.f32.mrb[0].mxu0
      %v1874 = vadd.f32 0.0, %v1873
      %v1875 = vpop.f32.mrb[0].mxu0
      %1876 = vmatprep.mubr.bf16.mxu0 0
      %1877 = vmatmul.mubr.bf16.gmra.mrb[0].mxu0 %v996
      %v1878 = vpop.f32.mrb[0].mxu0
      %v1879 = vadd.f32 0.0, %v1878
      %v1880 = vpop.f32.mrb[0].mxu0
      %v1881 = vpop.f32.mrb[0].mxu0
      %v1882 = vadd.f32 0.0, %v1881
      %v1883 = vpop.f32.mrb[0].mxu0
      %1884 = vmatprep.mubr.bf16.mxu0 0
      %1885 = vmatmul.mubr.bf16.gmra.mrb[0].mxu0 %v997
      %v1886 = vpop.f32.mrb[0].mxu0
      %v1887 = vadd.f32 0.0, %v1886
      %v1888 = vpop.f32.mrb[0].mxu0
      %v1889 = vpop.f32.mrb[0].mxu0
      %v1890 = vadd.f32 0.0, %v1889
      %v1891 = vpop.f32.mrb[0].mxu0
      %1892 = vmatprep.mubr.bf16.mxu0 0
      %1893 = vmatmul.mubr.bf16.gmra.mrb[0].mxu0 %v998
      %v1894 = vpop.f32.mrb[0].mxu0
      %v1895 = vadd.f32 0.0, %v1894
      %v1896 = vpop.f32.mrb[0].mxu0
      %v1897 = vpop.f32.mrb[0].mxu0
      %v1898 = vadd.f32 0.0, %v1897
      %v1899 = vpop.f32.mrb[0].mxu0
      %1900 = vmatprep.mubr.bf16.mxu0 0
      %1901 = vmatmul.mubr.bf16.gmra.mrb[0].mxu0 %v1698
      %v1902 = vpop.f32.mrb[0].mxu0
      %v1903 = vadd.f32 0.0, %v1902
      %v1904 = vpop.f32.mrb[0].mxu0
      %v1905 = vpop.f32.mrb[0].mxu0
      %v1906 = vadd.f32 0.0, %v1905
      %v1907 = vpop.f32.mrb[0].mxu0
      %1908 = vdwg.mxu0
      %v1909 = vadd.f32 %v1645, %v1783
      %v1910 = vadd.f32 %v1646, %v1786
      %v1911 = vadd.f32 %v1647, %v1791
      %v1912 = vadd.f32 %v1648, %v1794
      %v1913 = vadd.f32 %v1649, %v1799
      %v1914 = vadd.f32 %v1650, %v1802
      %v1915 = vadd.f32 %v1651, %v1807
      %v1916 = vadd.f32 %v1652, %v1810
      %v1917 = vadd.f32 %v1653, %v1815
      %v1918 = vadd.f32 %v1654, %v1818
      %v1919 = vadd.f32 %v1655, %v1823
      %v1920 = vadd.f32 %v1656, %v1826
      %v1921 = vadd.f32 %v1657, %v1831
      %v1922 = vadd.f32 %v1658, %v1834
      %v1923 = vadd.f32 %v1659, %v1839
      %v1924 = vadd.f32 %v1660, %v1842
      %v1925 = vadd.f32 %v1661, %v1847
      %v1926 = vadd.f32 %v1662, %v1850
      %v1927 = vadd.f32 %v1663, %v1855
      %v1928 = vadd.f32 %v1664, %v1858
      %v1929 = vadd.f32 %v1665, %v1863
      %v1930 = vadd.f32 %v1666, %v1866
      %v1931 = vadd.f32 %v1667, %v1871
      %v1932 = vadd.f32 %v1668, %v1874
      %v1933 = vadd.f32 %v1669, %v1879
      %v1934 = vadd.f32 %v1670, %v1882
      %v1935 = vadd.f32 %v1671, %v1887
      %v1936 = vadd.f32 %v1672, %v1890
      %v1937 = vadd.f32 %v1673, %v1895
      %v1938 = vadd.f32 %v1674, %v1898
      %v1939 = vadd.f32 %v1675, %v1903
      %v1940 = vadd.f32 %v1676, %v1906
      %v1942 = vshrl.u32 %v220, 16
      %v1944 = vrot.slane %v1942, 4
      %v1945 = vshll.u32 %v220, 16
      %v1947 = vrot.slane %v1945, 5
      %v1948 = vor.u32 %v1944, %v1947
      %v1949 = vrot.slane %v1948, 4
      %v1951 = vshll.u32 %v221, 16
      %v1953 = vrot.slane %v1951, 5
      %v1954 = vsel %vm244, %v1949, %v1953
      %v1955 = vshrl.u32 %v221, 16
      %v1957 = vrot.slane %v1955, 4
      %v1958 = vor.u32 %v1957, %v1953
      %v1959 = vrot.slane %v1958, 4
      %v1961 = vshll.u32 %v222, 16
      %v1963 = vrot.slane %v1961, 5
      %v1964 = vsel %vm244, %v1959, %v1963
      %s1965 = scalar_lea.vmem %s1, 256
      %v1966 = vld [vmem:[%s1965] sm:$0xf]
      %v1967 = vld [vmem:[%s1965 + $0x4] sm:$0xf]
      %v1968 = vld [vmem:[%s1965 + $0x8] sm:$0xf]
      %v1969 = vld [vmem:[%s1965 + $0xc] sm:$0xf]
      %v1970 = vld [vmem:[%s1965 + $0x10] sm:$0xf]
      %v1971 = vld [vmem:[%s1965 + $0x14] sm:$0xf]
      %v1972 = vld [vmem:[%s1965 + $0x18] sm:$0xf]
      %v1973 = vld [vmem:[%s1965 + $0x1c] sm:$0xf]
      %v1974 = vld [vmem:[%s1965 + $0x20] sm:$0xf]
      %v1975 = vld [vmem:[%s1965 + $0x24] sm:$0xf]
      %v1976 = vld [vmem:[%s1965 + $0x28] sm:$0xf]
      %v1977 = vld [vmem:[%s1965 + $0x2c] sm:$0xf]
      %v1978 = vld [vmem:[%s1965 + $0x30] sm:$0xf]
      %v1979 = vld [vmem:[%s1965 + $0x34] sm:$0xf]
      %v1980 = vld [vmem:[%s1965 + $0x38] sm:$0xf]
      %v1981 = vld [vmem:[%s1965 + $0x3c] sm:$0xf]
      %v1982 = vunpack.c.l.b16 %v1954
      %v1983 = vunpack.c.l.b16 %v1964
      %v1984 = vpack.c.b16 %v1983, %v1982
      %v2002 = vunpack.c.l.b16 %v1966
      %v2003 = vunpack.c.l.b16 %v1967
      %v2004 = vunpack.c.l.b16 %v1968
      %v2005 = vunpack.c.l.b16 %v1969
      %v2006 = vunpack.c.l.b16 %v1970
      %v2007 = vunpack.c.l.b16 %v1971
      %v2008 = vunpack.c.l.b16 %v1972
      %v2009 = vunpack.c.l.b16 %v1973
      %v2010 = vunpack.c.l.b16 %v1974
      %v2011 = vunpack.c.l.b16 %v1975
      %v2012 = vunpack.c.l.b16 %v1976
      %v2013 = vunpack.c.l.b16 %v1977
      %v2014 = vunpack.c.l.b16 %v1978
      %v2015 = vunpack.c.l.b16 %v1979
      %v2016 = vunpack.c.l.b16 %v1980
      %v2017 = vunpack.c.l.b16 %v1981
      %v2018 = vpack.c.b16 %v2003, %v2002
      %v2019 = vpack.c.b16 %v2005, %v2004
      %v2020 = vpack.c.b16 %v2007, %v2006
      %v2021 = vpack.c.b16 %v2009, %v2008
      %v2022 = vpack.c.b16 %v2011, %v2010
      %v2023 = vpack.c.b16 %v2013, %v2012
      %v2024 = vpack.c.b16 %v2015, %v2014
      %v2025 = vpack.c.b16 %v2017, %v2016
      %2034 = vmatprep.subr.bf16.mxu0 0
      %2035 = vmatpush1.bf16.msra.mxu0 %v2018
      %2036 = vmatprep.subr.bf16.mxu0 0
      %2037 = vmatpush1.bf16.msra.mxu0 %v2019
      %2038 = vmatprep.subr.bf16.mxu0 0
      %2039 = vmatpush1.bf16.msra.mxu0 %v2020
      %2040 = vmatprep.subr.bf16.mxu0 0
      %2041 = vmatpush1.bf16.msra.mxu0 %v2021
      %2042 = vmatprep.subr.bf16.mxu0 0
      %2043 = vmatpush1.bf16.msra.mxu0 %v2022
      %2044 = vmatprep.subr.bf16.mxu0 0
      %2045 = vmatpush1.bf16.msra.mxu0 %v2023
      %2046 = vmatprep.subr.bf16.mxu0 0
      %2047 = vmatpush1.bf16.msra.mxu0 %v2024
      %2048 = vmatprep.subr.bf16.mxu0 0
      %2049 = vmatpush1.bf16.msra.mxu0 %v2025
      %2050 = vmatprep.subr.bf16.mxu0 0
      %2051 = vmatpush1.bf16.msra.mxu0 0
      %2052 = vmatprep.subr.bf16.mxu0 0
      %2053 = vmatpush1.bf16.msra.mxu0 0
      %2054 = vmatprep.subr.bf16.mxu0 0
      %2055 = vmatpush1.bf16.msra.mxu0 0
      %2056 = vmatprep.subr.bf16.mxu0 0
      %2057 = vmatpush1.bf16.msra.mxu0 0
      %2058 = vmatprep.subr.bf16.mxu0 0
      %2059 = vmatpush1.bf16.msra.mxu0 0
      %2060 = vmatprep.subr.bf16.mxu0 0
      %2061 = vmatpush1.bf16.msra.mxu0 0
      %2062 = vmatprep.subr.bf16.mxu0 0
      %2063 = vmatpush1.bf16.msra.mxu0 0
      %2064 = vmatprep.subr.bf16.mxu0 0
      %2065 = vmatpush1.bf16.msra.mxu0 0
      %2066 = vmatprep.mubr.bf16.mxu0 0
      %2067 = vmatmul.mubr.bf16.gmra.mrb[0].mxu0 %v679
      %v2068 = vpop.f32.mrb[0].mxu0
      %v2069 = vadd.f32 0.0, %v2068
      %v2070 = vpop.f32.mrb[0].mxu0
      %v2071 = vpop.f32.mrb[0].mxu0
      %v2072 = vadd.f32 0.0, %v2071
      %v2073 = vpop.f32.mrb[0].mxu0
      %2074 = vmatprep.mubr.bf16.mxu0 0
      %2075 = vmatmul.mubr.bf16.gmra.mrb[0].mxu0 %v680
      %v2076 = vpop.f32.mrb[0].mxu0
      %v2077 = vadd.f32 0.0, %v2076
      %v2078 = vpop.f32.mrb[0].mxu0
      %v2079 = vpop.f32.mrb[0].mxu0
      %v2080 = vadd.f32 0.0, %v2079
      %v2081 = vpop.f32.mrb[0].mxu0
      %2082 = vmatprep.mubr.bf16.mxu0 0
      %2083 = vmatmul.mubr.bf16.gmra.mrb[0].mxu0 %v681
      %v2084 = vpop.f32.mrb[0].mxu0
      %v2085 = vadd.f32 0.0, %v2084
      %v2086 = vpop.f32.mrb[0].mxu0
      %v2087 = vpop.f32.mrb[0].mxu0
      %v2088 = vadd.f32 0.0, %v2087
      %v2089 = vpop.f32.mrb[0].mxu0
      %2090 = vmatprep.mubr.bf16.mxu0 0
      %2091 = vmatmul.mubr.bf16.gmra.mrb[0].mxu0 %v682
      %v2092 = vpop.f32.mrb[0].mxu0
      %v2093 = vadd.f32 0.0, %v2092
      %v2094 = vpop.f32.mrb[0].mxu0
      %v2095 = vpop.f32.mrb[0].mxu0
      %v2096 = vadd.f32 0.0, %v2095
      %v2097 = vpop.f32.mrb[0].mxu0
      %2098 = vmatprep.mubr.bf16.mxu0 0
      %2099 = vmatmul.mubr.bf16.gmra.mrb[0].mxu0 %v683
      %v2100 = vpop.f32.mrb[0].mxu0
      %v2101 = vadd.f32 0.0, %v2100
      %v2102 = vpop.f32.mrb[0].mxu0
      %v2103 = vpop.f32.mrb[0].mxu0
      %v2104 = vadd.f32 0.0, %v2103
      %v2105 = vpop.f32.mrb[0].mxu0
      %2106 = vmatprep.mubr.bf16.mxu0 0
      %2107 = vmatmul.mubr.bf16.gmra.mrb[0].mxu0 %v684
      %v2108 = vpop.f32.mrb[0].mxu0
      %v2109 = vadd.f32 0.0, %v2108
      %v2110 = vpop.f32.mrb[0].mxu0
      %v2111 = vpop.f32.mrb[0].mxu0
      %v2112 = vadd.f32 0.0, %v2111
      %v2113 = vpop.f32.mrb[0].mxu0
      %2114 = vmatprep.mubr.bf16.mxu0 0
      %2115 = vmatmul.mubr.bf16.gmra.mrb[0].mxu0 %v685
      %v2116 = vpop.f32.mrb[0].mxu0
      %v2117 = vadd.f32 0.0, %v2116
      %v2118 = vpop.f32.mrb[0].mxu0
      %v2119 = vpop.f32.mrb[0].mxu0
      %v2120 = vadd.f32 0.0, %v2119
      %v2121 = vpop.f32.mrb[0].mxu0
      %2122 = vmatprep.mubr.bf16.mxu0 0
      %2123 = vmatmul.mubr.bf16.gmra.mrb[0].mxu0 %v686
      %v2124 = vpop.f32.mrb[0].mxu0
      %v2125 = vadd.f32 0.0, %v2124
      %v2126 = vpop.f32.mrb[0].mxu0
      %v2127 = vpop.f32.mrb[0].mxu0
      %v2128 = vadd.f32 0.0, %v2127
      %v2129 = vpop.f32.mrb[0].mxu0
      %2130 = vmatprep.mubr.bf16.mxu0 0
      %2131 = vmatmul.mubr.bf16.gmra.mrb[0].mxu0 %v687
      %v2132 = vpop.f32.mrb[0].mxu0
      %v2133 = vadd.f32 0.0, %v2132
      %v2134 = vpop.f32.mrb[0].mxu0
      %v2135 = vpop.f32.mrb[0].mxu0
      %v2136 = vadd.f32 0.0, %v2135
      %v2137 = vpop.f32.mrb[0].mxu0
      %2138 = vmatprep.mubr.bf16.mxu0 0
      %2139 = vmatmul.mubr.bf16.gmra.mrb[0].mxu0 %v688
      %v2140 = vpop.f32.mrb[0].mxu0
      %v2141 = vadd.f32 0.0, %v2140
      %v2142 = vpop.f32.mrb[0].mxu0
      %v2143 = vpop.f32.mrb[0].mxu0
      %v2144 = vadd.f32 0.0, %v2143
      %v2145 = vpop.f32.mrb[0].mxu0
      %2146 = vmatprep.mubr.bf16.mxu0 0
      %2147 = vmatmul.mubr.bf16.gmra.mrb[0].mxu0 %v689
      %v2148 = vpop.f32.mrb[0].mxu0
      %v2149 = vadd.f32 0.0, %v2148
      %v2150 = vpop.f32.mrb[0].mxu0
      %v2151 = vpop.f32.mrb[0].mxu0
      %v2152 = vadd.f32 0.0, %v2151
      %v2153 = vpop.f32.mrb[0].mxu0
      %2154 = vmatprep.mubr.bf16.mxu0 0
      %2155 = vmatmul.mubr.bf16.gmra.mrb[0].mxu0 %v690
      %v2156 = vpop.f32.mrb[0].mxu0
      %v2157 = vadd.f32 0.0, %v2156
      %v2158 = vpop.f32.mrb[0].mxu0
      %v2159 = vpop.f32.mrb[0].mxu0
      %v2160 = vadd.f32 0.0, %v2159
      %v2161 = vpop.f32.mrb[0].mxu0
      %2162 = vmatprep.mubr.bf16.mxu0 0
      %2163 = vmatmul.mubr.bf16.gmra.mrb[0].mxu0 %v691
      %v2164 = vpop.f32.mrb[0].mxu0
      %v2165 = vadd.f32 0.0, %v2164
      %v2166 = vpop.f32.mrb[0].mxu0
      %v2167 = vpop.f32.mrb[0].mxu0
      %v2168 = vadd.f32 0.0, %v2167
      %v2169 = vpop.f32.mrb[0].mxu0
      %2170 = vmatprep.mubr.bf16.mxu0 0
      %2171 = vmatmul.mubr.bf16.gmra.mrb[0].mxu0 %v692
      %v2172 = vpop.f32.mrb[0].mxu0
      %v2173 = vadd.f32 0.0, %v2172
      %v2174 = vpop.f32.mrb[0].mxu0
      %v2175 = vpop.f32.mrb[0].mxu0
      %v2176 = vadd.f32 0.0, %v2175
      %v2177 = vpop.f32.mrb[0].mxu0
      %2178 = vmatprep.mubr.bf16.mxu0 0
      %2179 = vmatmul.mubr.bf16.gmra.mrb[0].mxu0 %v693
      %v2180 = vpop.f32.mrb[0].mxu0
      %v2181 = vadd.f32 0.0, %v2180
      %v2182 = vpop.f32.mrb[0].mxu0
      %v2183 = vpop.f32.mrb[0].mxu0
      %v2184 = vadd.f32 0.0, %v2183
      %v2185 = vpop.f32.mrb[0].mxu0
      %2186 = vmatprep.mubr.bf16.mxu0 0
      %2187 = vmatmul.mubr.bf16.gmra.mrb[0].mxu0 %v1984
      %v2188 = vpop.f32.mrb[0].mxu0
      %v2189 = vadd.f32 0.0, %v2188
      %v2190 = vpop.f32.mrb[0].mxu0
      %v2191 = vpop.f32.mrb[0].mxu0
      %v2192 = vadd.f32 0.0, %v2191
      %v2193 = vpop.f32.mrb[0].mxu0
      %2194 = vdwg.mxu0
      %v2195 = vadd.f32 %v1909, %v2069
      %v2196 = vadd.f32 %v1910, %v2072
      %v2197 = vadd.f32 %v1911, %v2077
      %v2198 = vadd.f32 %v1912, %v2080
      %v2199 = vadd.f32 %v1913, %v2085
      %v2200 = vadd.f32 %v1914, %v2088
      %v2201 = vadd.f32 %v1915, %v2093
      %v2202 = vadd.f32 %v1916, %v2096
      %v2203 = vadd.f32 %v1917, %v2101
      %v2204 = vadd.f32 %v1918, %v2104
      %v2205 = vadd.f32 %v1919, %v2109
      %v2206 = vadd.f32 %v1920, %v2112
      %v2207 = vadd.f32 %v1921, %v2117
      %v2208 = vadd.f32 %v1922, %v2120
      %v2209 = vadd.f32 %v1923, %v2125
      %v2210 = vadd.f32 %v1924, %v2128
      %v2211 = vadd.f32 %v1925, %v2133
      %v2212 = vadd.f32 %v1926, %v2136
      %v2213 = vadd.f32 %v1927, %v2141
      %v2214 = vadd.f32 %v1928, %v2144
      %v2215 = vadd.f32 %v1929, %v2149
      %v2216 = vadd.f32 %v1930, %v2152
      %v2217 = vadd.f32 %v1931, %v2157
      %v2218 = vadd.f32 %v1932, %v2160
      %v2219 = vadd.f32 %v1933, %v2165
      %v2220 = vadd.f32 %v1934, %v2168
      %v2221 = vadd.f32 %v1935, %v2173
      %v2222 = vadd.f32 %v1936, %v2176
      %v2223 = vadd.f32 %v1937, %v2181
      %v2224 = vadd.f32 %v1938, %v2184
      %v2225 = vadd.f32 %v1939, %v2189
      %v2226 = vadd.f32 %v1940, %v2192
      %v2228 = vrot.slane %v220, 5
      %v2229 = vrot.slane %v2228, 4
      %v2230 = vrot.slane %v221, 5
      %v2231 = vsel %vm1242, %v2229, %v2230
      %v2232 = vrot.slane %v2230, 4
      %v2233 = vrot.slane %v222, 5
      %v2234 = vsel %vm1242, %v2232, %v2233
      %s2235 = scalar_lea.vmem %s1, 320
      %v2236 = vld [vmem:[%s2235] sm:$0xf]
      %v2237 = vld [vmem:[%s2235 + $0x4] sm:$0xf]
      %v2238 = vld [vmem:[%s2235 + $0x8] sm:$0xf]
      %v2239 = vld [vmem:[%s2235 + $0xc] sm:$0xf]
      %v2240 = vld [vmem:[%s2235 + $0x10] sm:$0xf]
      %v2241 = vld [vmem:[%s2235 + $0x14] sm:$0xf]
      %v2242 = vld [vmem:[%s2235 + $0x18] sm:$0xf]
      %v2243 = vld [vmem:[%s2235 + $0x1c] sm:$0xf]
      %v2244 = vld [vmem:[%s2235 + $0x20] sm:$0xf]
      %v2245 = vld [vmem:[%s2235 + $0x24] sm:$0xf]
      %v2246 = vld [vmem:[%s2235 + $0x28] sm:$0xf]
      %v2247 = vld [vmem:[%s2235 + $0x2c] sm:$0xf]
      %v2248 = vld [vmem:[%s2235 + $0x30] sm:$0xf]
      %v2249 = vld [vmem:[%s2235 + $0x34] sm:$0xf]
      %v2250 = vld [vmem:[%s2235 + $0x38] sm:$0xf]
      %v2251 = vld [vmem:[%s2235 + $0x3c] sm:$0xf]
      %v2252 = vunpack.c.l.b16 %v2231
      %v2253 = vunpack.c.l.b16 %v2234
      %v2254 = vpack.c.b16 %v2253, %v2252
      %v2272 = vunpack.c.l.b16 %v2236
      %v2273 = vunpack.c.l.b16 %v2237
      %v2274 = vunpack.c.l.b16 %v2238
      %v2275 = vunpack.c.l.b16 %v2239
      %v2276 = vunpack.c.l.b16 %v2240
      %v2277 = vunpack.c.l.b16 %v2241
      %v2278 = vunpack.c.l.b16 %v2242
      %v2279 = vunpack.c.l.b16 %v2243
      %v2280 = vunpack.c.l.b16 %v2244
      %v2281 = vunpack.c.l.b16 %v2245
      %v2282 = vunpack.c.l.b16 %v2246
      %v2283 = vunpack.c.l.b16 %v2247
      %v2284 = vunpack.c.l.b16 %v2248
      %v2285 = vunpack.c.l.b16 %v2249
      %v2286 = vunpack.c.l.b16 %v2250
      %v2287 = vunpack.c.l.b16 %v2251
      %v2288 = vpack.c.b16 %v2273, %v2272
      %v2289 = vpack.c.b16 %v2275, %v2274
      %v2290 = vpack.c.b16 %v2277, %v2276
      %v2291 = vpack.c.b16 %v2279, %v2278
      %v2292 = vpack.c.b16 %v2281, %v2280
      %v2293 = vpack.c.b16 %v2283, %v2282
      %v2294 = vpack.c.b16 %v2285, %v2284
      %v2295 = vpack.c.b16 %v2287, %v2286
      %2304 = vmatprep.subr.bf16.mxu0 0
      %2305 = vmatpush1.bf16.msra.mxu0 %v2288
      %2306 = vmatprep.subr.bf16.mxu0 0
      %2307 = vmatpush1.bf16.msra.mxu0 %v2289
      %2308 = vmatprep.subr.bf16.mxu0 0
      %2309 = vmatpush1.bf16.msra.mxu0 %v2290
      %2310 = vmatprep.subr.bf16.mxu0 0
      %2311 = vmatpush1.bf16.msra.mxu0 %v2291
      %2312 = vmatprep.subr.bf16.mxu0 0
      %2313 = vmatpush1.bf16.msra.mxu0 %v2292
      %2314 = vmatprep.subr.bf16.mxu0 0
      %2315 = vmatpush1.bf16.msra.mxu0 %v2293
      %2316 = vmatprep.subr.bf16.mxu0 0
      %2317 = vmatpush1.bf16.msra.mxu0 %v2294
      %2318 = vmatprep.subr.bf16.mxu0 0
      %2319 = vmatpush1.bf16.msra.mxu0 %v2295
      %2320 = vmatprep.subr.bf16.mxu0 0
      %2321 = vmatpush1.bf16.msra.mxu0 0
      %2322 = vmatprep.subr.bf16.mxu0 0
      %2323 = vmatpush1.bf16.msra.mxu0 0
      %2324 = vmatprep.subr.bf16.mxu0 0
      %2325 = vmatpush1.bf16.msra.mxu0 0
      %2326 = vmatprep.subr.bf16.mxu0 0
      %2327 = vmatpush1.bf16.msra.mxu0 0
      %2328 = vmatprep.subr.bf16.mxu0 0
      %2329 = vmatpush1.bf16.msra.mxu0 0
      %2330 = vmatprep.subr.bf16.mxu0 0
      %2331 = vmatpush1.bf16.msra.mxu0 0
      %2332 = vmatprep.subr.bf16.mxu0 0
      %2333 = vmatpush1.bf16.msra.mxu0 0
      %2334 = vmatprep.subr.bf16.mxu0 0
      %2335 = vmatpush1.bf16.msra.mxu0 0
      %2336 = vmatprep.mubr.bf16.mxu0 0
      %2337 = vmatmul.mubr.bf16.gmra.mrb[0].mxu0 %v1405
      %v2338 = vpop.f32.mrb[0].mxu0
      %v2339 = vadd.f32 0.0, %v2338
      %v2340 = vpop.f32.mrb[0].mxu0
      %v2341 = vpop.f32.mrb[0].mxu0
      %v2342 = vadd.f32 0.0, %v2341
      %v2343 = vpop.f32.mrb[0].mxu0
      %2344 = vmatprep.mubr.bf16.mxu0 0
      %2345 = vmatmul.mubr.bf16.gmra.mrb[0].mxu0 %v1406
      %v2346 = vpop.f32.mrb[0].mxu0
      %v2347 = vadd.f32 0.0, %v2346
      %v2348 = vpop.f32.mrb[0].mxu0
      %v2349 = vpop.f32.mrb[0].mxu0
      %v2350 = vadd.f32 0.0, %v2349
      %v2351 = vpop.f32.mrb[0].mxu0
      %2352 = vmatprep.mubr.bf16.mxu0 0
      %2353 = vmatmul.mubr.bf16.gmra.mrb[0].mxu0 %v1407
      %v2354 = vpop.f32.mrb[0].mxu0
      %v2355 = vadd.f32 0.0, %v2354
      %v2356 = vpop.f32.mrb[0].mxu0
      %v2357 = vpop.f32.mrb[0].mxu0
      %v2358 = vadd.f32 0.0, %v2357
      %v2359 = vpop.f32.mrb[0].mxu0
      %2360 = vmatprep.mubr.bf16.mxu0 0
      %2361 = vmatmul.mubr.bf16.gmra.mrb[0].mxu0 %v1408
      %v2362 = vpop.f32.mrb[0].mxu0
      %v2363 = vadd.f32 0.0, %v2362
      %v2364 = vpop.f32.mrb[0].mxu0
      %v2365 = vpop.f32.mrb[0].mxu0
      %v2366 = vadd.f32 0.0, %v2365
      %v2367 = vpop.f32.mrb[0].mxu0
      %2368 = vmatprep.mubr.bf16.mxu0 0
      %2369 = vmatmul.mubr.bf16.gmra.mrb[0].mxu0 %v1409
      %v2370 = vpop.f32.mrb[0].mxu0
      %v2371 = vadd.f32 0.0, %v2370
      %v2372 = vpop.f32.mrb[0].mxu0
      %v2373 = vpop.f32.mrb[0].mxu0
      %v2374 = vadd.f32 0.0, %v2373
      %v2375 = vpop.f32.mrb[0].mxu0
      %2376 = vmatprep.mubr.bf16.mxu0 0
      %2377 = vmatmul.mubr.bf16.gmra.mrb[0].mxu0 %v1410
      %v2378 = vpop.f32.mrb[0].mxu0
      %v2379 = vadd.f32 0.0, %v2378
      %v2380 = vpop.f32.mrb[0].mxu0
      %v2381 = vpop.f32.mrb[0].mxu0
      %v2382 = vadd.f32 0.0, %v2381
      %v2383 = vpop.f32.mrb[0].mxu0
      %2384 = vmatprep.mubr.bf16.mxu0 0
      %2385 = vmatmul.mubr.bf16.gmra.mrb[0].mxu0 %v1411
      %v2386 = vpop.f32.mrb[0].mxu0
      %v2387 = vadd.f32 0.0, %v2386
      %v2388 = vpop.f32.mrb[0].mxu0
      %v2389 = vpop.f32.mrb[0].mxu0
      %v2390 = vadd.f32 0.0, %v2389
      %v2391 = vpop.f32.mrb[0].mxu0
      %2392 = vmatprep.mubr.bf16.mxu0 0
      %2393 = vmatmul.mubr.bf16.gmra.mrb[0].mxu0 %v1412
      %v2394 = vpop.f32.mrb[0].mxu0
      %v2395 = vadd.f32 0.0, %v2394
      %v2396 = vpop.f32.mrb[0].mxu0
      %v2397 = vpop.f32.mrb[0].mxu0
      %v2398 = vadd.f32 0.0, %v2397
      %v2399 = vpop.f32.mrb[0].mxu0
      %2400 = vmatprep.mubr.bf16.mxu0 0
      %2401 = vmatmul.mubr.bf16.gmra.mrb[0].mxu0 %v1413
      %v2402 = vpop.f32.mrb[0].mxu0
      %v2403 = vadd.f32 0.0, %v2402
      %v2404 = vpop.f32.mrb[0].mxu0
      %v2405 = vpop.f32.mrb[0].mxu0
      %v2406 = vadd.f32 0.0, %v2405
      %v2407 = vpop.f32.mrb[0].mxu0
      %2408 = vmatprep.mubr.bf16.mxu0 0
      %2409 = vmatmul.mubr.bf16.gmra.mrb[0].mxu0 %v1414
      %v2410 = vpop.f32.mrb[0].mxu0
      %v2411 = vadd.f32 0.0, %v2410
      %v2412 = vpop.f32.mrb[0].mxu0
      %v2413 = vpop.f32.mrb[0].mxu0
      %v2414 = vadd.f32 0.0, %v2413
      %v2415 = vpop.f32.mrb[0].mxu0
      %2416 = vmatprep.mubr.bf16.mxu0 0
      %2417 = vmatmul.mubr.bf16.gmra.mrb[0].mxu0 %v1415
      %v2418 = vpop.f32.mrb[0].mxu0
      %v2419 = vadd.f32 0.0, %v2418
      %v2420 = vpop.f32.mrb[0].mxu0
      %v2421 = vpop.f32.mrb[0].mxu0
      %v2422 = vadd.f32 0.0, %v2421
      %v2423 = vpop.f32.mrb[0].mxu0
      %2424 = vmatprep.mubr.bf16.mxu0 0
      %2425 = vmatmul.mubr.bf16.gmra.mrb[0].mxu0 %v1416
      %v2426 = vpop.f32.mrb[0].mxu0
      %v2427 = vadd.f32 0.0, %v2426
      %v2428 = vpop.f32.mrb[0].mxu0
      %v2429 = vpop.f32.mrb[0].mxu0
      %v2430 = vadd.f32 0.0, %v2429
      %v2431 = vpop.f32.mrb[0].mxu0
      %2432 = vmatprep.mubr.bf16.mxu0 0
      %2433 = vmatmul.mubr.bf16.gmra.mrb[0].mxu0 %v1417
      %v2434 = vpop.f32.mrb[0].mxu0
      %v2435 = vadd.f32 0.0, %v2434
      %v2436 = vpop.f32.mrb[0].mxu0
      %v2437 = vpop.f32.mrb[0].mxu0
      %v2438 = vadd.f32 0.0, %v2437
      %v2439 = vpop.f32.mrb[0].mxu0
      %2440 = vmatprep.mubr.bf16.mxu0 0
      %2441 = vmatmul.mubr.bf16.gmra.mrb[0].mxu0 %v1418
      %v2442 = vpop.f32.mrb[0].mxu0
      %v2443 = vadd.f32 0.0, %v2442
      %v2444 = vpop.f32.mrb[0].mxu0
      %v2445 = vpop.f32.mrb[0].mxu0
      %v2446 = vadd.f32 0.0, %v2445
      %v2447 = vpop.f32.mrb[0].mxu0
      %2448 = vmatprep.mubr.bf16.mxu0 0
      %2449 = vmatmul.mubr.bf16.gmra.mrb[0].mxu0 %v1419
      %v2450 = vpop.f32.mrb[0].mxu0
      %v2451 = vadd.f32 0.0, %v2450
      %v2452 = vpop.f32.mrb[0].mxu0
      %v2453 = vpop.f32.mrb[0].mxu0
      %v2454 = vadd.f32 0.0, %v2453
      %v2455 = vpop.f32.mrb[0].mxu0
      %2456 = vmatprep.mubr.bf16.mxu0 0
      %2457 = vmatmul.mubr.bf16.gmra.mrb[0].mxu0 %v2254
      %v2458 = vpop.f32.mrb[0].mxu0
      %v2459 = vadd.f32 0.0, %v2458
      %v2460 = vpop.f32.mrb[0].mxu0
      %v2461 = vpop.f32.mrb[0].mxu0
      %v2462 = vadd.f32 0.0, %v2461
      %v2463 = vpop.f32.mrb[0].mxu0
      %2464 = vdwg.mxu0
      %v2465 = vadd.f32 %v2195, %v2339
      %v2466 = vadd.f32 %v2196, %v2342
      %v2467 = vadd.f32 %v2197, %v2347
      %v2468 = vadd.f32 %v2198, %v2350
      %v2469 = vadd.f32 %v2199, %v2355
      %v2470 = vadd.f32 %v2200, %v2358
      %v2471 = vadd.f32 %v2201, %v2363
      %v2472 = vadd.f32 %v2202, %v2366
      %v2473 = vadd.f32 %v2203, %v2371
      %v2474 = vadd.f32 %v2204, %v2374
      %v2475 = vadd.f32 %v2205, %v2379
      %v2476 = vadd.f32 %v2206, %v2382
      %v2477 = vadd.f32 %v2207, %v2387
      %v2478 = vadd.f32 %v2208, %v2390
      %v2479 = vadd.f32 %v2209, %v2395
      %v2480 = vadd.f32 %v2210, %v2398
      %v2481 = vadd.f32 %v2211, %v2403
      %v2482 = vadd.f32 %v2212, %v2406
      %v2483 = vadd.f32 %v2213, %v2411
      %v2484 = vadd.f32 %v2214, %v2414
      %v2485 = vadd.f32 %v2215, %v2419
      %v2486 = vadd.f32 %v2216, %v2422
      %v2487 = vadd.f32 %v2217, %v2427
      %v2488 = vadd.f32 %v2218, %v2430
      %v2489 = vadd.f32 %v2219, %v2435
      %v2490 = vadd.f32 %v2220, %v2438
      %v2491 = vadd.f32 %v2221, %v2443
      %v2492 = vadd.f32 %v2222, %v2446
      %v2493 = vadd.f32 %v2223, %v2451
      %v2494 = vadd.f32 %v2224, %v2454
      %v2495 = vadd.f32 %v2225, %v2459
      %v2496 = vadd.f32 %v2226, %v2462
      %s2497 = scalar_lea.vmem %s1, 384
      %v2498 = vld [vmem:[%s2497] sm:$0xf]
      %v2499 = vld [vmem:[%s2497 + $0x4] sm:$0xf]
      %v2500 = vld [vmem:[%s2497 + $0x8] sm:$0xf]
      %v2501 = vld [vmem:[%s2497 + $0xc] sm:$0xf]
      %v2502 = vld [vmem:[%s2497 + $0x10] sm:$0xf]
      %v2503 = vld [vmem:[%s2497 + $0x14] sm:$0xf]
      %v2504 = vld [vmem:[%s2497 + $0x18] sm:$0xf]
      %v2505 = vld [vmem:[%s2497 + $0x1c] sm:$0xf]
      %v2506 = vld [vmem:[%s2497 + $0x20] sm:$0xf]
      %v2507 = vld [vmem:[%s2497 + $0x24] sm:$0xf]
      %v2508 = vld [vmem:[%s2497 + $0x28] sm:$0xf]
      %v2509 = vld [vmem:[%s2497 + $0x2c] sm:$0xf]
      %v2510 = vld [vmem:[%s2497 + $0x30] sm:$0xf]
      %v2511 = vld [vmem:[%s2497 + $0x34] sm:$0xf]
      %v2512 = vld [vmem:[%s2497 + $0x38] sm:$0xf]
      %v2513 = vld [vmem:[%s2497 + $0x3c] sm:$0xf]
      %v2516 = vunpack.c.l.b16 %v223
      %v2517 = vunpack.c.l.b16 %v224
      %v2518 = vpack.c.b16 %v2517, %v2516
      %v2536 = vunpack.c.l.b16 %v2498
      %v2537 = vunpack.c.l.b16 %v2499
      %v2538 = vunpack.c.l.b16 %v2500
      %v2539 = vunpack.c.l.b16 %v2501
      %v2540 = vunpack.c.l.b16 %v2502
      %v2541 = vunpack.c.l.b16 %v2503
      %v2542 = vunpack.c.l.b16 %v2504
      %v2543 = vunpack.c.l.b16 %v2505
      %v2544 = vunpack.c.l.b16 %v2506
      %v2545 = vunpack.c.l.b16 %v2507
      %v2546 = vunpack.c.l.b16 %v2508
      %v2547 = vunpack.c.l.b16 %v2509
      %v2548 = vunpack.c.l.b16 %v2510
      %v2549 = vunpack.c.l.b16 %v2511
      %v2550 = vunpack.c.l.b16 %v2512
      %v2551 = vunpack.c.l.b16 %v2513
      %v2552 = vpack.c.b16 %v2537, %v2536
      %v2553 = vpack.c.b16 %v2539, %v2538
      %v2554 = vpack.c.b16 %v2541, %v2540
      %v2555 = vpack.c.b16 %v2543, %v2542
      %v2556 = vpack.c.b16 %v2545, %v2544
      %v2557 = vpack.c.b16 %v2547, %v2546
      %v2558 = vpack.c.b16 %v2549, %v2548
      %v2559 = vpack.c.b16 %v2551, %v2550
      %2568 = vmatprep.subr.bf16.mxu0 0
      %2569 = vmatpush1.bf16.msra.mxu0 %v2552
      %2570 = vmatprep.subr.bf16.mxu0 0
      %2571 = vmatpush1.bf16.msra.mxu0 %v2553
      %2572 = vmatprep.subr.bf16.mxu0 0
      %2573 = vmatpush1.bf16.msra.mxu0 %v2554
      %2574 = vmatprep.subr.bf16.mxu0 0
      %2575 = vmatpush1.bf16.msra.mxu0 %v2555
      %2576 = vmatprep.subr.bf16.mxu0 0
      %2577 = vmatpush1.bf16.msra.mxu0 %v2556
      %2578 = vmatprep.subr.bf16.mxu0 0
      %2579 = vmatpush1.bf16.msra.mxu0 %v2557
      %2580 = vmatprep.subr.bf16.mxu0 0
      %2581 = vmatpush1.bf16.msra.mxu0 %v2558
      %2582 = vmatprep.subr.bf16.mxu0 0
      %2583 = vmatpush1.bf16.msra.mxu0 %v2559
      %2584 = vmatprep.subr.bf16.mxu0 0
      %2585 = vmatpush1.bf16.msra.mxu0 0
      %2586 = vmatprep.subr.bf16.mxu0 0
      %2587 = vmatpush1.bf16.msra.mxu0 0
      %2588 = vmatprep.subr.bf16.mxu0 0
      %2589 = vmatpush1.bf16.msra.mxu0 0
      %2590 = vmatprep.subr.bf16.mxu0 0
      %2591 = vmatpush1.bf16.msra.mxu0 0
      %2592 = vmatprep.subr.bf16.mxu0 0
      %2593 = vmatpush1.bf16.msra.mxu0 0
      %2594 = vmatprep.subr.bf16.mxu0 0
      %2595 = vmatpush1.bf16.msra.mxu0 0
      %2596 = vmatprep.subr.bf16.mxu0 0
      %2597 = vmatpush1.bf16.msra.mxu0 0
      %2598 = vmatprep.subr.bf16.mxu0 0
      %2599 = vmatpush1.bf16.msra.mxu0 0
      %2600 = vmatprep.mubr.bf16.mxu0 0
      %2601 = vmatmul.mubr.bf16.gmra.mrb[0].mxu0 %v985
      %v2602 = vpop.f32.mrb[0].mxu0
      %v2603 = vadd.f32 0.0, %v2602
      %v2604 = vpop.f32.mrb[0].mxu0
      %v2605 = vpop.f32.mrb[0].mxu0
      %v2606 = vadd.f32 0.0, %v2605
      %v2607 = vpop.f32.mrb[0].mxu0
      %2608 = vmatprep.mubr.bf16.mxu0 0
      %2609 = vmatmul.mubr.bf16.gmra.mrb[0].mxu0 %v986
      %v2610 = vpop.f32.mrb[0].mxu0
      %v2611 = vadd.f32 0.0, %v2610
      %v2612 = vpop.f32.mrb[0].mxu0
      %v2613 = vpop.f32.mrb[0].mxu0
      %v2614 = vadd.f32 0.0, %v2613
      %v2615 = vpop.f32.mrb[0].mxu0
      %2616 = vmatprep.mubr.bf16.mxu0 0
      %2617 = vmatmul.mubr.bf16.gmra.mrb[0].mxu0 %v987
      %v2618 = vpop.f32.mrb[0].mxu0
      %v2619 = vadd.f32 0.0, %v2618
      %v2620 = vpop.f32.mrb[0].mxu0
      %v2621 = vpop.f32.mrb[0].mxu0
      %v2622 = vadd.f32 0.0, %v2621
      %v2623 = vpop.f32.mrb[0].mxu0
      %2624 = vmatprep.mubr.bf16.mxu0 0
      %2625 = vmatmul.mubr.bf16.gmra.mrb[0].mxu0 %v988
      %v2626 = vpop.f32.mrb[0].mxu0
      %v2627 = vadd.f32 0.0, %v2626
      %v2628 = vpop.f32.mrb[0].mxu0
      %v2629 = vpop.f32.mrb[0].mxu0
      %v2630 = vadd.f32 0.0, %v2629
      %v2631 = vpop.f32.mrb[0].mxu0
      %2632 = vmatprep.mubr.bf16.mxu0 0
      %2633 = vmatmul.mubr.bf16.gmra.mrb[0].mxu0 %v989
      %v2634 = vpop.f32.mrb[0].mxu0
      %v2635 = vadd.f32 0.0, %v2634
      %v2636 = vpop.f32.mrb[0].mxu0
      %v2637 = vpop.f32.mrb[0].mxu0
      %v2638 = vadd.f32 0.0, %v2637
      %v2639 = vpop.f32.mrb[0].mxu0
      %2640 = vmatprep.mubr.bf16.mxu0 0
      %2641 = vmatmul.mubr.bf16.gmra.mrb[0].mxu0 %v990
      %v2642 = vpop.f32.mrb[0].mxu0
      %v2643 = vadd.f32 0.0, %v2642
      %v2644 = vpop.f32.mrb[0].mxu0
      %v2645 = vpop.f32.mrb[0].mxu0
      %v2646 = vadd.f32 0.0, %v2645
      %v2647 = vpop.f32.mrb[0].mxu0
      %2648 = vmatprep.mubr.bf16.mxu0 0
      %2649 = vmatmul.mubr.bf16.gmra.mrb[0].mxu0 %v991
      %v2650 = vpop.f32.mrb[0].mxu0
      %v2651 = vadd.f32 0.0, %v2650
      %v2652 = vpop.f32.mrb[0].mxu0
      %v2653 = vpop.f32.mrb[0].mxu0
      %v2654 = vadd.f32 0.0, %v2653
      %v2655 = vpop.f32.mrb[0].mxu0
      %2656 = vmatprep.mubr.bf16.mxu0 0
      %2657 = vmatmul.mubr.bf16.gmra.mrb[0].mxu0 %v992
      %v2658 = vpop.f32.mrb[0].mxu0
      %v2659 = vadd.f32 0.0, %v2658
      %v2660 = vpop.f32.mrb[0].mxu0
      %v2661 = vpop.f32.mrb[0].mxu0
      %v2662 = vadd.f32 0.0, %v2661
      %v2663 = vpop.f32.mrb[0].mxu0
      %2664 = vmatprep.mubr.bf16.mxu0 0
      %2665 = vmatmul.mubr.bf16.gmra.mrb[0].mxu0 %v993
      %v2666 = vpop.f32.mrb[0].mxu0
      %v2667 = vadd.f32 0.0, %v2666
      %v2668 = vpop.f32.mrb[0].mxu0
      %v2669 = vpop.f32.mrb[0].mxu0
      %v2670 = vadd.f32 0.0, %v2669
      %v2671 = vpop.f32.mrb[0].mxu0
      %2672 = vmatprep.mubr.bf16.mxu0 0
      %2673 = vmatmul.mubr.bf16.gmra.mrb[0].mxu0 %v994
      %v2674 = vpop.f32.mrb[0].mxu0
      %v2675 = vadd.f32 0.0, %v2674
      %v2676 = vpop.f32.mrb[0].mxu0
      %v2677 = vpop.f32.mrb[0].mxu0
      %v2678 = vadd.f32 0.0, %v2677
      %v2679 = vpop.f32.mrb[0].mxu0
      %2680 = vmatprep.mubr.bf16.mxu0 0
      %2681 = vmatmul.mubr.bf16.gmra.mrb[0].mxu0 %v995
      %v2682 = vpop.f32.mrb[0].mxu0
      %v2683 = vadd.f32 0.0, %v2682
      %v2684 = vpop.f32.mrb[0].mxu0
      %v2685 = vpop.f32.mrb[0].mxu0
      %v2686 = vadd.f32 0.0, %v2685
      %v2687 = vpop.f32.mrb[0].mxu0
      %2688 = vmatprep.mubr.bf16.mxu0 0
      %2689 = vmatmul.mubr.bf16.gmra.mrb[0].mxu0 %v996
      %v2690 = vpop.f32.mrb[0].mxu0
      %v2691 = vadd.f32 0.0, %v2690
      %v2692 = vpop.f32.mrb[0].mxu0
      %v2693 = vpop.f32.mrb[0].mxu0
      %v2694 = vadd.f32 0.0, %v2693
      %v2695 = vpop.f32.mrb[0].mxu0
      %2696 = vmatprep.mubr.bf16.mxu0 0
      %2697 = vmatmul.mubr.bf16.gmra.mrb[0].mxu0 %v997
      %v2698 = vpop.f32.mrb[0].mxu0
      %v2699 = vadd.f32 0.0, %v2698
      %v2700 = vpop.f32.mrb[0].mxu0
      %v2701 = vpop.f32.mrb[0].mxu0
      %v2702 = vadd.f32 0.0, %v2701
      %v2703 = vpop.f32.mrb[0].mxu0
      %2704 = vmatprep.mubr.bf16.mxu0 0
      %2705 = vmatmul.mubr.bf16.gmra.mrb[0].mxu0 %v998
      %v2706 = vpop.f32.mrb[0].mxu0
      %v2707 = vadd.f32 0.0, %v2706
      %v2708 = vpop.f32.mrb[0].mxu0
      %v2709 = vpop.f32.mrb[0].mxu0
      %v2710 = vadd.f32 0.0, %v2709
      %v2711 = vpop.f32.mrb[0].mxu0
      %2712 = vmatprep.mubr.bf16.mxu0 0
      %2713 = vmatmul.mubr.bf16.gmra.mrb[0].mxu0 %v1698
      %v2714 = vpop.f32.mrb[0].mxu0
      %v2715 = vadd.f32 0.0, %v2714
      %v2716 = vpop.f32.mrb[0].mxu0
      %v2717 = vpop.f32.mrb[0].mxu0
      %v2718 = vadd.f32 0.0, %v2717
      %v2719 = vpop.f32.mrb[0].mxu0
      %2720 = vmatprep.mubr.bf16.mxu0 0
      %2721 = vmatmul.mubr.bf16.gmra.mrb[0].mxu0 %v2518
      %v2722 = vpop.f32.mrb[0].mxu0
      %v2723 = vadd.f32 0.0, %v2722
      %v2724 = vpop.f32.mrb[0].mxu0
      %v2725 = vpop.f32.mrb[0].mxu0
      %v2726 = vadd.f32 0.0, %v2725
      %v2727 = vpop.f32.mrb[0].mxu0
      %2728 = vdwg.mxu0
      %v2729 = vadd.f32 %v2465, %v2603
      %v2730 = vadd.f32 %v2466, %v2606
      %v2731 = vadd.f32 %v2467, %v2611
      %v2732 = vadd.f32 %v2468, %v2614
      %v2733 = vadd.f32 %v2469, %v2619
      %v2734 = vadd.f32 %v2470, %v2622
      %v2735 = vadd.f32 %v2471, %v2627
      %v2736 = vadd.f32 %v2472, %v2630
      %v2737 = vadd.f32 %v2473, %v2635
      %v2738 = vadd.f32 %v2474, %v2638
      %v2739 = vadd.f32 %v2475, %v2643
      %v2740 = vadd.f32 %v2476, %v2646
      %v2741 = vadd.f32 %v2477, %v2651
      %v2742 = vadd.f32 %v2478, %v2654
      %v2743 = vadd.f32 %v2479, %v2659
      %v2744 = vadd.f32 %v2480, %v2662
      %v2745 = vadd.f32 %v2481, %v2667
      %v2746 = vadd.f32 %v2482, %v2670
      %v2747 = vadd.f32 %v2483, %v2675
      %v2748 = vadd.f32 %v2484, %v2678
      %v2749 = vadd.f32 %v2485, %v2683
      %v2750 = vadd.f32 %v2486, %v2686
      %v2751 = vadd.f32 %v2487, %v2691
      %v2752 = vadd.f32 %v2488, %v2694
      %v2753 = vadd.f32 %v2489, %v2699
      %v2754 = vadd.f32 %v2490, %v2702
      %v2755 = vadd.f32 %v2491, %v2707
      %v2756 = vadd.f32 %v2492, %v2710
      %v2757 = vadd.f32 %v2493, %v2715
      %v2758 = vadd.f32 %v2494, %v2718
      %v2759 = vadd.f32 %v2495, %v2723
      %v2760 = vadd.f32 %v2496, %v2726
      %v2762 = vshrl.u32 %v223, 16
      %v2764 = vrot.slane %v2762, 4
      %v2765 = vshll.u32 %v223, 16
      %v2767 = vrot.slane %v2765, 5
      %v2768 = vor.u32 %v2764, %v2767
      %v2769 = vrot.slane %v2768, 4
      %v2771 = vshll.u32 %v224, 16
      %v2773 = vrot.slane %v2771, 5
      %v2774 = vsel %vm244, %v2769, %v2773
      %v2775 = vshrl.u32 %v224, 16
      %v2777 = vrot.slane %v2775, 4
      %v2778 = vor.u32 %v2777, %v2773
      %v2779 = vrot.slane %v2778, 4
      %v2781 = vshll.u32 %v225, 16
      %v2783 = vrot.slane %v2781, 5
      %v2784 = vsel %vm244, %v2779, %v2783
      %s2785 = scalar_lea.vmem %s1, 448
      %v2786 = vld [vmem:[%s2785] sm:$0xf]
      %v2787 = vld [vmem:[%s2785 + $0x4] sm:$0xf]
      %v2788 = vld [vmem:[%s2785 + $0x8] sm:$0xf]
      %v2789 = vld [vmem:[%s2785 + $0xc] sm:$0xf]
      %v2790 = vld [vmem:[%s2785 + $0x10] sm:$0xf]
      %v2791 = vld [vmem:[%s2785 + $0x14] sm:$0xf]
      %v2792 = vld [vmem:[%s2785 + $0x18] sm:$0xf]
      %v2793 = vld [vmem:[%s2785 + $0x1c] sm:$0xf]
      %v2794 = vld [vmem:[%s2785 + $0x20] sm:$0xf]
      %v2795 = vld [vmem:[%s2785 + $0x24] sm:$0xf]
      %v2796 = vld [vmem:[%s2785 + $0x28] sm:$0xf]
      %v2797 = vld [vmem:[%s2785 + $0x2c] sm:$0xf]
      %v2798 = vld [vmem:[%s2785 + $0x30] sm:$0xf]
      %v2799 = vld [vmem:[%s2785 + $0x34] sm:$0xf]
      %v2800 = vld [vmem:[%s2785 + $0x38] sm:$0xf]
      %v2801 = vld [vmem:[%s2785 + $0x3c] sm:$0xf]
      %v2802 = vunpack.c.l.b16 %v2774
      %v2803 = vunpack.c.l.b16 %v2784
      %v2804 = vpack.c.b16 %v2803, %v2802
      %v2822 = vunpack.c.l.b16 %v2786
      %v2823 = vunpack.c.l.b16 %v2787
      %v2824 = vunpack.c.l.b16 %v2788
      %v2825 = vunpack.c.l.b16 %v2789
      %v2826 = vunpack.c.l.b16 %v2790
      %v2827 = vunpack.c.l.b16 %v2791
      %v2828 = vunpack.c.l.b16 %v2792
      %v2829 = vunpack.c.l.b16 %v2793
      %v2830 = vunpack.c.l.b16 %v2794
      %v2831 = vunpack.c.l.b16 %v2795
      %v2832 = vunpack.c.l.b16 %v2796
      %v2833 = vunpack.c.l.b16 %v2797
      %v2834 = vunpack.c.l.b16 %v2798
      %v2835 = vunpack.c.l.b16 %v2799
      %v2836 = vunpack.c.l.b16 %v2800
      %v2837 = vunpack.c.l.b16 %v2801
      %v2838 = vpack.c.b16 %v2823, %v2822
      %v2839 = vpack.c.b16 %v2825, %v2824
      %v2840 = vpack.c.b16 %v2827, %v2826
      %v2841 = vpack.c.b16 %v2829, %v2828
      %v2842 = vpack.c.b16 %v2831, %v2830
      %v2843 = vpack.c.b16 %v2833, %v2832
      %v2844 = vpack.c.b16 %v2835, %v2834
      %v2845 = vpack.c.b16 %v2837, %v2836
      %2854 = vmatprep.subr.bf16.mxu0 0
      %2855 = vmatpush1.bf16.msra.mxu0 %v2838
      %2856 = vmatprep.subr.bf16.mxu0 0
      %2857 = vmatpush1.bf16.msra.mxu0 %v2839
      %2858 = vmatprep.subr.bf16.mxu0 0
      %2859 = vmatpush1.bf16.msra.mxu0 %v2840
      %2860 = vmatprep.subr.bf16.mxu0 0
      %2861 = vmatpush1.bf16.msra.mxu0 %v2841
      %2862 = vmatprep.subr.bf16.mxu0 0
      %2863 = vmatpush1.bf16.msra.mxu0 %v2842
      %2864 = vmatprep.subr.bf16.mxu0 0
      %2865 = vmatpush1.bf16.msra.mxu0 %v2843
      %2866 = vmatprep.subr.bf16.mxu0 0
      %2867 = vmatpush1.bf16.msra.mxu0 %v2844
      %2868 = vmatprep.subr.bf16.mxu0 0
      %2869 = vmatpush1.bf16.msra.mxu0 %v2845
      %2870 = vmatprep.subr.bf16.mxu0 0
      %2871 = vmatpush1.bf16.msra.mxu0 0
      %2872 = vmatprep.subr.bf16.mxu0 0
      %2873 = vmatpush1.bf16.msra.mxu0 0
      %2874 = vmatprep.subr.bf16.mxu0 0
      %2875 = vmatpush1.bf16.msra.mxu0 0
      %2876 = vmatprep.subr.bf16.mxu0 0
      %2877 = vmatpush1.bf16.msra.mxu0 0
      %2878 = vmatprep.subr.bf16.mxu0 0
      %2879 = vmatpush1.bf16.msra.mxu0 0
      %2880 = vmatprep.subr.bf16.mxu0 0
      %2881 = vmatpush1.bf16.msra.mxu0 0
      %2882 = vmatprep.subr.bf16.mxu0 0
      %2883 = vmatpush1.bf16.msra.mxu0 0
      %2884 = vmatprep.subr.bf16.mxu0 0
      %2885 = vmatpush1.bf16.msra.mxu0 0
      %2886 = vmatprep.mubr.bf16.mxu0 0
      %2887 = vmatmul.mubr.bf16.gmra.mrb[0].mxu0 %v680
      %v2888 = vpop.f32.mrb[0].mxu0
      %v2889 = vadd.f32 0.0, %v2888
      %v2890 = vpop.f32.mrb[0].mxu0
      %v2891 = vpop.f32.mrb[0].mxu0
      %v2892 = vadd.f32 0.0, %v2891
      %v2893 = vpop.f32.mrb[0].mxu0
      %2894 = vmatprep.mubr.bf16.mxu0 0
      %2895 = vmatmul.mubr.bf16.gmra.mrb[0].mxu0 %v681
      %v2896 = vpop.f32.mrb[0].mxu0
      %v2897 = vadd.f32 0.0, %v2896
      %v2898 = vpop.f32.mrb[0].mxu0
      %v2899 = vpop.f32.mrb[0].mxu0
      %v2900 = vadd.f32 0.0, %v2899
      %v2901 = vpop.f32.mrb[0].mxu0
      %2902 = vmatprep.mubr.bf16.mxu0 0
      %2903 = vmatmul.mubr.bf16.gmra.mrb[0].mxu0 %v682
      %v2904 = vpop.f32.mrb[0].mxu0
      %v2905 = vadd.f32 0.0, %v2904
      %v2906 = vpop.f32.mrb[0].mxu0
      %v2907 = vpop.f32.mrb[0].mxu0
      %v2908 = vadd.f32 0.0, %v2907
      %v2909 = vpop.f32.mrb[0].mxu0
      %2910 = vmatprep.mubr.bf16.mxu0 0
      %2911 = vmatmul.mubr.bf16.gmra.mrb[0].mxu0 %v683
      %v2912 = vpop.f32.mrb[0].mxu0
      %v2913 = vadd.f32 0.0, %v2912
      %v2914 = vpop.f32.mrb[0].mxu0
      %v2915 = vpop.f32.mrb[0].mxu0
      %v2916 = vadd.f32 0.0, %v2915
      %v2917 = vpop.f32.mrb[0].mxu0
      %2918 = vmatprep.mubr.bf16.mxu0 0
      %2919 = vmatmul.mubr.bf16.gmra.mrb[0].mxu0 %v684
      %v2920 = vpop.f32.mrb[0].mxu0
      %v2921 = vadd.f32 0.0, %v2920
      %v2922 = vpop.f32.mrb[0].mxu0
      %v2923 = vpop.f32.mrb[0].mxu0
      %v2924 = vadd.f32 0.0, %v2923
      %v2925 = vpop.f32.mrb[0].mxu0
      %2926 = vmatprep.mubr.bf16.mxu0 0
      %2927 = vmatmul.mubr.bf16.gmra.mrb[0].mxu0 %v685
      %v2928 = vpop.f32.mrb[0].mxu0
      %v2929 = vadd.f32 0.0, %v2928
      %v2930 = vpop.f32.mrb[0].mxu0
      %v2931 = vpop.f32.mrb[0].mxu0
      %v2932 = vadd.f32 0.0, %v2931
      %v2933 = vpop.f32.mrb[0].mxu0
      %2934 = vmatprep.mubr.bf16.mxu0 0
      %2935 = vmatmul.mubr.bf16.gmra.mrb[0].mxu0 %v686
      %v2936 = vpop.f32.mrb[0].mxu0
      %v2937 = vadd.f32 0.0, %v2936
      %v2938 = vpop.f32.mrb[0].mxu0
      %v2939 = vpop.f32.mrb[0].mxu0
      %v2940 = vadd.f32 0.0, %v2939
      %v2941 = vpop.f32.mrb[0].mxu0
      %2942 = vmatprep.mubr.bf16.mxu0 0
      %2943 = vmatmul.mubr.bf16.gmra.mrb[0].mxu0 %v687
      %v2944 = vpop.f32.mrb[0].mxu0
      %v2945 = vadd.f32 0.0, %v2944
      %v2946 = vpop.f32.mrb[0].mxu0
      %v2947 = vpop.f32.mrb[0].mxu0
      %v2948 = vadd.f32 0.0, %v2947
      %v2949 = vpop.f32.mrb[0].mxu0
      %2950 = vmatprep.mubr.bf16.mxu0 0
      %2951 = vmatmul.mubr.bf16.gmra.mrb[0].mxu0 %v688
      %v2952 = vpop.f32.mrb[0].mxu0
      %v2953 = vadd.f32 0.0, %v2952
      %v2954 = vpop.f32.mrb[0].mxu0
      %v2955 = vpop.f32.mrb[0].mxu0
      %v2956 = vadd.f32 0.0, %v2955
      %v2957 = vpop.f32.mrb[0].mxu0
      %2958 = vmatprep.mubr.bf16.mxu0 0
      %2959 = vmatmul.mubr.bf16.gmra.mrb[0].mxu0 %v689
      %v2960 = vpop.f32.mrb[0].mxu0
      %v2961 = vadd.f32 0.0, %v2960
      %v2962 = vpop.f32.mrb[0].mxu0
      %v2963 = vpop.f32.mrb[0].mxu0
      %v2964 = vadd.f32 0.0, %v2963
      %v2965 = vpop.f32.mrb[0].mxu0
      %2966 = vmatprep.mubr.bf16.mxu0 0
      %2967 = vmatmul.mubr.bf16.gmra.mrb[0].mxu0 %v690
      %v2968 = vpop.f32.mrb[0].mxu0
      %v2969 = vadd.f32 0.0, %v2968
      %v2970 = vpop.f32.mrb[0].mxu0
      %v2971 = vpop.f32.mrb[0].mxu0
      %v2972 = vadd.f32 0.0, %v2971
      %v2973 = vpop.f32.mrb[0].mxu0
      %2974 = vmatprep.mubr.bf16.mxu0 0
      %2975 = vmatmul.mubr.bf16.gmra.mrb[0].mxu0 %v691
      %v2976 = vpop.f32.mrb[0].mxu0
      %v2977 = vadd.f32 0.0, %v2976
      %v2978 = vpop.f32.mrb[0].mxu0
      %v2979 = vpop.f32.mrb[0].mxu0
      %v2980 = vadd.f32 0.0, %v2979
      %v2981 = vpop.f32.mrb[0].mxu0
      %2982 = vmatprep.mubr.bf16.mxu0 0
      %2983 = vmatmul.mubr.bf16.gmra.mrb[0].mxu0 %v692
      %v2984 = vpop.f32.mrb[0].mxu0
      %v2985 = vadd.f32 0.0, %v2984
      %v2986 = vpop.f32.mrb[0].mxu0
      %v2987 = vpop.f32.mrb[0].mxu0
      %v2988 = vadd.f32 0.0, %v2987
      %v2989 = vpop.f32.mrb[0].mxu0
      %2990 = vmatprep.mubr.bf16.mxu0 0
      %2991 = vmatmul.mubr.bf16.gmra.mrb[0].mxu0 %v693
      %v2992 = vpop.f32.mrb[0].mxu0
      %v2993 = vadd.f32 0.0, %v2992
      %v2994 = vpop.f32.mrb[0].mxu0
      %v2995 = vpop.f32.mrb[0].mxu0
      %v2996 = vadd.f32 0.0, %v2995
      %v2997 = vpop.f32.mrb[0].mxu0
      %2998 = vmatprep.mubr.bf16.mxu0 0
      %2999 = vmatmul.mubr.bf16.gmra.mrb[0].mxu0 %v1984
      %v3000 = vpop.f32.mrb[0].mxu0
      %v3001 = vadd.f32 0.0, %v3000
      %v3002 = vpop.f32.mrb[0].mxu0
      %v3003 = vpop.f32.mrb[0].mxu0
      %v3004 = vadd.f32 0.0, %v3003
      %v3005 = vpop.f32.mrb[0].mxu0
      %3006 = vmatprep.mubr.bf16.mxu0 0
      %3007 = vmatmul.mubr.bf16.gmra.mrb[0].mxu0 %v2804
      %v3008 = vpop.f32.mrb[0].mxu0
      %v3009 = vadd.f32 0.0, %v3008
      %v3010 = vpop.f32.mrb[0].mxu0
      %v3011 = vpop.f32.mrb[0].mxu0
      %v3012 = vadd.f32 0.0, %v3011
      %v3013 = vpop.f32.mrb[0].mxu0
      %3014 = vdwg.mxu0
      %v3015 = vadd.f32 %v2729, %v2889
      %v3016 = vadd.f32 %v2730, %v2892
      %v3017 = vadd.f32 %v2731, %v2897
      %v3018 = vadd.f32 %v2732, %v2900
      %v3019 = vadd.f32 %v2733, %v2905
      %v3020 = vadd.f32 %v2734, %v2908
      %v3021 = vadd.f32 %v2735, %v2913
      %v3022 = vadd.f32 %v2736, %v2916
      %v3023 = vadd.f32 %v2737, %v2921
      %v3024 = vadd.f32 %v2738, %v2924
      %v3025 = vadd.f32 %v2739, %v2929
      %v3026 = vadd.f32 %v2740, %v2932
      %v3027 = vadd.f32 %v2741, %v2937
      %v3028 = vadd.f32 %v2742, %v2940
      %v3029 = vadd.f32 %v2743, %v2945
      %v3030 = vadd.f32 %v2744, %v2948
      %v3031 = vadd.f32 %v2745, %v2953
      %v3032 = vadd.f32 %v2746, %v2956
      %v3033 = vadd.f32 %v2747, %v2961
      %v3034 = vadd.f32 %v2748, %v2964
      %v3035 = vadd.f32 %v2749, %v2969
      %v3036 = vadd.f32 %v2750, %v2972
      %v3037 = vadd.f32 %v2751, %v2977
      %v3038 = vadd.f32 %v2752, %v2980
      %v3039 = vadd.f32 %v2753, %v2985
      %v3040 = vadd.f32 %v2754, %v2988
      %v3041 = vadd.f32 %v2755, %v2993
      %v3042 = vadd.f32 %v2756, %v2996
      %v3043 = vadd.f32 %v2757, %v3001
      %v3044 = vadd.f32 %v2758, %v3004
      %v3045 = vadd.f32 %v2759, %v3009
      %v3046 = vadd.f32 %v2760, %v3012
      %v3048 = vrot.slane %v223, 5
      %v3049 = vrot.slane %v3048, 4
      %v3050 = vrot.slane %v224, 5
      %v3051 = vsel %vm1242, %v3049, %v3050
      %v3052 = vrot.slane %v3050, 4
      %v3053 = vrot.slane %v225, 5
      %v3054 = vsel %vm1242, %v3052, %v3053
      %s3055 = scalar_lea.vmem %s1, 512
      %v3056 = vld [vmem:[%s3055] sm:$0xf]
      %v3057 = vld [vmem:[%s3055 + $0x4] sm:$0xf]
      %v3058 = vld [vmem:[%s3055 + $0x8] sm:$0xf]
      %v3059 = vld [vmem:[%s3055 + $0xc] sm:$0xf]
      %v3060 = vld [vmem:[%s3055 + $0x10] sm:$0xf]
      %v3061 = vld [vmem:[%s3055 + $0x14] sm:$0xf]
      %v3062 = vld [vmem:[%s3055 + $0x18] sm:$0xf]
      %v3063 = vld [vmem:[%s3055 + $0x1c] sm:$0xf]
      %v3064 = vld [vmem:[%s3055 + $0x20] sm:$0xf]
      %v3065 = vld [vmem:[%s3055 + $0x24] sm:$0xf]
      %v3066 = vld [vmem:[%s3055 + $0x28] sm:$0xf]
      %v3067 = vld [vmem:[%s3055 + $0x2c] sm:$0xf]
      %v3068 = vld [vmem:[%s3055 + $0x30] sm:$0xf]
      %v3069 = vld [vmem:[%s3055 + $0x34] sm:$0xf]
      %v3070 = vld [vmem:[%s3055 + $0x38] sm:$0xf]
      %v3071 = vld [vmem:[%s3055 + $0x3c] sm:$0xf]
      %v3072 = vunpack.c.l.b16 %v3051
      %v3073 = vunpack.c.l.b16 %v3054
      %v3074 = vpack.c.b16 %v3073, %v3072
      %v3092 = vunpack.c.l.b16 %v3056
      %v3093 = vunpack.c.l.b16 %v3057
      %v3094 = vunpack.c.l.b16 %v3058
      %v3095 = vunpack.c.l.b16 %v3059
      %v3096 = vunpack.c.l.b16 %v3060
      %v3097 = vunpack.c.l.b16 %v3061
      %v3098 = vunpack.c.l.b16 %v3062
      %v3099 = vunpack.c.l.b16 %v3063
      %v3100 = vunpack.c.l.b16 %v3064
      %v3101 = vunpack.c.l.b16 %v3065
      %v3102 = vunpack.c.l.b16 %v3066
      %v3103 = vunpack.c.l.b16 %v3067
      %v3104 = vunpack.c.l.b16 %v3068
      %v3105 = vunpack.c.l.b16 %v3069
      %v3106 = vunpack.c.l.b16 %v3070
      %v3107 = vunpack.c.l.b16 %v3071
      %v3108 = vpack.c.b16 %v3093, %v3092
      %v3109 = vpack.c.b16 %v3095, %v3094
      %v3110 = vpack.c.b16 %v3097, %v3096
      %v3111 = vpack.c.b16 %v3099, %v3098
      %v3112 = vpack.c.b16 %v3101, %v3100
      %v3113 = vpack.c.b16 %v3103, %v3102
      %v3114 = vpack.c.b16 %v3105, %v3104
      %v3115 = vpack.c.b16 %v3107, %v3106
      %3124 = vmatprep.subr.bf16.mxu0 0
      %3125 = vmatpush1.bf16.msra.mxu0 %v3108
      %3126 = vmatprep.subr.bf16.mxu0 0
      %3127 = vmatpush1.bf16.msra.mxu0 %v3109
      %3128 = vmatprep.subr.bf16.mxu0 0
      %3129 = vmatpush1.bf16.msra.mxu0 %v3110
      %3130 = vmatprep.subr.bf16.mxu0 0
      %3131 = vmatpush1.bf16.msra.mxu0 %v3111
      %3132 = vmatprep.subr.bf16.mxu0 0
      %3133 = vmatpush1.bf16.msra.mxu0 %v3112
      %3134 = vmatprep.subr.bf16.mxu0 0
      %3135 = vmatpush1.bf16.msra.mxu0 %v3113
      %3136 = vmatprep.subr.bf16.mxu0 0
      %3137 = vmatpush1.bf16.msra.mxu0 %v3114
      %3138 = vmatprep.subr.bf16.mxu0 0
      %3139 = vmatpush1.bf16.msra.mxu0 %v3115
      %3140 = vmatprep.subr.bf16.mxu0 0
      %3141 = vmatpush1.bf16.msra.mxu0 0
      %3142 = vmatprep.subr.bf16.mxu0 0
      %3143 = vmatpush1.bf16.msra.mxu0 0
      %3144 = vmatprep.subr.bf16.mxu0 0
      %3145 = vmatpush1.bf16.msra.mxu0 0
      %3146 = vmatprep.subr.bf16.mxu0 0
      %3147 = vmatpush1.bf16.msra.mxu0 0
      %3148 = vmatprep.subr.bf16.mxu0 0
      %3149 = vmatpush1.bf16.msra.mxu0 0
      %3150 = vmatprep.subr.bf16.mxu0 0
      %3151 = vmatpush1.bf16.msra.mxu0 0
      %3152 = vmatprep.subr.bf16.mxu0 0
      %3153 = vmatpush1.bf16.msra.mxu0 0
      %3154 = vmatprep.subr.bf16.mxu0 0
      %3155 = vmatpush1.bf16.msra.mxu0 0
      %3156 = vmatprep.mubr.bf16.mxu0 0
      %3157 = vmatmul.mubr.bf16.gmra.mrb[0].mxu0 %v1406
      %v3158 = vpop.f32.mrb[0].mxu0
      %v3159 = vadd.f32 0.0, %v3158
      %v3160 = vpop.f32.mrb[0].mxu0
      %v3161 = vpop.f32.mrb[0].mxu0
      %v3162 = vadd.f32 0.0, %v3161
      %v3163 = vpop.f32.mrb[0].mxu0
      %3164 = vmatprep.mubr.bf16.mxu0 0
      %3165 = vmatmul.mubr.bf16.gmra.mrb[0].mxu0 %v1407
      %v3166 = vpop.f32.mrb[0].mxu0
      %v3167 = vadd.f32 0.0, %v3166
      %v3168 = vpop.f32.mrb[0].mxu0
      %v3169 = vpop.f32.mrb[0].mxu0
      %v3170 = vadd.f32 0.0, %v3169
      %v3171 = vpop.f32.mrb[0].mxu0
      %3172 = vmatprep.mubr.bf16.mxu0 0
      %3173 = vmatmul.mubr.bf16.gmra.mrb[0].mxu0 %v1408
      %v3174 = vpop.f32.mrb[0].mxu0
      %v3175 = vadd.f32 0.0, %v3174
      %v3176 = vpop.f32.mrb[0].mxu0
      %v3177 = vpop.f32.mrb[0].mxu0
      %v3178 = vadd.f32 0.0, %v3177
      %v3179 = vpop.f32.mrb[0].mxu0
      %3180 = vmatprep.mubr.bf16.mxu0 0
      %3181 = vmatmul.mubr.bf16.gmra.mrb[0].mxu0 %v1409
      %v3182 = vpop.f32.mrb[0].mxu0
      %v3183 = vadd.f32 0.0, %v3182
      %v3184 = vpop.f32.mrb[0].mxu0
      %v3185 = vpop.f32.mrb[0].mxu0
      %v3186 = vadd.f32 0.0, %v3185
      %v3187 = vpop.f32.mrb[0].mxu0
      %3188 = vmatprep.mubr.bf16.mxu0 0
      %3189 = vmatmul.mubr.bf16.gmra.mrb[0].mxu0 %v1410
      %v3190 = vpop.f32.mrb[0].mxu0
      %v3191 = vadd.f32 0.0, %v3190
      %v3192 = vpop.f32.mrb[0].mxu0
      %v3193 = vpop.f32.mrb[0].mxu0
      %v3194 = vadd.f32 0.0, %v3193
      %v3195 = vpop.f32.mrb[0].mxu0
      %3196 = vmatprep.mubr.bf16.mxu0 0
      %3197 = vmatmul.mubr.bf16.gmra.mrb[0].mxu0 %v1411
      %v3198 = vpop.f32.mrb[0].mxu0
      %v3199 = vadd.f32 0.0, %v3198
      %v3200 = vpop.f32.mrb[0].mxu0
      %v3201 = vpop.f32.mrb[0].mxu0
      %v3202 = vadd.f32 0.0, %v3201
      %v3203 = vpop.f32.mrb[0].mxu0
      %3204 = vmatprep.mubr.bf16.mxu0 0
      %3205 = vmatmul.mubr.bf16.gmra.mrb[0].mxu0 %v1412
      %v3206 = vpop.f32.mrb[0].mxu0
      %v3207 = vadd.f32 0.0, %v3206
      %v3208 = vpop.f32.mrb[0].mxu0
      %v3209 = vpop.f32.mrb[0].mxu0
      %v3210 = vadd.f32 0.0, %v3209
      %v3211 = vpop.f32.mrb[0].mxu0
      %3212 = vmatprep.mubr.bf16.mxu0 0
      %3213 = vmatmul.mubr.bf16.gmra.mrb[0].mxu0 %v1413
      %v3214 = vpop.f32.mrb[0].mxu0
      %v3215 = vadd.f32 0.0, %v3214
      %v3216 = vpop.f32.mrb[0].mxu0
      %v3217 = vpop.f32.mrb[0].mxu0
      %v3218 = vadd.f32 0.0, %v3217
      %v3219 = vpop.f32.mrb[0].mxu0
      %3220 = vmatprep.mubr.bf16.mxu0 0
      %3221 = vmatmul.mubr.bf16.gmra.mrb[0].mxu0 %v1414
      %v3222 = vpop.f32.mrb[0].mxu0
      %v3223 = vadd.f32 0.0, %v3222
      %v3224 = vpop.f32.mrb[0].mxu0
      %v3225 = vpop.f32.mrb[0].mxu0
      %v3226 = vadd.f32 0.0, %v3225
      %v3227 = vpop.f32.mrb[0].mxu0
      %3228 = vmatprep.mubr.bf16.mxu0 0
      %3229 = vmatmul.mubr.bf16.gmra.mrb[0].mxu0 %v1415
      %v3230 = vpop.f32.mrb[0].mxu0
      %v3231 = vadd.f32 0.0, %v3230
      %v3232 = vpop.f32.mrb[0].mxu0
      %v3233 = vpop.f32.mrb[0].mxu0
      %v3234 = vadd.f32 0.0, %v3233
      %v3235 = vpop.f32.mrb[0].mxu0
      %3236 = vmatprep.mubr.bf16.mxu0 0
      %3237 = vmatmul.mubr.bf16.gmra.mrb[0].mxu0 %v1416
      %v3238 = vpop.f32.mrb[0].mxu0
      %v3239 = vadd.f32 0.0, %v3238
      %v3240 = vpop.f32.mrb[0].mxu0
      %v3241 = vpop.f32.mrb[0].mxu0
      %v3242 = vadd.f32 0.0, %v3241
      %v3243 = vpop.f32.mrb[0].mxu0
      %3244 = vmatprep.mubr.bf16.mxu0 0
      %3245 = vmatmul.mubr.bf16.gmra.mrb[0].mxu0 %v1417
      %v3246 = vpop.f32.mrb[0].mxu0
      %v3247 = vadd.f32 0.0, %v3246
      %v3248 = vpop.f32.mrb[0].mxu0
      %v3249 = vpop.f32.mrb[0].mxu0
      %v3250 = vadd.f32 0.0, %v3249
      %v3251 = vpop.f32.mrb[0].mxu0
      %3252 = vmatprep.mubr.bf16.mxu0 0
      %3253 = vmatmul.mubr.bf16.gmra.mrb[0].mxu0 %v1418
      %v3254 = vpop.f32.mrb[0].mxu0
      %v3255 = vadd.f32 0.0, %v3254
      %v3256 = vpop.f32.mrb[0].mxu0
      %v3257 = vpop.f32.mrb[0].mxu0
      %v3258 = vadd.f32 0.0, %v3257
      %v3259 = vpop.f32.mrb[0].mxu0
      %3260 = vmatprep.mubr.bf16.mxu0 0
      %3261 = vmatmul.mubr.bf16.gmra.mrb[0].mxu0 %v1419
      %v3262 = vpop.f32.mrb[0].mxu0
      %v3263 = vadd.f32 0.0, %v3262
      %v3264 = vpop.f32.mrb[0].mxu0
      %v3265 = vpop.f32.mrb[0].mxu0
      %v3266 = vadd.f32 0.0, %v3265
      %v3267 = vpop.f32.mrb[0].mxu0
      %3268 = vmatprep.mubr.bf16.mxu0 0
      %3269 = vmatmul.mubr.bf16.gmra.mrb[0].mxu0 %v2254
      %v3270 = vpop.f32.mrb[0].mxu0
      %v3271 = vadd.f32 0.0, %v3270
      %v3272 = vpop.f32.mrb[0].mxu0
      %v3273 = vpop.f32.mrb[0].mxu0
      %v3274 = vadd.f32 0.0, %v3273
      %v3275 = vpop.f32.mrb[0].mxu0
      %3276 = vmatprep.mubr.bf16.mxu0 0
      %3277 = vmatmul.mubr.bf16.gmra.mrb[0].mxu0 %v3074
      %v3278 = vpop.f32.mrb[0].mxu0
      %v3279 = vadd.f32 0.0, %v3278
      %v3280 = vpop.f32.mrb[0].mxu0
      %v3281 = vpop.f32.mrb[0].mxu0
      %v3282 = vadd.f32 0.0, %v3281
      %v3283 = vpop.f32.mrb[0].mxu0
      %3284 = vdwg.mxu0
      %v3285 = vadd.f32 %v3015, %v3159
      %v3286 = vadd.f32 %v3016, %v3162
      %v3287 = vadd.f32 %v3017, %v3167
      %v3288 = vadd.f32 %v3018, %v3170
      %v3289 = vadd.f32 %v3019, %v3175
      %v3290 = vadd.f32 %v3020, %v3178
      %v3291 = vadd.f32 %v3021, %v3183
      %v3292 = vadd.f32 %v3022, %v3186
      %v3293 = vadd.f32 %v3023, %v3191
      %v3294 = vadd.f32 %v3024, %v3194
      %v3295 = vadd.f32 %v3025, %v3199
      %v3296 = vadd.f32 %v3026, %v3202
      %v3297 = vadd.f32 %v3027, %v3207
      %v3298 = vadd.f32 %v3028, %v3210
      %v3299 = vadd.f32 %v3029, %v3215
      %v3300 = vadd.f32 %v3030, %v3218
      %v3301 = vadd.f32 %v3031, %v3223
      %v3302 = vadd.f32 %v3032, %v3226
      %v3303 = vadd.f32 %v3033, %v3231
      %v3304 = vadd.f32 %v3034, %v3234
      %v3305 = vadd.f32 %v3035, %v3239
      %v3306 = vadd.f32 %v3036, %v3242
      %v3307 = vadd.f32 %v3037, %v3247
      %v3308 = vadd.f32 %v3038, %v3250
      %v3309 = vadd.f32 %v3039, %v3255
      %v3310 = vadd.f32 %v3040, %v3258
      %v3311 = vadd.f32 %v3041, %v3263
      %v3312 = vadd.f32 %v3042, %v3266
      %v3313 = vadd.f32 %v3043, %v3271
      %v3314 = vadd.f32 %v3044, %v3274
      %v3315 = vadd.f32 %v3045, %v3279
      %v3316 = vadd.f32 %v3046, %v3282
      %v3317 = vld [vmem:[%s2] sm:$0x1]
      %v3319 = vlaneseq
      %v3320 = vshrl.u32 %v3319, 7
      %v3321 = vsub.s32 0, %v3320
      %v3322 = vrot.slane %v3317, %v3321
      %v3324 = vadd.f32 %v3285, %v3322
      %v3325 = vadd.f32 %v3286, %v3322
      %v3326 = vadd.f32 %v3287, %v3322
      %v3327 = vadd.f32 %v3288, %v3322
      %v3328 = vadd.f32 %v3289, %v3322
      %v3329 = vadd.f32 %v3290, %v3322
      %v3330 = vadd.f32 %v3291, %v3322
      %v3331 = vadd.f32 %v3292, %v3322
      %v3332 = vadd.f32 %v3293, %v3322
      %v3333 = vadd.f32 %v3294, %v3322
      %v3334 = vadd.f32 %v3295, %v3322
      %v3335 = vadd.f32 %v3296, %v3322
      %v3336 = vadd.f32 %v3297, %v3322
      %v3337 = vadd.f32 %v3298, %v3322
      %v3338 = vadd.f32 %v3299, %v3322
      %v3339 = vadd.f32 %v3300, %v3322
      %v3340 = vadd.f32 %v3301, %v3322
      %v3341 = vadd.f32 %v3302, %v3322
      %v3342 = vadd.f32 %v3303, %v3322
      %v3343 = vadd.f32 %v3304, %v3322
      %v3344 = vadd.f32 %v3305, %v3322
      %v3345 = vadd.f32 %v3306, %v3322
      %v3346 = vadd.f32 %v3307, %v3322
      %v3347 = vadd.f32 %v3308, %v3322
      %v3348 = vadd.f32 %v3309, %v3322
      %v3349 = vadd.f32 %v3310, %v3322
      %v3350 = vadd.f32 %v3311, %v3322
      %v3351 = vadd.f32 %v3312, %v3322
      %v3352 = vadd.f32 %v3313, %v3322
      %v3353 = vadd.f32 %v3314, %v3322
      %v3354 = vadd.f32 %v3315, %v3322
      %v3355 = vadd.f32 %v3316, %v3322
      %v3356 = vmax.f32 %v3324, 0.0
      %v3357 = vmax.f32 %v3325, 0.0
      %v3358 = vmax.f32 %v3326, 0.0
      %v3359 = vmax.f32 %v3327, 0.0
      %v3360 = vmax.f32 %v3328, 0.0
      %v3361 = vmax.f32 %v3329, 0.0
      %v3362 = vmax.f32 %v3330, 0.0
      %v3363 = vmax.f32 %v3331, 0.0
      %v3364 = vmax.f32 %v3332, 0.0
      %v3365 = vmax.f32 %v3333, 0.0
      %v3366 = vmax.f32 %v3334, 0.0
      %v3367 = vmax.f32 %v3335, 0.0
      %v3368 = vmax.f32 %v3336, 0.0
      %v3369 = vmax.f32 %v3337, 0.0
      %v3370 = vmax.f32 %v3338, 0.0
      %v3371 = vmax.f32 %v3339, 0.0
      %v3372 = vmax.f32 %v3340, 0.0
      %v3373 = vmax.f32 %v3341, 0.0
      %v3374 = vmax.f32 %v3342, 0.0
      %v3375 = vmax.f32 %v3343, 0.0
      %v3376 = vmax.f32 %v3344, 0.0
      %v3377 = vmax.f32 %v3345, 0.0
      %v3378 = vmax.f32 %v3346, 0.0
      %v3379 = vmax.f32 %v3347, 0.0
      %v3380 = vmax.f32 %v3348, 0.0
      %v3381 = vmax.f32 %v3349, 0.0
      %v3382 = vmax.f32 %v3350, 0.0
      %v3383 = vmax.f32 %v3351, 0.0
      %v3384 = vmax.f32 %v3352, 0.0
      %v3385 = vmax.f32 %v3353, 0.0
      %v3386 = vmax.f32 %v3354, 0.0
      %v3387 = vmax.f32 %v3355, 0.0
      %v3388 = vpack.c.bf16 %v3357, %v3356
      %v3389 = vpack.c.bf16 %v3359, %v3358
      %v3390 = vpack.c.bf16 %v3361, %v3360
      %v3391 = vpack.c.bf16 %v3363, %v3362
      %v3392 = vpack.c.bf16 %v3365, %v3364
      %v3393 = vpack.c.bf16 %v3367, %v3366
      %v3394 = vpack.c.bf16 %v3369, %v3368
      %v3395 = vpack.c.bf16 %v3371, %v3370
      %v3396 = vpack.c.bf16 %v3373, %v3372
      %v3397 = vpack.c.bf16 %v3375, %v3374
      %v3398 = vpack.c.bf16 %v3377, %v3376
      %v3399 = vpack.c.bf16 %v3379, %v3378
      %v3400 = vpack.c.bf16 %v3381, %v3380
      %v3401 = vpack.c.bf16 %v3383, %v3382
      %v3402 = vpack.c.bf16 %v3385, %v3384
      %v3403 = vpack.c.bf16 %v3387, %v3386
      %v3420 = vunpack.c.l.b16 %v3388
      %v3421 = vunpack.c.h.b16 %v3388
      %v3422 = vunpack.c.l.b16 %v3389
      %v3423 = vunpack.c.h.b16 %v3389
      %v3424 = vunpack.c.l.b16 %v3390
      %v3425 = vunpack.c.h.b16 %v3390
      %v3426 = vunpack.c.l.b16 %v3391
      %v3427 = vunpack.c.h.b16 %v3391
      %v3428 = vunpack.c.l.b16 %v3392
      %v3429 = vunpack.c.h.b16 %v3392
      %v3430 = vunpack.c.l.b16 %v3393
      %v3431 = vunpack.c.h.b16 %v3393
      %v3432 = vunpack.c.l.b16 %v3394
      %v3433 = vunpack.c.h.b16 %v3394
      %v3434 = vunpack.c.l.b16 %v3395
      %v3435 = vunpack.c.h.b16 %v3395
      %v3436 = vunpack.c.l.b16 %v3396
      %v3437 = vunpack.c.h.b16 %v3396
      %v3438 = vunpack.c.l.b16 %v3397
      %v3439 = vunpack.c.h.b16 %v3397
      %v3440 = vunpack.c.l.b16 %v3398
      %v3441 = vunpack.c.h.b16 %v3398
      %v3442 = vunpack.c.l.b16 %v3399
      %v3443 = vunpack.c.h.b16 %v3399
      %v3444 = vunpack.c.l.b16 %v3400
      %v3445 = vunpack.c.h.b16 %v3400
      %v3446 = vunpack.c.l.b16 %v3401
      %v3447 = vunpack.c.h.b16 %v3401
      %v3448 = vunpack.c.l.b16 %v3402
      %v3449 = vunpack.c.h.b16 %v3402
      %v3450 = vunpack.c.l.b16 %v3403
      %v3451 = vunpack.c.h.b16 %v3403
      %v3452 = vpack.c.b16 %v3420, %v3420
      %v3453 = vpack.c.b16 %v3421, %v3421
      %v3454 = vpack.c.b16 %v3422, %v3422
      %v3455 = vpack.c.b16 %v3423, %v3423
      %v3456 = vpack.c.b16 %v3424, %v3424
      %v3457 = vpack.c.b16 %v3425, %v3425
      %v3458 = vpack.c.b16 %v3426, %v3426
      %v3459 = vpack.c.b16 %v3427, %v3427
      %v3460 = vpack.c.b16 %v3428, %v3428
      %v3461 = vpack.c.b16 %v3429, %v3429
      %v3462 = vpack.c.b16 %v3430, %v3430
      %v3463 = vpack.c.b16 %v3431, %v3431
      %v3464 = vpack.c.b16 %v3432, %v3432
      %v3465 = vpack.c.b16 %v3433, %v3433
      %v3466 = vpack.c.b16 %v3434, %v3434
      %v3467 = vpack.c.b16 %v3435, %v3435
      %v3468 = vpack.c.b16 %v3436, %v3436
      %v3469 = vpack.c.b16 %v3437, %v3437
      %v3470 = vpack.c.b16 %v3438, %v3438
      %v3471 = vpack.c.b16 %v3439, %v3439
      %v3472 = vpack.c.b16 %v3440, %v3440
      %v3473 = vpack.c.b16 %v3441, %v3441
      %v3474 = vpack.c.b16 %v3442, %v3442
      %v3475 = vpack.c.b16 %v3443, %v3443
      %v3476 = vpack.c.b16 %v3444, %v3444
      %v3477 = vpack.c.b16 %v3445, %v3445
      %v3478 = vpack.c.b16 %v3446, %v3446
      %v3479 = vpack.c.b16 %v3447, %v3447
      %v3480 = vpack.c.b16 %v3448, %v3448
      %v3481 = vpack.c.b16 %v3449, %v3449
      %v3482 = vpack.c.b16 %v3450, %v3450
      %v3483 = vpack.c.b16 %v3451, %v3451
      %3516 = vst [vmem:[%s170] sm:$0xf] %v3452
      %3517 = vst [vmem:[%s170 + $0x4] sm:$0xf] %v3453
      %3518 = vst [vmem:[%s170 + $0x8] sm:$0xf] %v3454
      %3519 = vst [vmem:[%s170 + $0xc] sm:$0xf] %v3455
      %3520 = vst [vmem:[%s170 + $0x10] sm:$0xf] %v3456
      %3521 = vst [vmem:[%s170 + $0x14] sm:$0xf] %v3457
      %3522 = vst [vmem:[%s170 + $0x18] sm:$0xf] %v3458
      %3523 = vst [vmem:[%s170 + $0x1c] sm:$0xf] %v3459
      %3524 = vst [vmem:[%s170 + $0x20] sm:$0xf] %v3460
      %3525 = vst [vmem:[%s170 + $0x24] sm:$0xf] %v3461
      %3526 = vst [vmem:[%s170 + $0x28] sm:$0xf] %v3462
      %3527 = vst [vmem:[%s170 + $0x2c] sm:$0xf] %v3463
      %3528 = vst [vmem:[%s170 + $0x30] sm:$0xf] %v3464
      %3529 = vst [vmem:[%s170 + $0x34] sm:$0xf] %v3465
      %3530 = vst [vmem:[%s170 + $0x38] sm:$0xf] %v3466
      %3531 = vst [vmem:[%s170 + $0x3c] sm:$0xf] %v3467
      %3532 = vst [vmem:[%s170 + $0x40] sm:$0xf] %v3468
      %3533 = vst [vmem:[%s170 + $0x44] sm:$0xf] %v3469
      %3534 = vst [vmem:[%s170 + $0x48] sm:$0xf] %v3470
      %3535 = vst [vmem:[%s170 + $0x4c] sm:$0xf] %v3471
      %3536 = vst [vmem:[%s170 + $0x50] sm:$0xf] %v3472
      %3537 = vst [vmem:[%s170 + $0x54] sm:$0xf] %v3473
      %3538 = vst [vmem:[%s170 + $0x58] sm:$0xf] %v3474
      %3539 = vst [vmem:[%s170 + $0x5c] sm:$0xf] %v3475
      %3540 = vst [vmem:[%s170 + $0x60] sm:$0xf] %v3476
      %3541 = vst [vmem:[%s170 + $0x64] sm:$0xf] %v3477
      %3542 = vst [vmem:[%s170 + $0x68] sm:$0xf] %v3478
      %3543 = vst [vmem:[%s170 + $0x6c] sm:$0xf] %v3479
      %3544 = vst [vmem:[%s170 + $0x70] sm:$0xf] %v3480
      %3545 = vst [vmem:[%s170 + $0x74] sm:$0xf] %v3481
      %3546 = vst [vmem:[%s170 + $0x78] sm:$0xf] %v3482
      %3547 = vst [vmem:[%s170 + $0x7c] sm:$0xf] %v3483
      %p3548 = scmp.lt.s32.totalorder %s14, 1
      %s3549 = scalar_select %p3548, %s14, 1
      %s3550 = smul.addr %s3549, 32
      %s3551 = smul.addr %s3550, 4
      %s3552 = scalar_lea.vmem %s3, %s3551
      // Predicated region
      $region33: #{_lambda_.4} parent=31 // pred_check
        %p3553 = pneg %p100
      $region34: #{_lambda_.4} parent=31 // pred_check_branch
        %3555 = sbr.rel (%p3553) target = $region36
      $region35: #{_lambda_.4} parent=31 // pred_region
        _
      $region36: #{_lambda_.4} parent=31 // pred_fallthru
        _
    $region32: #{_lambda_.4} parent=5 // pred_fallthru
      _
    %p3556 = scmp.le.s32.totalorder 2, %s9
    // Predicated region
    $region37: #{_lambda_.4} parent=5 // pred_check
      %p3557 = pneg %p3556
    $region38: #{_lambda_.4} parent=5 // pred_check_branch
      %3559 = sbr.rel (%p3557) target = $region40
    $region39: #{_lambda_.4} parent=5 // pred_region
      %s3560 = ssub.s32 %s9, 2
      // Predicated region
      $region41: #{_lambda_.4} parent=39 // pred_check
        %p3561 = pneg %p106
      $region42: #{_lambda_.4} parent=39 // pred_check_branch
        %3563 = sbr.rel (%p3561) target = $region44
      $region43: #{_lambda_.4} parent=39 // pred_region
        %p3564 = scmp.lt.s32.totalorder %s15, 1
        %s3565 = scalar_select %p3564, %s15, 1
        %s3566 = smul.addr %s3565, 32
        %s3567 = smul.addr %s3566, 4
        %s3568 = scalar_lea.vmem %s3, %s3567
      $region44: #{_lambda_.4} parent=39 // pred_fallthru
        _
    $region40: #{_lambda_.4} parent=5 // pred_fallthru
      _
  $region6: #{_lambda_.4} parent=0 // loop_footer
    %s13 = sadd.s32 1, %s9
  $region7: #{_lambda_.4} parent=0 // loop_footer_branch
    %8 = sbr.rel target = $region3
  $region8: #{_lambda_.4} parent=0 // loop_exit
    _

</llo_original>
